<compile_context>
chip_gen: v7x
topology: tpu7x:2x2x1
jax: 0.10.0
libtpu: 0.0.40
codegen_flags: <defaults>
</compile_context>

<pallas_src>
import numpy as np

import jax
import jax.numpy as jnp
from jax import lax
from jax.experimental import pallas as pl
from jax.experimental.pallas import tpu as pltpu

BATCH_TILE = 32  # images per grid step; batch is zero-padded to a multiple


# ----------------------------------------------------------------------------
# Fused kernel: whole LeNet forward for one batch tile
# ----------------------------------------------------------------------------
def _lenet_kernel(g1_ref, b1_ref, bias1_ref, c2f_ref, bias2_ref, wf1_ref,
                  fb1_ref, wfc2_ref, fb2_ref, wfc3_ref, fb3_ref, out_ref):
    f32, bf16 = jnp.float32, jnp.bfloat16
    tb = out_ref.shape[0]
    r6 = 6 * tb

    def dot(a, b):
        return jnp.dot(a, b, preferred_element_type=f32)

    # ---- conv1 + ReLU + 2x2 max-pool ---------------------------------------
    # g1_ref: (24*tb, 144) bf16, rows ordered (c, u, n) with conv-row = 4u + c.
    # b1_ref[q]: (144, 72) banded conv1 weights for output-col parity q,
    #            lanes = pooled_col*6 + channel.
    g1 = g1_ref[...]
    cr = [dot(g1, b1_ref[q]) for q in range(2)]          # (24*tb, 72) f32
    a1 = []
    for t in range(2):
        ph = [cr[q][(2 * t + p) * r6:(2 * t + p + 1) * r6, :]
              for p in range(2) for q in range(2)]
        m = jnp.maximum(jnp.maximum(ph[0], ph[1]), jnp.maximum(ph[2], ph[3]))
        a1.append(jnp.maximum(m + bias1_ref[...], 0.0).astype(bf16))
    # a1[t]: (6*tb, 72); row u*tb + n == pooled-conv1 row 2u+t of image n.

    # ---- conv2 + ReLU + 2x2 max-pool ---------------------------------------
    # Row windows are TB-aligned static slices; one dot per pool phase against
    # the pre-fused banded RHS (K = 6*72 = 432).
    lhs2 = jnp.concatenate(
        [a1[t][d * tb:(d + 4) * tb, :] for d in range(3) for t in range(2)],
        axis=-1)                                          # (4*tb, 432) bf16
    ph2 = [dot(lhs2, c2f_ref[i]) for i in range(4)]       # (4*tb, 64) f32
    m2 = jnp.maximum(jnp.maximum(ph2[0], ph2[1]), jnp.maximum(ph2[2], ph2[3]))
    a2 = jnp.maximum(m2 + bias2_ref[...], 0.0).astype(bf16)
    # a2: (4*tb, 64); row r*tb + n == pooled-conv2 row r of image n,
    #     lanes = pooled_col*16 + channel.

    # ---- flatten (PyTorch NCHW order folded into wf1) + fc1/fc2/fc3 --------
    hin = jnp.concatenate(
        [a2[r2 * tb:(r2 + 1) * tb, :] for r2 in range(4)], axis=-1)  # (tb,256)
    h = jnp.maximum(dot(hin, wf1_ref[...]) + fb1_ref[...], 0.0)
    h = jnp.maximum(dot(h.astype(bf16), wfc2_ref[...]) + fb2_ref[...], 0.0)
    out = dot(h.astype(bf16), wfc3_ref[...]) + fb3_ref[...]          # (tb,128)
    out_ref[...] = out.astype(out_ref.dtype)


def _const_spec(shape):
    zeros = (0,) * len(shape)
    return pl.BlockSpec(shape, lambda b, _z=zeros: _z)


# ----------------------------------------------------------------------------
# One-time parameter preparation (banded conv matrices, fused conv2 phase RHS,
# pre-transposed fc weights).  Done once, not per forward call.
# ----------------------------------------------------------------------------
def prepare_params(params):
    f32, bf16 = jnp.float32, jnp.bfloat16

    # conv1 -> banded matrices, one per output-column parity q.
    p1 = np.zeros((2, 28, 12, 5), np.float32)
    for q in range(2):
        for s in range(12):
            for kj in range(5):
                p1[q, 2 * s + q + kj, s, kj] = 1.0
    w1 = params["conv1_w"][:, 0, :, :]                    # (6,5,5) [o,ki,kj]
    b1 = jnp.einsum("qmsj,oij->qimso", jnp.asarray(p1), w1)   # (2,5,28,12,6)
    b1 = b1.reshape(2, 140, 72)
    b1 = jnp.pad(b1, ((0, 0), (0, 4), (0, 0)))            # K: 140 -> 144

    # conv2 -> banded matrices fused per pool phase (p2, q2), K = 6*72 = 432.
    p2 = np.zeros((2, 12, 4, 5), np.float32)
    for q in range(2):
        for s in range(4):
            for kj in range(5):
                p2[q, 2 * s + q + kj, s, kj] = 1.0
    c2 = jnp.einsum("qazj,ocij->qiaczo", jnp.asarray(p2), params["conv2_w"])
    c2 = c2.reshape(2, 5, 72, 64)                          # [q2, ki, a*6+c, z*16+o]
    zero = jnp.zeros((72, 64), f32)
    phases = []
    for p2_ in range(2):
        for q2 in range(2):
            blocks = []
            for d in range(3):
                for t in range(2):
                    ki = 2 * d + t - p2_
                    blocks.append(c2[q2, ki] if 0 <= ki <= 4 else zero)
            phases.append(jnp.concatenate(blocks, axis=0))  # (432, 64)
    c2f = jnp.stack(phases, axis=0)                         # (4, 432, 64)

    # fc1 weight rearranged so PyTorch's (C,H,W) flatten is folded in.
    wf1 = params["fc1_w"].reshape(120, 16, 4, 4)            # [f, o, r, s]
    wf1 = jnp.transpose(wf1, (2, 3, 1, 0)).reshape(256, 120)

    # fc3 padded to 128 output lanes (lane-dense stores; wrapper slices :10).
    wfc3 = jnp.zeros((84, 128), f32).at[:, :10].set(params["fc3_w"].T)
    fb3 = jnp.zeros((1, 128), f32).at[:, :10].set(params["fc3_b"][None, :])

    return {
        "b1": b1.astype(bf16),
        "bias1": jnp.tile(params["conv1_b"], 12).reshape(1, 72).astype(f32),
        "c2f": c2f.astype(bf16),
        "bias2": jnp.tile(params["conv2_b"], 4).reshape(1, 64).astype(f32),
        "wf1": wf1.astype(bf16),
        "fb1": params["fc1_b"].reshape(1, 120).astype(f32),
        "wfc2": params["fc2_w"].T.astype(bf16),
        "fb2": params["fc2_b"].reshape(1, 84).astype(f32),
        "wfc3": wfc3.astype(bf16),
        "fb3": fb3.astype(f32),
    }


# ----------------------------------------------------------------------------
# Forward pass
# ----------------------------------------------------------------------------
@jax.jit
def lenet_forward(x, prepared):
    tb = BATCH_TILE
    n = x.shape[0]
    steps = -(-n // tb)
    n_pad = steps * tb

    xs = x[:, 0, :, :].astype(jnp.float32)                 # (N, 28, 28)
    if n_pad != n:
        xs = jnp.pad(xs, ((0, n_pad - n), (0, 0), (0, 0)))

    # Row-phase im2col for conv1 (bf16).  Rows are ordered (tile b, phase c,
    # row-group u, image n) so the kernel's pool/row-window slices are all
    # TB-aligned static slices.  Lane = ki*28 + input_col (K padded to 144).
    gc = []
    for c in range(4):
        slabs = [xs[:, c + ki:c + ki + 21:4, :] for ki in range(5)]  # (Np,6,28)
        gc.append(jnp.transpose(jnp.concatenate(slabs, axis=-1), (1, 0, 2)))
    g1 = jnp.concatenate(gc, axis=0)                        # (24, Np, 140)
    g1 = g1.reshape(24, steps, tb, 140).transpose(1, 0, 2, 3)
    g1 = g1.reshape(steps * 24 * tb, 140)
    g1 = jnp.pad(g1, ((0, 0), (0, 4))).astype(jnp.bfloat16)  # (steps*24*tb, 144)

    macs = (2 * (24 * tb) * 144 * 72 + 4 * (4 * tb) * 432 * 64
            + tb * 256 * 120 + tb * 120 * 84 + tb * 84 * 128)
    const_bytes = sum(int(v.size) * v.dtype.itemsize for v in prepared.values())
    cost = pl.CostEstimate(
        flops=2 * macs * steps, transcendentals=0,
        bytes_accessed=int(g1.size) * 2 + const_bytes + n_pad * 128 * 4)

    out = pl.pallas_call(
        _lenet_kernel,
        out_shape=jax.ShapeDtypeStruct((n_pad, 128), jnp.float32),
        grid_spec=pltpu.PrefetchScalarGridSpec(
            num_scalar_prefetch=0,
            grid=(steps,),
            in_specs=[
                pl.BlockSpec((24 * tb, 144), lambda b: (b, 0)),   # g1
                _const_spec((2, 144, 72)),                        # b1
                _const_spec((1, 72)),                             # bias1
                _const_spec((4, 432, 64)),                        # c2f
                _const_spec((1, 64)),                             # bias2
                _const_spec((256, 120)),                          # wf1
                _const_spec((1, 120)),                            # fb1
                _const_spec((120, 84)),                           # wfc2
                _const_spec((1, 84)),                             # fb2
                _const_spec((84, 128)),                           # wfc3 (padded)
                _const_spec((1, 128)),                            # fb3  (padded)
            ],
            out_specs=pl.BlockSpec((tb, 128), lambda b: (b, 0)),
        ),
        compiler_params=pltpu.CompilerParams(
            dimension_semantics=("parallel",)),
        cost_estimate=cost,
    )(g1, prepared["b1"], prepared["bias1"], prepared["c2f"], prepared["bias2"],
      prepared["wf1"], prepared["fb1"], prepared["wfc2"], prepared["fb2"],
      prepared["wfc3"], prepared["fb3"])
    return out[:n, :10]


# ----------------------------------------------------------------------------
# Deterministic parameters (shapes follow LeNet.__init__) and pure-JAX reference
# ----------------------------------------------------------------------------
def init_params(key):
    ks = jax.random.split(key, 10)

    def rnd(k, shape, fan_in):
        return jax.random.normal(k, shape, jnp.float32) / jnp.sqrt(fan_in)

    return {
        "conv1_w": rnd(ks[0], (6, 1, 5, 5), 25.0),
        "conv1_b": rnd(ks[1], (6,), 25.0),
        "conv2_w": rnd(ks[2], (16, 6, 5, 5), 150.0),
        "conv2_b": rnd(ks[3], (16,), 150.0),
        "fc1_w": rnd(ks[4], (120, 256), 256.0),
        "fc1_b": rnd(ks[5], (120,), 256.0),
        "fc2_w": rnd(ks[6], (84, 120), 120.0),
        "fc2_b": rnd(ks[7], (84,), 120.0),
        "fc3_w": rnd(ks[8], (10, 84), 84.0),
        "fc3_b": rnd(ks[9], (10,), 84.0),
    }


def lenet_reference(x, params):
    with jax.default_matmul_precision("highest"):
        dn = ("NCHW", "OIHW", "NCHW")
        h = lax.conv_general_dilated(x, params["conv1_w"], (1, 1), "VALID",
                                     dimension_numbers=dn)
        h = jnp.maximum(h + params["conv1_b"][None, :, None, None], 0.0)
        h = lax.reduce_window(h, -jnp.inf, lax.max,
                              (1, 1, 2, 2), (1, 1, 2, 2), "VALID")
        h = lax.conv_general_dilated(h, params["conv2_w"], (1, 1), "VALID",
                                     dimension_numbers=dn)
        h = jnp.maximum(h + params["conv2_b"][None, :, None, None], 0.0)
        h = lax.reduce_window(h, -jnp.inf, lax.max,
                              (1, 1, 2, 2), (1, 1, 2, 2), "VALID")
        h = h.reshape(h.shape[0], -1)
        h = jnp.maximum(h @ params["fc1_w"].T + params["fc1_b"], 0.0)
        h = jnp.maximum(h @ params["fc2_w"].T + params["fc2_b"], 0.0)
        return h @ params["fc3_w"].T + params["fc3_b"]


if __name__ == "__main__":
    key = jax.random.PRNGKey(0)
    k_x, k_p = jax.random.split(key)
    # 28x28 is fixed by the architecture (fc1 expects 16*4*4 = 256 features).
    x = jax.random.normal(k_x, (2, 1, 28, 28), jnp.float32)
    params = init_params(k_p)
    prepared = prepare_params(params)

    logits = lenet_forward(x, prepared)
    jax.block_until_ready(logits)
    assert logits.shape == (2, 10) and logits.dtype == jnp.float32

    ref = lenet_reference(x, params)
    assert bool(jnp.allclose(logits, ref, atol=7.5e-2, rtol=7.5e-2)), (
        "mismatch vs reference, max abs err = "
        f"{float(jnp.max(jnp.abs(logits - ref)))}")

    # Multi-step grid check (padding + pipelining across batch tiles).
    x2 = jax.random.normal(jax.random.PRNGKey(1),
                           (2 * BATCH_TILE + 3, 1, 28, 28), jnp.float32)
    logits2 = lenet_forward(x2, prepared)
    jax.block_until_ready(logits2)
    ref2 = lenet_reference(x2, params)
    assert bool(jnp.allclose(logits2, ref2, atol=7.5e-2, rtol=7.5e-2)), (
        "multi-step mismatch, max abs err = "
        f"{float(jnp.max(jnp.abs(logits2 - ref2)))}")

    print("KERNEL_OK")
</pallas_src>

<mosaic_0001>
module attributes {stable_mosaic.version = 11 : i64} {
  func.func @_lenet_kernel(%arg0: i32, %arg1: memref<768x144xbf16, #tpu.memory_space<vmem>>, %arg2: memref<2x144x72xbf16, #tpu.memory_space<vmem>>, %arg3: memref<1x72xf32, #tpu.memory_space<vmem>>, %arg4: memref<4x432x64xbf16, #tpu.memory_space<vmem>>, %arg5: memref<1x64xf32, #tpu.memory_space<vmem>>, %arg6: memref<256x120xbf16, #tpu.memory_space<vmem>>, %arg7: memref<1x120xf32, #tpu.memory_space<vmem>>, %arg8: memref<120x84xbf16, #tpu.memory_space<vmem>>, %arg9: memref<1x84xf32, #tpu.memory_space<vmem>>, %arg10: memref<84x128xbf16, #tpu.memory_space<vmem>>, %arg11: memref<1x128xf32, #tpu.memory_space<vmem>>, %arg12: memref<32x128xf32, #tpu.memory_space<vmem>>) attributes {dimension_semantics = [#tpu.dimension_semantics<parallel>], iteration_bounds = array<i64: 1>, scalar_prefetch = 0 : i64, scratch_operands = 0 : i64, tpu.core_type = #tpu.core_type<tc>, window_params = [{transform_indices = @transform_0, window_bounds = array<i64: 768, 144>}, {pipeline_mode = #tpu.pipeline_mode<synchronous>, transform_indices = @transform_1, window_bounds = array<i64: 2, 144, 72>}, {pipeline_mode = #tpu.pipeline_mode<synchronous>, transform_indices = @transform_2, window_bounds = array<i64: 1, 72>}, {pipeline_mode = #tpu.pipeline_mode<synchronous>, transform_indices = @transform_3, window_bounds = array<i64: 4, 432, 64>}, {pipeline_mode = #tpu.pipeline_mode<synchronous>, transform_indices = @transform_4, window_bounds = array<i64: 1, 64>}, {pipeline_mode = #tpu.pipeline_mode<synchronous>, transform_indices = @transform_5, window_bounds = array<i64: 256, 120>}, {pipeline_mode = #tpu.pipeline_mode<synchronous>, transform_indices = @transform_6, window_bounds = array<i64: 1, 120>}, {pipeline_mode = #tpu.pipeline_mode<synchronous>, transform_indices = @transform_7, window_bounds = array<i64: 120, 84>}, {pipeline_mode = #tpu.pipeline_mode<synchronous>, transform_indices = @transform_8, window_bounds = array<i64: 1, 84>}, {pipeline_mode = #tpu.pipeline_mode<synchronous>, transform_indices = @transform_9, window_bounds = array<i64: 84, 128>}, {pipeline_mode = #tpu.pipeline_mode<synchronous>, transform_indices = @transform_10, window_bounds = array<i64: 1, 128>}, {transform_indices = @transform_11, window_bounds = array<i64: 32, 128>}]} {
    %c0 = arith.constant 0 : index
    %c0_0 = arith.constant 0 : index
    %0 = vector.load %arg1[%c0, %c0_0] : memref<768x144xbf16, #tpu.memory_space<vmem>>, vector<768x144xbf16>
    %c0_1 = arith.constant 0 : index
    %c0_2 = arith.constant 0 : index
    %c0_3 = arith.constant 0 : index
    %1 = vector.load %arg2[%c0_1, %c0_2, %c0_3] : memref<2x144x72xbf16, #tpu.memory_space<vmem>>, vector<1x144x72xbf16>
    %2 = vector.shape_cast %1 : vector<1x144x72xbf16> to vector<144x72xbf16>
    %cst = arith.constant dense<0.000000e+00> : vector<768x72xf32>
    %3 = tpu.matmul %0, %2, %cst {dimension_numbers = #tpu.dot_dimension_numbers<[1], [0], [0], [1], [0, 0, 1, 1], [], []>} : vector<768x144xbf16>, vector<144x72xbf16>, vector<768x72xf32> -> vector<768x72xf32>
    %c1 = arith.constant 1 : index
    %c0_4 = arith.constant 0 : index
    %c0_5 = arith.constant 0 : index
    %4 = vector.load %arg2[%c1, %c0_4, %c0_5] : memref<2x144x72xbf16, #tpu.memory_space<vmem>>, vector<1x144x72xbf16>
    %5 = vector.shape_cast %4 : vector<1x144x72xbf16> to vector<144x72xbf16>
    %cst_6 = arith.constant dense<0.000000e+00> : vector<768x72xf32>
    %6 = tpu.matmul %0, %5, %cst_6 {dimension_numbers = #tpu.dot_dimension_numbers<[1], [0], [0], [1], [0, 0, 1, 1], [], []>} : vector<768x144xbf16>, vector<144x72xbf16>, vector<768x72xf32> -> vector<768x72xf32>
    %7 = vector.extract_strided_slice %3 {offsets = [0, 0], sizes = [192, 72], strides = [1, 1]} : vector<768x72xf32> to vector<192x72xf32>
    %8 = vector.extract_strided_slice %6 {offsets = [0, 0], sizes = [192, 72], strides = [1, 1]} : vector<768x72xf32> to vector<192x72xf32>
    %9 = vector.extract_strided_slice %3 {offsets = [192, 0], sizes = [192, 72], strides = [1, 1]} : vector<768x72xf32> to vector<192x72xf32>
    %10 = vector.extract_strided_slice %6 {offsets = [192, 0], sizes = [192, 72], strides = [1, 1]} : vector<768x72xf32> to vector<192x72xf32>
    %11 = arith.maximumf %7, %8 : vector<192x72xf32>
    %12 = arith.maximumf %9, %10 : vector<192x72xf32>
    %13 = arith.maximumf %11, %12 : vector<192x72xf32>
    %c0_7 = arith.constant 0 : index
    %c0_8 = arith.constant 0 : index
    %14 = vector.load %arg3[%c0_7, %c0_8] : memref<1x72xf32, #tpu.memory_space<vmem>>, vector<1x72xf32>
    %15 = vector.broadcast %14 : vector<1x72xf32> to vector<192x72xf32>
    %16 = arith.addf %13, %15 : vector<192x72xf32>
    %cst_9 = arith.constant 0.000000e+00 : f32
    %17 = vector.broadcast %cst_9 : f32 to vector<192x72xf32>
    %18 = arith.maximumf %16, %17 : vector<192x72xf32>
    %19 = arith.truncf %18 : vector<192x72xf32> to vector<192x72xbf16>
    %20 = vector.extract_strided_slice %3 {offsets = [384, 0], sizes = [192, 72], strides = [1, 1]} : vector<768x72xf32> to vector<192x72xf32>
    %21 = vector.extract_strided_slice %6 {offsets = [384, 0], sizes = [192, 72], strides = [1, 1]} : vector<768x72xf32> to vector<192x72xf32>
    %22 = vector.extract_strided_slice %3 {offsets = [576, 0], sizes = [192, 72], strides = [1, 1]} : vector<768x72xf32> to vector<192x72xf32>
    %23 = vector.extract_strided_slice %6 {offsets = [576, 0], sizes = [192, 72], strides = [1, 1]} : vector<768x72xf32> to vector<192x72xf32>
    %24 = arith.maximumf %20, %21 : vector<192x72xf32>
    %25 = arith.maximumf %22, %23 : vector<192x72xf32>
    %26 = arith.maximumf %24, %25 : vector<192x72xf32>
    %c0_10 = arith.constant 0 : index
    %c0_11 = arith.constant 0 : index
    %27 = vector.load %arg3[%c0_10, %c0_11] : memref<1x72xf32, #tpu.memory_space<vmem>>, vector<1x72xf32>
    %28 = vector.broadcast %27 : vector<1x72xf32> to vector<192x72xf32>
    %29 = arith.addf %26, %28 : vector<192x72xf32>
    %cst_12 = arith.constant 0.000000e+00 : f32
    %30 = vector.broadcast %cst_12 : f32 to vector<192x72xf32>
    %31 = arith.maximumf %29, %30 : vector<192x72xf32>
    %32 = arith.truncf %31 : vector<192x72xf32> to vector<192x72xbf16>
    %33 = vector.extract_strided_slice %19 {offsets = [0, 0], sizes = [128, 72], strides = [1, 1]} : vector<192x72xbf16> to vector<128x72xbf16>
    %34 = vector.extract_strided_slice %32 {offsets = [0, 0], sizes = [128, 72], strides = [1, 1]} : vector<192x72xbf16> to vector<128x72xbf16>
    %35 = vector.extract_strided_slice %19 {offsets = [32, 0], sizes = [128, 72], strides = [1, 1]} : vector<192x72xbf16> to vector<128x72xbf16>
    %36 = vector.extract_strided_slice %32 {offsets = [32, 0], sizes = [128, 72], strides = [1, 1]} : vector<192x72xbf16> to vector<128x72xbf16>
    %37 = vector.extract_strided_slice %19 {offsets = [64, 0], sizes = [128, 72], strides = [1, 1]} : vector<192x72xbf16> to vector<128x72xbf16>
    %38 = vector.extract_strided_slice %32 {offsets = [64, 0], sizes = [128, 72], strides = [1, 1]} : vector<192x72xbf16> to vector<128x72xbf16>
    %39 = tpu.concatenate %33, %34, %35, %36, %37, %38 in 1 : vector<128x72xbf16>, vector<128x72xbf16>, vector<128x72xbf16>, vector<128x72xbf16>, vector<128x72xbf16>, vector<128x72xbf16> -> vector<128x432xbf16>
    %c0_13 = arith.constant 0 : index
    %c0_14 = arith.constant 0 : index
    %c0_15 = arith.constant 0 : index
    %40 = vector.load %arg4[%c0_13, %c0_14, %c0_15] : memref<4x432x64xbf16, #tpu.memory_space<vmem>>, vector<1x432x64xbf16>
    %41 = vector.shape_cast %40 : vector<1x432x64xbf16> to vector<432x64xbf16>
    %cst_16 = arith.constant dense<0.000000e+00> : vector<128x64xf32>
    %42 = tpu.matmul %39, %41, %cst_16 {dimension_numbers = #tpu.dot_dimension_numbers<[1], [0], [0], [1], [0, 0, 1, 1], [], []>} : vector<128x432xbf16>, vector<432x64xbf16>, vector<128x64xf32> -> vector<128x64xf32>
    %c1_17 = arith.constant 1 : index
    %c0_18 = arith.constant 0 : index
    %c0_19 = arith.constant 0 : index
    %43 = vector.load %arg4[%c1_17, %c0_18, %c0_19] : memref<4x432x64xbf16, #tpu.memory_space<vmem>>, vector<1x432x64xbf16>
    %44 = vector.shape_cast %43 : vector<1x432x64xbf16> to vector<432x64xbf16>
    %cst_20 = arith.constant dense<0.000000e+00> : vector<128x64xf32>
    %45 = tpu.matmul %39, %44, %cst_20 {dimension_numbers = #tpu.dot_dimension_numbers<[1], [0], [0], [1], [0, 0, 1, 1], [], []>} : vector<128x432xbf16>, vector<432x64xbf16>, vector<128x64xf32> -> vector<128x64xf32>
    %c2 = arith.constant 2 : index
    %c0_21 = arith.constant 0 : index
    %c0_22 = arith.constant 0 : index
    %46 = vector.load %arg4[%c2, %c0_21, %c0_22] : memref<4x432x64xbf16, #tpu.memory_space<vmem>>, vector<1x432x64xbf16>
    %47 = vector.shape_cast %46 : vector<1x432x64xbf16> to vector<432x64xbf16>
    %cst_23 = arith.constant dense<0.000000e+00> : vector<128x64xf32>
    %48 = tpu.matmul %39, %47, %cst_23 {dimension_numbers = #tpu.dot_dimension_numbers<[1], [0], [0], [1], [0, 0, 1, 1], [], []>} : vector<128x432xbf16>, vector<432x64xbf16>, vector<128x64xf32> -> vector<128x64xf32>
    %c3 = arith.constant 3 : index
    %c0_24 = arith.constant 0 : index
    %c0_25 = arith.constant 0 : index
    %49 = vector.load %arg4[%c3, %c0_24, %c0_25] : memref<4x432x64xbf16, #tpu.memory_space<vmem>>, vector<1x432x64xbf16>
    %50 = vector.shape_cast %49 : vector<1x432x64xbf16> to vector<432x64xbf16>
    %cst_26 = arith.constant dense<0.000000e+00> : vector<128x64xf32>
    %51 = tpu.matmul %39, %50, %cst_26 {dimension_numbers = #tpu.dot_dimension_numbers<[1], [0], [0], [1], [0, 0, 1, 1], [], []>} : vector<128x432xbf16>, vector<432x64xbf16>, vector<128x64xf32> -> vector<128x64xf32>
    %52 = arith.maximumf %42, %45 : vector<128x64xf32>
    %53 = arith.maximumf %48, %51 : vector<128x64xf32>
    %54 = arith.maximumf %52, %53 : vector<128x64xf32>
    %c0_27 = arith.constant 0 : index
    %c0_28 = arith.constant 0 : index
    %55 = vector.load %arg5[%c0_27, %c0_28] : memref<1x64xf32, #tpu.memory_space<vmem>>, vector<1x64xf32>
    %56 = vector.broadcast %55 : vector<1x64xf32> to vector<128x64xf32>
    %57 = arith.addf %54, %56 : vector<128x64xf32>
    %cst_29 = arith.constant 0.000000e+00 : f32
    %58 = vector.broadcast %cst_29 : f32 to vector<128x64xf32>
    %59 = arith.maximumf %57, %58 : vector<128x64xf32>
    %60 = arith.truncf %59 : vector<128x64xf32> to vector<128x64xbf16>
    %61 = vector.extract_strided_slice %60 {offsets = [0, 0], sizes = [32, 64], strides = [1, 1]} : vector<128x64xbf16> to vector<32x64xbf16>
    %62 = vector.extract_strided_slice %60 {offsets = [32, 0], sizes = [32, 64], strides = [1, 1]} : vector<128x64xbf16> to vector<32x64xbf16>
    %63 = vector.extract_strided_slice %60 {offsets = [64, 0], sizes = [32, 64], strides = [1, 1]} : vector<128x64xbf16> to vector<32x64xbf16>
    %64 = vector.extract_strided_slice %60 {offsets = [96, 0], sizes = [32, 64], strides = [1, 1]} : vector<128x64xbf16> to vector<32x64xbf16>
    %65 = tpu.concatenate %61, %62, %63, %64 in 1 : vector<32x64xbf16>, vector<32x64xbf16>, vector<32x64xbf16>, vector<32x64xbf16> -> vector<32x256xbf16>
    %c0_30 = arith.constant 0 : index
    %c0_31 = arith.constant 0 : index
    %66 = vector.load %arg6[%c0_30, %c0_31] : memref<256x120xbf16, #tpu.memory_space<vmem>>, vector<256x120xbf16>
    %cst_32 = arith.constant dense<0.000000e+00> : vector<32x120xf32>
    %67 = tpu.matmul %65, %66, %cst_32 {dimension_numbers = #tpu.dot_dimension_numbers<[1], [0], [0], [1], [0, 0, 1, 1], [], []>} : vector<32x256xbf16>, vector<256x120xbf16>, vector<32x120xf32> -> vector<32x120xf32>
    %c0_33 = arith.constant 0 : index
    %c0_34 = arith.constant 0 : index
    %68 = vector.load %arg7[%c0_33, %c0_34] : memref<1x120xf32, #tpu.memory_space<vmem>>, vector<1x120xf32>
    %69 = vector.broadcast %68 : vector<1x120xf32> to vector<32x120xf32>
    %70 = arith.addf %67, %69 : vector<32x120xf32>
    %cst_35 = arith.constant 0.000000e+00 : f32
    %71 = vector.broadcast %cst_35 : f32 to vector<32x120xf32>
    %72 = arith.maximumf %70, %71 : vector<32x120xf32>
    %73 = arith.truncf %72 : vector<32x120xf32> to vector<32x120xbf16>
    %c0_36 = arith.constant 0 : index
    %c0_37 = arith.constant 0 : index
    %74 = vector.load %arg8[%c0_36, %c0_37] : memref<120x84xbf16, #tpu.memory_space<vmem>>, vector<120x84xbf16>
    %cst_38 = arith.constant dense<0.000000e+00> : vector<32x84xf32>
    %75 = tpu.matmul %73, %74, %cst_38 {dimension_numbers = #tpu.dot_dimension_numbers<[1], [0], [0], [1], [0, 0, 1, 1], [], []>} : vector<32x120xbf16>, vector<120x84xbf16>, vector<32x84xf32> -> vector<32x84xf32>
    %c0_39 = arith.constant 0 : index
    %c0_40 = arith.constant 0 : index
    %76 = vector.load %arg9[%c0_39, %c0_40] : memref<1x84xf32, #tpu.memory_space<vmem>>, vector<1x84xf32>
    %77 = vector.broadcast %76 : vector<1x84xf32> to vector<32x84xf32>
    %78 = arith.addf %75, %77 : vector<32x84xf32>
    %cst_41 = arith.constant 0.000000e+00 : f32
    %79 = vector.broadcast %cst_41 : f32 to vector<32x84xf32>
    %80 = arith.maximumf %78, %79 : vector<32x84xf32>
    %81 = arith.truncf %80 : vector<32x84xf32> to vector<32x84xbf16>
    %c0_42 = arith.constant 0 : index
    %c0_43 = arith.constant 0 : index
    %82 = vector.load %arg10[%c0_42, %c0_43] : memref<84x128xbf16, #tpu.memory_space<vmem>>, vector<84x128xbf16>
    %cst_44 = arith.constant dense<0.000000e+00> : vector<32x128xf32>
    %83 = tpu.matmul %81, %82, %cst_44 {dimension_numbers = #tpu.dot_dimension_numbers<[1], [0], [0], [1], [0, 0, 1, 1], [], []>} : vector<32x84xbf16>, vector<84x128xbf16>, vector<32x128xf32> -> vector<32x128xf32>
    %c0_45 = arith.constant 0 : index
    %c0_46 = arith.constant 0 : index
    %84 = vector.load %arg11[%c0_45, %c0_46] : memref<1x128xf32, #tpu.memory_space<vmem>>, vector<1x128xf32>
    %85 = vector.broadcast %84 : vector<1x128xf32> to vector<32x128xf32>
    %86 = arith.addf %83, %85 : vector<32x128xf32>
    %c0_47 = arith.constant 0 : index
    %c0_48 = arith.constant 0 : index
    %87 = vector.load %arg12[%c0_47, %c0_48] : memref<32x128xf32, #tpu.memory_space<vmem>>, vector<32x128xf32>
    tpu.vector_store %arg12[%c0_47, %c0_48], %86 {strides = array<i32>} : memref<32x128xf32, #tpu.memory_space<vmem>>, vector<32x128xf32>,
    return
  }
  func.func @transform_0(%arg0: i32) -> (i32, i32) {
    %c0_i32 = arith.constant 0 : i32
    %c0_i32_0 = arith.constant 0 : i32
    return %arg0, %c0_i32 : i32, i32
  }
  func.func @transform_1(%arg0: i32) -> (i32, i32, i32) {
    %c0_i32 = arith.constant 0 : i32
    %c0_i32_0 = arith.constant 0 : i32
    %c0_i32_1 = arith.constant 0 : i32
    %c0_i32_2 = arith.constant 0 : i32
    return %c0_i32, %c0_i32_0, %c0_i32_1 : i32, i32, i32
  }
  func.func @transform_2(%arg0: i32) -> (i32, i32) {
    %c0_i32 = arith.constant 0 : i32
    %c0_i32_0 = arith.constant 0 : i32
    %c0_i32_1 = arith.constant 0 : i32
    return %c0_i32, %c0_i32_0 : i32, i32
  }
  func.func @transform_3(%arg0: i32) -> (i32, i32, i32) {
    %c0_i32 = arith.constant 0 : i32
    %c0_i32_0 = arith.constant 0 : i32
    %c0_i32_1 = arith.constant 0 : i32
    %c0_i32_2 = arith.constant 0 : i32
    return %c0_i32, %c0_i32_0, %c0_i32_1 : i32, i32, i32
  }
  func.func @transform_4(%arg0: i32) -> (i32, i32) {
    %c0_i32 = arith.constant 0 : i32
    %c0_i32_0 = arith.constant 0 : i32
    %c0_i32_1 = arith.constant 0 : i32
    return %c0_i32, %c0_i32_0 : i32, i32
  }
  func.func @transform_5(%arg0: i32) -> (i32, i32) {
    %c0_i32 = arith.constant 0 : i32
    %c0_i32_0 = arith.constant 0 : i32
    %c0_i32_1 = arith.constant 0 : i32
    return %c0_i32, %c0_i32_0 : i32, i32
  }
  func.func @transform_6(%arg0: i32) -> (i32, i32) {
    %c0_i32 = arith.constant 0 : i32
    %c0_i32_0 = arith.constant 0 : i32
    %c0_i32_1 = arith.constant 0 : i32
    return %c0_i32, %c0_i32_0 : i32, i32
  }
  func.func @transform_7(%arg0: i32) -> (i32, i32) {
    %c0_i32 = arith.constant 0 : i32
    %c0_i32_0 = arith.constant 0 : i32
    %c0_i32_1 = arith.constant 0 : i32
    return %c0_i32, %c0_i32_0 : i32, i32
  }
  func.func @transform_8(%arg0: i32) -> (i32, i32) {
    %c0_i32 = arith.constant 0 : i32
    %c0_i32_0 = arith.constant 0 : i32
    %c0_i32_1 = arith.constant 0 : i32
    return %c0_i32, %c0_i32_0 : i32, i32
  }
  func.func @transform_9(%arg0: i32) -> (i32, i32) {
    %c0_i32 = arith.constant 0 : i32
    %c0_i32_0 = arith.constant 0 : i32
    %c0_i32_1 = arith.constant 0 : i32
    return %c0_i32, %c0_i32_0 : i32, i32
  }
  func.func @transform_10(%arg0: i32) -> (i32, i32) {
    %c0_i32 = arith.constant 0 : i32
    %c0_i32_0 = arith.constant 0 : i32
    %c0_i32_1 = arith.constant 0 : i32
    return %c0_i32, %c0_i32_0 : i32, i32
  }
  func.func @transform_11(%arg0: i32) -> (i32, i32) {
    %c0_i32 = arith.constant 0 : i32
    %c0_i32_0 = arith.constant 0 : i32
    return %arg0, %c0_i32 : i32, i32
  }
}

</mosaic_0001>

<llo_original>
// kernel: lenet_forward.1
$region0: #{lenet_forward.1}
  #allocation0 [shape = 'u32[]', space=smem, size = 0x4, offset = 0x4, fixed_abs, tag = 'smem constant byte address 0x4 - core index']
  #allocation1 [shape = 'u32[144,128]{1,0:T(1,128)}', space=vmem, size = 0x12000, scoped, tag = 'internal scratch']
  %s0 = inlined_call_operand.vmem [shape: bf16[768,144], index: 0, kind: input, shape index: {}]
  %s1 = inlined_call_operand.vmem [shape: bf16[2,144,72], index: 1, kind: input, shape index: {}]
  %s2 = inlined_call_operand.vmem [shape: f32[1,72], index: 2, kind: input, shape index: {}]
  %s3 = inlined_call_operand.vmem [shape: bf16[4,432,64], index: 3, kind: input, shape index: {}]
  %s4 = inlined_call_operand.vmem [shape: f32[1,64], index: 4, kind: input, shape index: {}]
  %s5 = inlined_call_operand.vmem [shape: bf16[256,120], index: 5, kind: input, shape index: {}]
  %s6 = inlined_call_operand.vmem [shape: f32[1,120], index: 6, kind: input, shape index: {}]
  %s7 = inlined_call_operand.vmem [shape: bf16[120,84], index: 7, kind: input, shape index: {}]
  %s8 = inlined_call_operand.vmem [shape: f32[1,84], index: 8, kind: input, shape index: {}]
  %s9 = inlined_call_operand.vmem [shape: bf16[84,128], index: 9, kind: input, shape index: {}]
  %s10 = inlined_call_operand.vmem [shape: f32[1,128], index: 10, kind: input, shape index: {}]
  %s11 = inlined_call_operand.vmem [shape: f32[32,128], index: 11, kind: output, shape index: {}]
  %s12 = sld [smem:[#allocation0]]
  $region54: #{lenet_forward.1} parent=0
    _
  %s14 = ssub.s32 1, %s12
  %s15 = scalar_select 0, %s14, %s12
  // Predicated region
  $region2: #{lenet_forward.1} parent=0 // pred_check
    _
  $region3: #{lenet_forward.1} parent=0 // pred_check_branch
    %17 = sbr.rel (0) target = $region5
  $region4: #{lenet_forward.1} parent=0 // pred_region
    _
  $region5: #{lenet_forward.1} parent=0 // pred_fallthru
    _
  // Predicated region
  $region6: #{lenet_forward.1} parent=0 // pred_check
    _
  $region7: #{lenet_forward.1} parent=0 // pred_check_branch
    %19 = sbr.rel (0) target = $region9
  $region8: #{lenet_forward.1} parent=0 // pred_region
    _
  $region9: #{lenet_forward.1} parent=0 // pred_fallthru
    _
  // Predicated region
  $region10: #{lenet_forward.1} parent=0 // pred_check
    _
  $region11: #{lenet_forward.1} parent=0 // pred_check_branch
    %21 = sbr.rel (0) target = $region13
  $region12: #{lenet_forward.1} parent=0 // pred_region
    _
  $region13: #{lenet_forward.1} parent=0 // pred_fallthru
    _
  // Predicated region
  $region14: #{lenet_forward.1} parent=0 // pred_check
    _
  $region15: #{lenet_forward.1} parent=0 // pred_check_branch
    %23 = sbr.rel (0) target = $region17
  $region16: #{lenet_forward.1} parent=0 // pred_region
    _
  $region17: #{lenet_forward.1} parent=0 // pred_fallthru
    _
  // Predicated region
  $region18: #{lenet_forward.1} parent=0 // pred_check
    _
  $region19: #{lenet_forward.1} parent=0 // pred_check_branch
    %25 = sbr.rel (0) target = $region21
  $region20: #{lenet_forward.1} parent=0 // pred_region
    _
  $region21: #{lenet_forward.1} parent=0 // pred_fallthru
    _
  // Predicated region
  $region22: #{lenet_forward.1} parent=0 // pred_check
    _
  $region23: #{lenet_forward.1} parent=0 // pred_check_branch
    %27 = sbr.rel (0) target = $region25
  $region24: #{lenet_forward.1} parent=0 // pred_region
    _
  $region25: #{lenet_forward.1} parent=0 // pred_fallthru
    _
  // Predicated region
  $region26: #{lenet_forward.1} parent=0 // pred_check
    _
  $region27: #{lenet_forward.1} parent=0 // pred_check_branch
    %29 = sbr.rel (0) target = $region29
  $region28: #{lenet_forward.1} parent=0 // pred_region
    _
  $region29: #{lenet_forward.1} parent=0 // pred_fallthru
    _
  // Predicated region
  $region30: #{lenet_forward.1} parent=0 // pred_check
    _
  $region31: #{lenet_forward.1} parent=0 // pred_check_branch
    %31 = sbr.rel (0) target = $region33
  $region32: #{lenet_forward.1} parent=0 // pred_region
    _
  $region33: #{lenet_forward.1} parent=0 // pred_fallthru
    _
  // Predicated region
  $region34: #{lenet_forward.1} parent=0 // pred_check
    _
  $region35: #{lenet_forward.1} parent=0 // pred_check_branch
    %33 = sbr.rel (0) target = $region37
  $region36: #{lenet_forward.1} parent=0 // pred_region
    _
  $region37: #{lenet_forward.1} parent=0 // pred_fallthru
    _
  // Predicated region
  $region38: #{lenet_forward.1} parent=0 // pred_check
    _
  $region39: #{lenet_forward.1} parent=0 // pred_check_branch
    %35 = sbr.rel (0) target = $region41
  $region40: #{lenet_forward.1} parent=0 // pred_region
    _
  $region41: #{lenet_forward.1} parent=0 // pred_fallthru
    _
  // Predicated region
  $region42: #{lenet_forward.1} parent=0 // pred_check
    _
  $region43: #{lenet_forward.1} parent=0 // pred_check_branch
    %37 = sbr.rel (0) target = $region45
  $region44: #{lenet_forward.1} parent=0 // pred_region
    _
  $region45: #{lenet_forward.1} parent=0 // pred_fallthru
    _
  %v39 = vld [vmem:[%s0] sm:$0xff]
  %v40 = vld [vmem:[%s0 + $0x8] sm:$0xff]
  %v41 = vld [vmem:[%s0 + $0x10] sm:$0xff]
  %v42 = vld [vmem:[%s0 + $0x18] sm:$0xff]
  %v43 = vld [vmem:[%s0 + $0x20] sm:$0xff]
  %v44 = vld [vmem:[%s0 + $0x28] sm:$0xff]
  %v45 = vld [vmem:[%s0 + $0x30] sm:$0xff]
  %v46 = vld [vmem:[%s0 + $0x38] sm:$0xff]
  %v47 = vld [vmem:[%s0 + $0x40] sm:$0xff]
  %v48 = vld [vmem:[%s0 + $0x48] sm:$0xff]
  %v49 = vld [vmem:[%s0 + $0x50] sm:$0xff]
  %v50 = vld [vmem:[%s0 + $0x58] sm:$0xff]
  %v51 = vld [vmem:[%s0 + $0x60] sm:$0xff]
  %v52 = vld [vmem:[%s0 + $0x68] sm:$0xff]
  %v53 = vld [vmem:[%s0 + $0x70] sm:$0xff]
  %v54 = vld [vmem:[%s0 + $0x78] sm:$0xff]
  %v55 = vld [vmem:[%s0 + $0x80] sm:$0xff]
  %v56 = vld [vmem:[%s0 + $0x88] sm:$0xff]
  %v57 = vld [vmem:[%s0 + $0x90] sm:$0xff]
  %v58 = vld [vmem:[%s0 + $0x98] sm:$0xff]
  %v59 = vld [vmem:[%s0 + $0xa0] sm:$0xff]
  %v60 = vld [vmem:[%s0 + $0xa8] sm:$0xff]
  %v61 = vld [vmem:[%s0 + $0xb0] sm:$0xff]
  %v62 = vld [vmem:[%s0 + $0xb8] sm:$0xff]
  %v63 = vld [vmem:[%s0 + $0xc0] sm:$0xff]
  %v64 = vld [vmem:[%s0 + $0xc8] sm:$0xff]
  %v65 = vld [vmem:[%s0 + $0xd0] sm:$0xff]
  %v66 = vld [vmem:[%s0 + $0xd8] sm:$0xff]
  %v67 = vld [vmem:[%s0 + $0xe0] sm:$0xff]
  %v68 = vld [vmem:[%s0 + $0xe8] sm:$0xff]
  %v69 = vld [vmem:[%s0 + $0xf0] sm:$0xff]
  %v70 = vld [vmem:[%s0 + $0xf8] sm:$0xff]
  %v71 = vld [vmem:[%s0 + $0x100] sm:$0xff]
  %v72 = vld [vmem:[%s0 + $0x108] sm:$0xff]
  %v73 = vld [vmem:[%s0 + $0x110] sm:$0xff]
  %v74 = vld [vmem:[%s0 + $0x118] sm:$0xff]
  %v75 = vld [vmem:[%s0 + $0x120] sm:$0xff]
  %v76 = vld [vmem:[%s0 + $0x128] sm:$0xff]
  %v77 = vld [vmem:[%s0 + $0x130] sm:$0xff]
  %v78 = vld [vmem:[%s0 + $0x138] sm:$0xff]
  %v79 = vld [vmem:[%s0 + $0x140] sm:$0xff]
  %v80 = vld [vmem:[%s0 + $0x148] sm:$0xff]
  %v81 = vld [vmem:[%s0 + $0x150] sm:$0xff]
  %v82 = vld [vmem:[%s0 + $0x158] sm:$0xff]
  %v83 = vld [vmem:[%s0 + $0x160] sm:$0xff]
  %v84 = vld [vmem:[%s0 + $0x168] sm:$0xff]
  %v85 = vld [vmem:[%s0 + $0x170] sm:$0xff]
  %v86 = vld [vmem:[%s0 + $0x178] sm:$0xff]
  %v87 = vld [vmem:[%s0 + $0x180] sm:$0xff]
  %v88 = vld [vmem:[%s0 + $0x188] sm:$0xff]
  %v89 = vld [vmem:[%s0 + $0x190] sm:$0xff]
  %v90 = vld [vmem:[%s0 + $0x198] sm:$0xff]
  %v91 = vld [vmem:[%s0 + $0x1a0] sm:$0xff]
  %v92 = vld [vmem:[%s0 + $0x1a8] sm:$0xff]
  %v93 = vld [vmem:[%s0 + $0x1b0] sm:$0xff]
  %v94 = vld [vmem:[%s0 + $0x1b8] sm:$0xff]
  %v95 = vld [vmem:[%s0 + $0x1c0] sm:$0xff]
  %v96 = vld [vmem:[%s0 + $0x1c8] sm:$0xff]
  %v97 = vld [vmem:[%s0 + $0x1d0] sm:$0xff]
  %v98 = vld [vmem:[%s0 + $0x1d8] sm:$0xff]
  %v99 = vld [vmem:[%s0 + $0x1e0] sm:$0xff]
  %v100 = vld [vmem:[%s0 + $0x1e8] sm:$0xff]
  %v101 = vld [vmem:[%s0 + $0x1f0] sm:$0xff]
  %v102 = vld [vmem:[%s0 + $0x1f8] sm:$0xff]
  %v103 = vld [vmem:[%s0 + $0x200] sm:$0xff]
  %v104 = vld [vmem:[%s0 + $0x208] sm:$0xff]
  %v105 = vld [vmem:[%s0 + $0x210] sm:$0xff]
  %v106 = vld [vmem:[%s0 + $0x218] sm:$0xff]
  %v107 = vld [vmem:[%s0 + $0x220] sm:$0xff]
  %v108 = vld [vmem:[%s0 + $0x228] sm:$0xff]
  %v109 = vld [vmem:[%s0 + $0x230] sm:$0xff]
  %v110 = vld [vmem:[%s0 + $0x238] sm:$0xff]
  %v111 = vld [vmem:[%s0 + $0x240] sm:$0xff]
  %v112 = vld [vmem:[%s0 + $0x248] sm:$0xff]
  %v113 = vld [vmem:[%s0 + $0x250] sm:$0xff]
  %v114 = vld [vmem:[%s0 + $0x258] sm:$0xff]
  %v115 = vld [vmem:[%s0 + $0x260] sm:$0xff]
  %v116 = vld [vmem:[%s0 + $0x268] sm:$0xff]
  %v117 = vld [vmem:[%s0 + $0x270] sm:$0xff]
  %v118 = vld [vmem:[%s0 + $0x278] sm:$0xff]
  %v119 = vld [vmem:[%s0 + $0x280] sm:$0xff]
  %v120 = vld [vmem:[%s0 + $0x288] sm:$0xff]
  %v121 = vld [vmem:[%s0 + $0x290] sm:$0xff]
  %v122 = vld [vmem:[%s0 + $0x298] sm:$0xff]
  %v123 = vld [vmem:[%s0 + $0x2a0] sm:$0xff]
  %v124 = vld [vmem:[%s0 + $0x2a8] sm:$0xff]
  %v125 = vld [vmem:[%s0 + $0x2b0] sm:$0xff]
  %v126 = vld [vmem:[%s0 + $0x2b8] sm:$0xff]
  %v127 = vld [vmem:[%s0 + $0x2c0] sm:$0xff]
  %v128 = vld [vmem:[%s0 + $0x2c8] sm:$0xff]
  %v129 = vld [vmem:[%s0 + $0x2d0] sm:$0xff]
  %v130 = vld [vmem:[%s0 + $0x2d8] sm:$0xff]
  %v131 = vld [vmem:[%s0 + $0x2e0] sm:$0xff]
  %v132 = vld [vmem:[%s0 + $0x2e8] sm:$0xff]
  %v133 = vld [vmem:[%s0 + $0x2f0] sm:$0xff]
  %v134 = vld [vmem:[%s0 + $0x2f8] sm:$0xff]
  %v135 = vld [vmem:[%s1] sm:$0xf]
  %v136 = vld [vmem:[%s1 + $0x4] sm:$0xf]
  %v137 = vld [vmem:[%s1 + $0x8] sm:$0xf]
  %v138 = vld [vmem:[%s1 + $0xc] sm:$0xf]
  %v139 = vld [vmem:[%s1 + $0x10] sm:$0xf]
  %v140 = vld [vmem:[%s1 + $0x14] sm:$0xf]
  %v141 = vld [vmem:[%s1 + $0x18] sm:$0xf]
  %v142 = vld [vmem:[%s1 + $0x1c] sm:$0xf]
  %v143 = vld [vmem:[%s1 + $0x20] sm:$0xf]
  %v144 = vld [vmem:[%s1 + $0x24] sm:$0xf]
  %v145 = vld [vmem:[%s1 + $0x28] sm:$0xf]
  %v146 = vld [vmem:[%s1 + $0x2c] sm:$0xf]
  %v147 = vld [vmem:[%s1 + $0x30] sm:$0xf]
  %v148 = vld [vmem:[%s1 + $0x34] sm:$0xf]
  %v149 = vld [vmem:[%s1 + $0x38] sm:$0xf]
  %v150 = vld [vmem:[%s1 + $0x3c] sm:$0xf]
  %v151 = vld [vmem:[%s1 + $0x40] sm:$0xf]
  %v152 = vld [vmem:[%s1 + $0x44] sm:$0xf]
  %v249 = vunpack.c.l.b16 %v39
  %v250 = vunpack.c.h.b16 %v39
  %v251 = vunpack.c.l.b16 %v40
  %v252 = vunpack.c.h.b16 %v40
  %v253 = vunpack.c.l.b16 %v41
  %v254 = vunpack.c.h.b16 %v41
  %v255 = vunpack.c.l.b16 %v42
  %v256 = vunpack.c.h.b16 %v42
  %v257 = vunpack.c.l.b16 %v43
  %v258 = vunpack.c.h.b16 %v43
  %v259 = vunpack.c.l.b16 %v44
  %v260 = vunpack.c.h.b16 %v44
  %v261 = vunpack.c.l.b16 %v45
  %v262 = vunpack.c.h.b16 %v45
  %v263 = vunpack.c.l.b16 %v46
  %v264 = vunpack.c.h.b16 %v46
  %v265 = vunpack.c.l.b16 %v47
  %v266 = vunpack.c.h.b16 %v47
  %v267 = vunpack.c.l.b16 %v48
  %v268 = vunpack.c.h.b16 %v48
  %v269 = vunpack.c.l.b16 %v49
  %v270 = vunpack.c.h.b16 %v49
  %v271 = vunpack.c.l.b16 %v50
  %v272 = vunpack.c.h.b16 %v50
  %v273 = vunpack.c.l.b16 %v51
  %v274 = vunpack.c.h.b16 %v51
  %v275 = vunpack.c.l.b16 %v52
  %v276 = vunpack.c.h.b16 %v52
  %v277 = vunpack.c.l.b16 %v53
  %v278 = vunpack.c.h.b16 %v53
  %v279 = vunpack.c.l.b16 %v54
  %v280 = vunpack.c.h.b16 %v54
  %v281 = vunpack.c.l.b16 %v55
  %v282 = vunpack.c.h.b16 %v55
  %v283 = vunpack.c.l.b16 %v56
  %v284 = vunpack.c.h.b16 %v56
  %v285 = vunpack.c.l.b16 %v57
  %v286 = vunpack.c.h.b16 %v57
  %v287 = vunpack.c.l.b16 %v58
  %v288 = vunpack.c.h.b16 %v58
  %v289 = vunpack.c.l.b16 %v59
  %v290 = vunpack.c.h.b16 %v59
  %v291 = vunpack.c.l.b16 %v60
  %v292 = vunpack.c.h.b16 %v60
  %v293 = vunpack.c.l.b16 %v61
  %v294 = vunpack.c.h.b16 %v61
  %v295 = vunpack.c.l.b16 %v62
  %v296 = vunpack.c.h.b16 %v62
  %v297 = vunpack.c.l.b16 %v63
  %v298 = vunpack.c.h.b16 %v63
  %v299 = vunpack.c.l.b16 %v64
  %v300 = vunpack.c.h.b16 %v64
  %v301 = vunpack.c.l.b16 %v65
  %v302 = vunpack.c.h.b16 %v65
  %v303 = vunpack.c.l.b16 %v66
  %v304 = vunpack.c.h.b16 %v66
  %v305 = vunpack.c.l.b16 %v67
  %v306 = vunpack.c.h.b16 %v67
  %v307 = vunpack.c.l.b16 %v68
  %v308 = vunpack.c.h.b16 %v68
  %v309 = vunpack.c.l.b16 %v69
  %v310 = vunpack.c.h.b16 %v69
  %v311 = vunpack.c.l.b16 %v70
  %v312 = vunpack.c.h.b16 %v70
  %v313 = vunpack.c.l.b16 %v71
  %v314 = vunpack.c.h.b16 %v71
  %v315 = vunpack.c.l.b16 %v72
  %v316 = vunpack.c.h.b16 %v72
  %v317 = vunpack.c.l.b16 %v73
  %v318 = vunpack.c.h.b16 %v73
  %v319 = vunpack.c.l.b16 %v74
  %v320 = vunpack.c.h.b16 %v74
  %v321 = vunpack.c.l.b16 %v75
  %v322 = vunpack.c.h.b16 %v75
  %v323 = vunpack.c.l.b16 %v76
  %v324 = vunpack.c.h.b16 %v76
  %v325 = vunpack.c.l.b16 %v77
  %v326 = vunpack.c.h.b16 %v77
  %v327 = vunpack.c.l.b16 %v78
  %v328 = vunpack.c.h.b16 %v78
  %v329 = vunpack.c.l.b16 %v79
  %v330 = vunpack.c.h.b16 %v79
  %v331 = vunpack.c.l.b16 %v80
  %v332 = vunpack.c.h.b16 %v80
  %v333 = vunpack.c.l.b16 %v81
  %v334 = vunpack.c.h.b16 %v81
  %v335 = vunpack.c.l.b16 %v82
  %v336 = vunpack.c.h.b16 %v82
  %v337 = vunpack.c.l.b16 %v83
  %v338 = vunpack.c.h.b16 %v83
  %v339 = vunpack.c.l.b16 %v84
  %v340 = vunpack.c.h.b16 %v84
  %v341 = vunpack.c.l.b16 %v85
  %v342 = vunpack.c.h.b16 %v85
  %v343 = vunpack.c.l.b16 %v86
  %v344 = vunpack.c.h.b16 %v86
  %v345 = vunpack.c.l.b16 %v87
  %v346 = vunpack.c.h.b16 %v87
  %v347 = vunpack.c.l.b16 %v88
  %v348 = vunpack.c.h.b16 %v88
  %v349 = vunpack.c.l.b16 %v89
  %v350 = vunpack.c.h.b16 %v89
  %v351 = vunpack.c.l.b16 %v90
  %v352 = vunpack.c.h.b16 %v90
  %v353 = vunpack.c.l.b16 %v91
  %v354 = vunpack.c.h.b16 %v91
  %v355 = vunpack.c.l.b16 %v92
  %v356 = vunpack.c.h.b16 %v92
  %v357 = vunpack.c.l.b16 %v93
  %v358 = vunpack.c.h.b16 %v93
  %v359 = vunpack.c.l.b16 %v94
  %v360 = vunpack.c.h.b16 %v94
  %v361 = vunpack.c.l.b16 %v95
  %v362 = vunpack.c.h.b16 %v95
  %v363 = vunpack.c.l.b16 %v96
  %v364 = vunpack.c.h.b16 %v96
  %v365 = vunpack.c.l.b16 %v97
  %v366 = vunpack.c.h.b16 %v97
  %v367 = vunpack.c.l.b16 %v98
  %v368 = vunpack.c.h.b16 %v98
  %v369 = vunpack.c.l.b16 %v99
  %v370 = vunpack.c.h.b16 %v99
  %v371 = vunpack.c.l.b16 %v100
  %v372 = vunpack.c.h.b16 %v100
  %v373 = vunpack.c.l.b16 %v101
  %v374 = vunpack.c.h.b16 %v101
  %v375 = vunpack.c.l.b16 %v102
  %v376 = vunpack.c.h.b16 %v102
  %v377 = vunpack.c.l.b16 %v103
  %v378 = vunpack.c.h.b16 %v103
  %v379 = vunpack.c.l.b16 %v104
  %v380 = vunpack.c.h.b16 %v104
  %v381 = vunpack.c.l.b16 %v105
  %v382 = vunpack.c.h.b16 %v105
  %v383 = vunpack.c.l.b16 %v106
  %v384 = vunpack.c.h.b16 %v106
  %v385 = vunpack.c.l.b16 %v107
  %v386 = vunpack.c.h.b16 %v107
  %v387 = vunpack.c.l.b16 %v108
  %v388 = vunpack.c.h.b16 %v108
  %v389 = vunpack.c.l.b16 %v109
  %v390 = vunpack.c.h.b16 %v109
  %v391 = vunpack.c.l.b16 %v110
  %v392 = vunpack.c.h.b16 %v110
  %v393 = vunpack.c.l.b16 %v111
  %v394 = vunpack.c.h.b16 %v111
  %v395 = vunpack.c.l.b16 %v112
  %v396 = vunpack.c.h.b16 %v112
  %v397 = vunpack.c.l.b16 %v113
  %v398 = vunpack.c.h.b16 %v113
  %v399 = vunpack.c.l.b16 %v114
  %v400 = vunpack.c.h.b16 %v114
  %v401 = vunpack.c.l.b16 %v115
  %v402 = vunpack.c.h.b16 %v115
  %v403 = vunpack.c.l.b16 %v116
  %v404 = vunpack.c.h.b16 %v116
  %v405 = vunpack.c.l.b16 %v117
  %v406 = vunpack.c.h.b16 %v117
  %v407 = vunpack.c.l.b16 %v118
  %v408 = vunpack.c.h.b16 %v118
  %v409 = vunpack.c.l.b16 %v119
  %v410 = vunpack.c.h.b16 %v119
  %v411 = vunpack.c.l.b16 %v120
  %v412 = vunpack.c.h.b16 %v120
  %v413 = vunpack.c.l.b16 %v121
  %v414 = vunpack.c.h.b16 %v121
  %v415 = vunpack.c.l.b16 %v122
  %v416 = vunpack.c.h.b16 %v122
  %v417 = vunpack.c.l.b16 %v123
  %v418 = vunpack.c.h.b16 %v123
  %v419 = vunpack.c.l.b16 %v124
  %v420 = vunpack.c.h.b16 %v124
  %v421 = vunpack.c.l.b16 %v125
  %v422 = vunpack.c.h.b16 %v125
  %v423 = vunpack.c.l.b16 %v126
  %v424 = vunpack.c.h.b16 %v126
  %v425 = vunpack.c.l.b16 %v127
  %v426 = vunpack.c.h.b16 %v127
  %v427 = vunpack.c.l.b16 %v128
  %v428 = vunpack.c.h.b16 %v128
  %v429 = vunpack.c.l.b16 %v129
  %v430 = vunpack.c.h.b16 %v129
  %v431 = vunpack.c.l.b16 %v130
  %v432 = vunpack.c.h.b16 %v130
  %v433 = vunpack.c.l.b16 %v131
  %v434 = vunpack.c.h.b16 %v131
  %v435 = vunpack.c.l.b16 %v132
  %v436 = vunpack.c.h.b16 %v132
  %v437 = vunpack.c.l.b16 %v133
  %v438 = vunpack.c.h.b16 %v133
  %v439 = vunpack.c.l.b16 %v134
  %v440 = vunpack.c.h.b16 %v134
  %v441 = vpack.c.b16 %v251, %v249
  %v442 = vpack.c.b16 %v252, %v250
  %v443 = vpack.c.b16 %v255, %v253
  %v444 = vpack.c.b16 %v256, %v254
  %v445 = vpack.c.b16 %v259, %v257
  %v446 = vpack.c.b16 %v260, %v258
  %v447 = vpack.c.b16 %v263, %v261
  %v448 = vpack.c.b16 %v264, %v262
  %v449 = vpack.c.b16 %v267, %v265
  %v450 = vpack.c.b16 %v268, %v266
  %v451 = vpack.c.b16 %v271, %v269
  %v452 = vpack.c.b16 %v272, %v270
  %v453 = vpack.c.b16 %v275, %v273
  %v454 = vpack.c.b16 %v276, %v274
  %v455 = vpack.c.b16 %v279, %v277
  %v456 = vpack.c.b16 %v280, %v278
  %v457 = vpack.c.b16 %v283, %v281
  %v458 = vpack.c.b16 %v284, %v282
  %v459 = vpack.c.b16 %v287, %v285
  %v460 = vpack.c.b16 %v288, %v286
  %v461 = vpack.c.b16 %v291, %v289
  %v462 = vpack.c.b16 %v292, %v290
  %v463 = vpack.c.b16 %v295, %v293
  %v464 = vpack.c.b16 %v296, %v294
  %v465 = vpack.c.b16 %v299, %v297
  %v466 = vpack.c.b16 %v300, %v298
  %v467 = vpack.c.b16 %v303, %v301
  %v468 = vpack.c.b16 %v304, %v302
  %v469 = vpack.c.b16 %v307, %v305
  %v470 = vpack.c.b16 %v308, %v306
  %v471 = vpack.c.b16 %v311, %v309
  %v472 = vpack.c.b16 %v312, %v310
  %v473 = vpack.c.b16 %v315, %v313
  %v474 = vpack.c.b16 %v316, %v314
  %v475 = vpack.c.b16 %v319, %v317
  %v476 = vpack.c.b16 %v320, %v318
  %v477 = vpack.c.b16 %v323, %v321
  %v478 = vpack.c.b16 %v324, %v322
  %v479 = vpack.c.b16 %v327, %v325
  %v480 = vpack.c.b16 %v328, %v326
  %v481 = vpack.c.b16 %v331, %v329
  %v482 = vpack.c.b16 %v332, %v330
  %v483 = vpack.c.b16 %v335, %v333
  %v484 = vpack.c.b16 %v336, %v334
  %v485 = vpack.c.b16 %v339, %v337
  %v486 = vpack.c.b16 %v340, %v338
  %v487 = vpack.c.b16 %v343, %v341
  %v488 = vpack.c.b16 %v344, %v342
  %v489 = vpack.c.b16 %v347, %v345
  %v490 = vpack.c.b16 %v348, %v346
  %v491 = vpack.c.b16 %v351, %v349
  %v492 = vpack.c.b16 %v352, %v350
  %v493 = vpack.c.b16 %v355, %v353
  %v494 = vpack.c.b16 %v356, %v354
  %v495 = vpack.c.b16 %v359, %v357
  %v496 = vpack.c.b16 %v360, %v358
  %v497 = vpack.c.b16 %v363, %v361
  %v498 = vpack.c.b16 %v364, %v362
  %v499 = vpack.c.b16 %v367, %v365
  %v500 = vpack.c.b16 %v368, %v366
  %v501 = vpack.c.b16 %v371, %v369
  %v502 = vpack.c.b16 %v372, %v370
  %v503 = vpack.c.b16 %v375, %v373
  %v504 = vpack.c.b16 %v376, %v374
  %v505 = vpack.c.b16 %v379, %v377
  %v506 = vpack.c.b16 %v380, %v378
  %v507 = vpack.c.b16 %v383, %v381
  %v508 = vpack.c.b16 %v384, %v382
  %v509 = vpack.c.b16 %v387, %v385
  %v510 = vpack.c.b16 %v388, %v386
  %v511 = vpack.c.b16 %v391, %v389
  %v512 = vpack.c.b16 %v392, %v390
  %v513 = vpack.c.b16 %v395, %v393
  %v514 = vpack.c.b16 %v396, %v394
  %v515 = vpack.c.b16 %v399, %v397
  %v516 = vpack.c.b16 %v400, %v398
  %v517 = vpack.c.b16 %v403, %v401
  %v518 = vpack.c.b16 %v404, %v402
  %v519 = vpack.c.b16 %v407, %v405
  %v520 = vpack.c.b16 %v408, %v406
  %v521 = vpack.c.b16 %v411, %v409
  %v522 = vpack.c.b16 %v412, %v410
  %v523 = vpack.c.b16 %v415, %v413
  %v524 = vpack.c.b16 %v416, %v414
  %v525 = vpack.c.b16 %v419, %v417
  %v526 = vpack.c.b16 %v420, %v418
  %v527 = vpack.c.b16 %v423, %v421
  %v528 = vpack.c.b16 %v424, %v422
  %v529 = vpack.c.b16 %v427, %v425
  %v530 = vpack.c.b16 %v428, %v426
  %v531 = vpack.c.b16 %v431, %v429
  %v532 = vpack.c.b16 %v432, %v430
  %v533 = vpack.c.b16 %v435, %v433
  %v534 = vpack.c.b16 %v436, %v434
  %v535 = vpack.c.b16 %v439, %v437
  %v536 = vpack.c.b16 %v440, %v438
  %v603 = vunpack.c.l.b16 %v135
  %v604 = vunpack.c.l.b16 %v136
  %v605 = vunpack.c.l.b16 %v137
  %v606 = vunpack.c.l.b16 %v138
  %v607 = vunpack.c.l.b16 %v139
  %v608 = vunpack.c.l.b16 %v140
  %v609 = vunpack.c.l.b16 %v141
  %v610 = vunpack.c.l.b16 %v142
  %v611 = vunpack.c.l.b16 %v143
  %v612 = vunpack.c.l.b16 %v144
  %v613 = vunpack.c.l.b16 %v145
  %v614 = vunpack.c.l.b16 %v146
  %v615 = vunpack.c.l.b16 %v147
  %v616 = vunpack.c.l.b16 %v148
  %v617 = vunpack.c.l.b16 %v149
  %v618 = vunpack.c.l.b16 %v150
  %v619 = vunpack.c.l.b16 %v151
  %v620 = vunpack.c.l.b16 %v152
  %v621 = vpack.c.b16 %v604, %v603
  %v622 = vpack.c.b16 %v606, %v605
  %v623 = vpack.c.b16 %v608, %v607
  %v624 = vpack.c.b16 %v610, %v609
  %v625 = vpack.c.b16 %v612, %v611
  %v626 = vpack.c.b16 %v614, %v613
  %v627 = vpack.c.b16 %v616, %v615
  %v628 = vpack.c.b16 %v618, %v617
  %v629 = vpack.c.b16 %v620, %v619
  %vm639 = vcmask 130048
  %v641 = vsel %vm639, %v442, 0
  %v644 = vsel %vm639, %v444, 0
  %v647 = vsel %vm639, %v446, 0
  %v650 = vsel %vm639, %v448, 0
  %v653 = vsel %vm639, %v450, 0
  %v656 = vsel %vm639, %v452, 0
  %v659 = vsel %vm639, %v454, 0
  %v662 = vsel %vm639, %v456, 0
  %v665 = vsel %vm639, %v458, 0
  %v668 = vsel %vm639, %v460, 0
  %v671 = vsel %vm639, %v462, 0
  %v674 = vsel %vm639, %v464, 0
  %v677 = vsel %vm639, %v466, 0
  %v680 = vsel %vm639, %v468, 0
  %v683 = vsel %vm639, %v470, 0
  %v686 = vsel %vm639, %v472, 0
  %v689 = vsel %vm639, %v474, 0
  %v692 = vsel %vm639, %v476, 0
  %v695 = vsel %vm639, %v478, 0
  %v698 = vsel %vm639, %v480, 0
  %v701 = vsel %vm639, %v482, 0
  %v704 = vsel %vm639, %v484, 0
  %v707 = vsel %vm639, %v486, 0
  %v710 = vsel %vm639, %v488, 0
  %v713 = vsel %vm639, %v490, 0
  %v716 = vsel %vm639, %v492, 0
  %v719 = vsel %vm639, %v494, 0
  %v722 = vsel %vm639, %v496, 0
  %v725 = vsel %vm639, %v498, 0
  %v728 = vsel %vm639, %v500, 0
  %v731 = vsel %vm639, %v502, 0
  %v734 = vsel %vm639, %v504, 0
  %v737 = vsel %vm639, %v506, 0
  %v740 = vsel %vm639, %v508, 0
  %v743 = vsel %vm639, %v510, 0
  %v746 = vsel %vm639, %v512, 0
  %v749 = vsel %vm639, %v514, 0
  %v752 = vsel %vm639, %v516, 0
  %v755 = vsel %vm639, %v518, 0
  %v758 = vsel %vm639, %v520, 0
  %v761 = vsel %vm639, %v522, 0
  %v764 = vsel %vm639, %v524, 0
  %v767 = vsel %vm639, %v526, 0
  %v770 = vsel %vm639, %v528, 0
  %v773 = vsel %vm639, %v530, 0
  %v776 = vsel %vm639, %v532, 0
  %v779 = vsel %vm639, %v534, 0
  %v782 = vsel %vm639, %v536, 0
  %784 = vmatprep.subr.bf16.mxu0 0
  %785 = vmatpush1.bf16.msra.mxu0 %v621
  %786 = vmatprep.subr.bf16.mxu0 0
  %787 = vmatpush1.bf16.msra.mxu0 %v622
  %788 = vmatprep.subr.bf16.mxu0 0
  %789 = vmatpush1.bf16.msra.mxu0 %v623
  %790 = vmatprep.subr.bf16.mxu0 0
  %791 = vmatpush1.bf16.msra.mxu0 %v624
  %792 = vmatprep.subr.bf16.mxu0 0
  %793 = vmatpush1.bf16.msra.mxu0 %v625
  %794 = vmatprep.subr.bf16.mxu0 0
  %795 = vmatpush1.bf16.msra.mxu0 %v626
  %796 = vmatprep.subr.bf16.mxu0 0
  %797 = vmatpush1.bf16.msra.mxu0 %v627
  %798 = vmatprep.subr.bf16.mxu0 0
  %799 = vmatpush1.bf16.msra.mxu0 %v628
  %800 = vmatprep.subr.bf16.mxu0 0
  %801 = vmatpush1.bf16.msra.mxu0 %v629
  %802 = vmatprep.subr.bf16.mxu0 0
  %803 = vmatpush1.bf16.msra.mxu0 0
  %804 = vmatprep.subr.bf16.mxu0 0
  %805 = vmatpush1.bf16.msra.mxu0 0
  %806 = vmatprep.subr.bf16.mxu0 0
  %807 = vmatpush1.bf16.msra.mxu0 0
  %808 = vmatprep.subr.bf16.mxu0 0
  %809 = vmatpush1.bf16.msra.mxu0 0
  %810 = vmatprep.subr.bf16.mxu0 0
  %811 = vmatpush1.bf16.msra.mxu0 0
  %812 = vmatprep.subr.bf16.mxu0 0
  %813 = vmatpush1.bf16.msra.mxu0 0
  %814 = vmatprep.subr.bf16.mxu0 0
  %815 = vmatpush1.bf16.msra.mxu0 0
  %816 = vmatprep.mubr.bf16.mxu0 %v641
  %817 = vmatmul.mubr.bf16.gmra.mrb[0].mxu0 %v441
  %v818 = vpop.f32.mrb[0].mxu0
  %v819 = vadd.f32 0.0, %v818
  %v820 = vpop.f32.mrb[0].mxu0
  %v821 = vpop.f32.mrb[0].mxu0
  %v822 = vadd.f32 0.0, %v821
  %v823 = vpop.f32.mrb[0].mxu0
  %824 = vmatprep.mubr.bf16.mxu0 %v644
  %825 = vmatmul.mubr.bf16.gmra.mrb[0].mxu0 %v443
  %v826 = vpop.f32.mrb[0].mxu0
  %v827 = vadd.f32 0.0, %v826
  %v828 = vpop.f32.mrb[0].mxu0
  %v829 = vpop.f32.mrb[0].mxu0
  %v830 = vadd.f32 0.0, %v829
  %v831 = vpop.f32.mrb[0].mxu0
  %832 = vmatprep.mubr.bf16.mxu0 %v647
  %833 = vmatmul.mubr.bf16.gmra.mrb[0].mxu0 %v445
  %v834 = vpop.f32.mrb[0].mxu0
  %v835 = vadd.f32 0.0, %v834
  %v836 = vpop.f32.mrb[0].mxu0
  %v837 = vpop.f32.mrb[0].mxu0
  %v838 = vadd.f32 0.0, %v837
  %v839 = vpop.f32.mrb[0].mxu0
  %840 = vmatprep.mubr.bf16.mxu0 %v650
  %841 = vmatmul.mubr.bf16.gmra.mrb[0].mxu0 %v447
  %v842 = vpop.f32.mrb[0].mxu0
  %v843 = vadd.f32 0.0, %v842
  %v844 = vpop.f32.mrb[0].mxu0
  %v845 = vpop.f32.mrb[0].mxu0
  %v846 = vadd.f32 0.0, %v845
  %v847 = vpop.f32.mrb[0].mxu0
  %848 = vmatprep.mubr.bf16.mxu0 %v653
  %849 = vmatmul.mubr.bf16.gmra.mrb[0].mxu0 %v449
  %v850 = vpop.f32.mrb[0].mxu0
  %v851 = vadd.f32 0.0, %v850
  %v852 = vpop.f32.mrb[0].mxu0
  %v853 = vpop.f32.mrb[0].mxu0
  %v854 = vadd.f32 0.0, %v853
  %v855 = vpop.f32.mrb[0].mxu0
  %856 = vmatprep.mubr.bf16.mxu0 %v656
  %857 = vmatmul.mubr.bf16.gmra.mrb[0].mxu0 %v451
  %v858 = vpop.f32.mrb[0].mxu0
  %v859 = vadd.f32 0.0, %v858
  %v860 = vpop.f32.mrb[0].mxu0
  %v861 = vpop.f32.mrb[0].mxu0
  %v862 = vadd.f32 0.0, %v861
  %v863 = vpop.f32.mrb[0].mxu0
  %864 = vmatprep.mubr.bf16.mxu0 %v659
  %865 = vmatmul.mubr.bf16.gmra.mrb[0].mxu0 %v453
  %v866 = vpop.f32.mrb[0].mxu0
  %v867 = vadd.f32 0.0, %v866
  %v868 = vpop.f32.mrb[0].mxu0
  %v869 = vpop.f32.mrb[0].mxu0
  %v870 = vadd.f32 0.0, %v869
  %v871 = vpop.f32.mrb[0].mxu0
  %872 = vmatprep.mubr.bf16.mxu0 %v662
  %873 = vmatmul.mubr.bf16.gmra.mrb[0].mxu0 %v455
  %v874 = vpop.f32.mrb[0].mxu0
  %v875 = vadd.f32 0.0, %v874
  %v876 = vpop.f32.mrb[0].mxu0
  %v877 = vpop.f32.mrb[0].mxu0
  %v878 = vadd.f32 0.0, %v877
  %v879 = vpop.f32.mrb[0].mxu0
  %880 = vmatprep.mubr.bf16.mxu0 %v665
  %881 = vmatmul.mubr.bf16.gmra.mrb[0].mxu0 %v457
  %v882 = vpop.f32.mrb[0].mxu0
  %v883 = vadd.f32 0.0, %v882
  %v884 = vpop.f32.mrb[0].mxu0
  %v885 = vpop.f32.mrb[0].mxu0
  %v886 = vadd.f32 0.0, %v885
  %v887 = vpop.f32.mrb[0].mxu0
  %888 = vmatprep.mubr.bf16.mxu0 %v668
  %889 = vmatmul.mubr.bf16.gmra.mrb[0].mxu0 %v459
  %v890 = vpop.f32.mrb[0].mxu0
  %v891 = vadd.f32 0.0, %v890
  %v892 = vpop.f32.mrb[0].mxu0
  %v893 = vpop.f32.mrb[0].mxu0
  %v894 = vadd.f32 0.0, %v893
  %v895 = vpop.f32.mrb[0].mxu0
  %896 = vmatprep.mubr.bf16.mxu0 %v671
  %897 = vmatmul.mubr.bf16.gmra.mrb[0].mxu0 %v461
  %v898 = vpop.f32.mrb[0].mxu0
  %v899 = vadd.f32 0.0, %v898
  %v900 = vpop.f32.mrb[0].mxu0
  %v901 = vpop.f32.mrb[0].mxu0
  %v902 = vadd.f32 0.0, %v901
  %v903 = vpop.f32.mrb[0].mxu0
  %904 = vmatprep.mubr.bf16.mxu0 %v674
  %905 = vmatmul.mubr.bf16.gmra.mrb[0].mxu0 %v463
  %v906 = vpop.f32.mrb[0].mxu0
  %v907 = vadd.f32 0.0, %v906
  %v908 = vpop.f32.mrb[0].mxu0
  %v909 = vpop.f32.mrb[0].mxu0
  %v910 = vadd.f32 0.0, %v909
  %v911 = vpop.f32.mrb[0].mxu0
  %912 = vmatprep.mubr.bf16.mxu0 %v677
  %913 = vmatmul.mubr.bf16.gmra.mrb[0].mxu0 %v465
  %v914 = vpop.f32.mrb[0].mxu0
  %v915 = vadd.f32 0.0, %v914
  %v916 = vpop.f32.mrb[0].mxu0
  %v917 = vpop.f32.mrb[0].mxu0
  %v918 = vadd.f32 0.0, %v917
  %v919 = vpop.f32.mrb[0].mxu0
  %920 = vmatprep.mubr.bf16.mxu0 %v680
  %921 = vmatmul.mubr.bf16.gmra.mrb[0].mxu0 %v467
  %v922 = vpop.f32.mrb[0].mxu0
  %v923 = vadd.f32 0.0, %v922
  %v924 = vpop.f32.mrb[0].mxu0
  %v925 = vpop.f32.mrb[0].mxu0
  %v926 = vadd.f32 0.0, %v925
  %v927 = vpop.f32.mrb[0].mxu0
  %928 = vmatprep.mubr.bf16.mxu0 %v683
  %929 = vmatmul.mubr.bf16.gmra.mrb[0].mxu0 %v469
  %v930 = vpop.f32.mrb[0].mxu0
  %v931 = vadd.f32 0.0, %v930
  %v932 = vpop.f32.mrb[0].mxu0
  %v933 = vpop.f32.mrb[0].mxu0
  %v934 = vadd.f32 0.0, %v933
  %v935 = vpop.f32.mrb[0].mxu0
  %936 = vmatprep.mubr.bf16.mxu0 %v686
  %937 = vmatmul.mubr.bf16.gmra.mrb[0].mxu0 %v471
  %v938 = vpop.f32.mrb[0].mxu0
  %v939 = vadd.f32 0.0, %v938
  %v940 = vpop.f32.mrb[0].mxu0
  %v941 = vpop.f32.mrb[0].mxu0
  %v942 = vadd.f32 0.0, %v941
  %v943 = vpop.f32.mrb[0].mxu0
  %944 = vmatprep.mubr.bf16.mxu0 %v689
  %945 = vmatmul.mubr.bf16.gmra.mrb[0].mxu0 %v473
  %v946 = vpop.f32.mrb[0].mxu0
  %v947 = vadd.f32 0.0, %v946
  %v948 = vpop.f32.mrb[0].mxu0
  %v949 = vpop.f32.mrb[0].mxu0
  %v950 = vadd.f32 0.0, %v949
  %v951 = vpop.f32.mrb[0].mxu0
  %952 = vmatprep.mubr.bf16.mxu0 %v692
  %953 = vmatmul.mubr.bf16.gmra.mrb[0].mxu0 %v475
  %v954 = vpop.f32.mrb[0].mxu0
  %v955 = vadd.f32 0.0, %v954
  %v956 = vpop.f32.mrb[0].mxu0
  %v957 = vpop.f32.mrb[0].mxu0
  %v958 = vadd.f32 0.0, %v957
  %v959 = vpop.f32.mrb[0].mxu0
  %960 = vmatprep.mubr.bf16.mxu0 %v695
  %961 = vmatmul.mubr.bf16.gmra.mrb[0].mxu0 %v477
  %v962 = vpop.f32.mrb[0].mxu0
  %v963 = vadd.f32 0.0, %v962
  %v964 = vpop.f32.mrb[0].mxu0
  %v965 = vpop.f32.mrb[0].mxu0
  %v966 = vadd.f32 0.0, %v965
  %v967 = vpop.f32.mrb[0].mxu0
  %968 = vmatprep.mubr.bf16.mxu0 %v698
  %969 = vmatmul.mubr.bf16.gmra.mrb[0].mxu0 %v479
  %v970 = vpop.f32.mrb[0].mxu0
  %v971 = vadd.f32 0.0, %v970
  %v972 = vpop.f32.mrb[0].mxu0
  %v973 = vpop.f32.mrb[0].mxu0
  %v974 = vadd.f32 0.0, %v973
  %v975 = vpop.f32.mrb[0].mxu0
  %976 = vmatprep.mubr.bf16.mxu0 %v701
  %977 = vmatmul.mubr.bf16.gmra.mrb[0].mxu0 %v481
  %v978 = vpop.f32.mrb[0].mxu0
  %v979 = vadd.f32 0.0, %v978
  %v980 = vpop.f32.mrb[0].mxu0
  %v981 = vpop.f32.mrb[0].mxu0
  %v982 = vadd.f32 0.0, %v981
  %v983 = vpop.f32.mrb[0].mxu0
  %984 = vmatprep.mubr.bf16.mxu0 %v704
  %985 = vmatmul.mubr.bf16.gmra.mrb[0].mxu0 %v483
  %v986 = vpop.f32.mrb[0].mxu0
  %v987 = vadd.f32 0.0, %v986
  %v988 = vpop.f32.mrb[0].mxu0
  %v989 = vpop.f32.mrb[0].mxu0
  %v990 = vadd.f32 0.0, %v989
  %v991 = vpop.f32.mrb[0].mxu0
  %992 = vmatprep.mubr.bf16.mxu0 %v707
  %993 = vmatmul.mubr.bf16.gmra.mrb[0].mxu0 %v485
  %v994 = vpop.f32.mrb[0].mxu0
  %v995 = vadd.f32 0.0, %v994
  %v996 = vpop.f32.mrb[0].mxu0
  %v997 = vpop.f32.mrb[0].mxu0
  %v998 = vadd.f32 0.0, %v997
  %v999 = vpop.f32.mrb[0].mxu0
  %1000 = vmatprep.mubr.bf16.mxu0 %v710
  %1001 = vmatmul.mubr.bf16.gmra.mrb[0].mxu0 %v487
  %v1002 = vpop.f32.mrb[0].mxu0
  %v1003 = vadd.f32 0.0, %v1002
  %v1004 = vpop.f32.mrb[0].mxu0
  %v1005 = vpop.f32.mrb[0].mxu0
  %v1006 = vadd.f32 0.0, %v1005
  %v1007 = vpop.f32.mrb[0].mxu0
  %1008 = vmatprep.mubr.bf16.mxu0 %v713
  %1009 = vmatmul.mubr.bf16.gmra.mrb[0].mxu0 %v489
  %v1010 = vpop.f32.mrb[0].mxu0
  %v1011 = vadd.f32 0.0, %v1010
  %v1012 = vpop.f32.mrb[0].mxu0
  %v1013 = vpop.f32.mrb[0].mxu0
  %v1014 = vadd.f32 0.0, %v1013
  %v1015 = vpop.f32.mrb[0].mxu0
  %1016 = vmatprep.mubr.bf16.mxu0 %v716
  %1017 = vmatmul.mubr.bf16.gmra.mrb[0].mxu0 %v491
  %v1018 = vpop.f32.mrb[0].mxu0
  %v1019 = vadd.f32 0.0, %v1018
  %v1020 = vpop.f32.mrb[0].mxu0
  %v1021 = vpop.f32.mrb[0].mxu0
  %v1022 = vadd.f32 0.0, %v1021
  %v1023 = vpop.f32.mrb[0].mxu0
  %1024 = vmatprep.mubr.bf16.mxu0 %v719
  %1025 = vmatmul.mubr.bf16.gmra.mrb[0].mxu0 %v493
  %v1026 = vpop.f32.mrb[0].mxu0
  %v1027 = vadd.f32 0.0, %v1026
  %v1028 = vpop.f32.mrb[0].mxu0
  %v1029 = vpop.f32.mrb[0].mxu0
  %v1030 = vadd.f32 0.0, %v1029
  %v1031 = vpop.f32.mrb[0].mxu0
  %1032 = vmatprep.mubr.bf16.mxu0 %v722
  %1033 = vmatmul.mubr.bf16.gmra.mrb[0].mxu0 %v495
  %v1034 = vpop.f32.mrb[0].mxu0
  %v1035 = vadd.f32 0.0, %v1034
  %v1036 = vpop.f32.mrb[0].mxu0
  %v1037 = vpop.f32.mrb[0].mxu0
  %v1038 = vadd.f32 0.0, %v1037
  %v1039 = vpop.f32.mrb[0].mxu0
  %1040 = vmatprep.mubr.bf16.mxu0 %v725
  %1041 = vmatmul.mubr.bf16.gmra.mrb[0].mxu0 %v497
  %v1042 = vpop.f32.mrb[0].mxu0
  %v1043 = vadd.f32 0.0, %v1042
  %v1044 = vpop.f32.mrb[0].mxu0
  %v1045 = vpop.f32.mrb[0].mxu0
  %v1046 = vadd.f32 0.0, %v1045
  %v1047 = vpop.f32.mrb[0].mxu0
  %1048 = vmatprep.mubr.bf16.mxu0 %v728
  %1049 = vmatmul.mubr.bf16.gmra.mrb[0].mxu0 %v499
  %v1050 = vpop.f32.mrb[0].mxu0
  %v1051 = vadd.f32 0.0, %v1050
  %v1052 = vpop.f32.mrb[0].mxu0
  %v1053 = vpop.f32.mrb[0].mxu0
  %v1054 = vadd.f32 0.0, %v1053
  %v1055 = vpop.f32.mrb[0].mxu0
  %1056 = vmatprep.mubr.bf16.mxu0 %v731
  %1057 = vmatmul.mubr.bf16.gmra.mrb[0].mxu0 %v501
  %v1058 = vpop.f32.mrb[0].mxu0
  %v1059 = vadd.f32 0.0, %v1058
  %v1060 = vpop.f32.mrb[0].mxu0
  %v1061 = vpop.f32.mrb[0].mxu0
  %v1062 = vadd.f32 0.0, %v1061
  %v1063 = vpop.f32.mrb[0].mxu0
  %1064 = vmatprep.mubr.bf16.mxu0 %v734
  %1065 = vmatmul.mubr.bf16.gmra.mrb[0].mxu0 %v503
  %v1066 = vpop.f32.mrb[0].mxu0
  %v1067 = vadd.f32 0.0, %v1066
  %v1068 = vpop.f32.mrb[0].mxu0
  %v1069 = vpop.f32.mrb[0].mxu0
  %v1070 = vadd.f32 0.0, %v1069
  %v1071 = vpop.f32.mrb[0].mxu0
  %1072 = vmatprep.mubr.bf16.mxu0 %v737
  %1073 = vmatmul.mubr.bf16.gmra.mrb[0].mxu0 %v505
  %v1074 = vpop.f32.mrb[0].mxu0
  %v1075 = vadd.f32 0.0, %v1074
  %v1076 = vpop.f32.mrb[0].mxu0
  %v1077 = vpop.f32.mrb[0].mxu0
  %v1078 = vadd.f32 0.0, %v1077
  %v1079 = vpop.f32.mrb[0].mxu0
  %1080 = vmatprep.mubr.bf16.mxu0 %v740
  %1081 = vmatmul.mubr.bf16.gmra.mrb[0].mxu0 %v507
  %v1082 = vpop.f32.mrb[0].mxu0
  %v1083 = vadd.f32 0.0, %v1082
  %v1084 = vpop.f32.mrb[0].mxu0
  %v1085 = vpop.f32.mrb[0].mxu0
  %v1086 = vadd.f32 0.0, %v1085
  %v1087 = vpop.f32.mrb[0].mxu0
  %1088 = vmatprep.mubr.bf16.mxu0 %v743
  %1089 = vmatmul.mubr.bf16.gmra.mrb[0].mxu0 %v509
  %v1090 = vpop.f32.mrb[0].mxu0
  %v1091 = vadd.f32 0.0, %v1090
  %v1092 = vpop.f32.mrb[0].mxu0
  %v1093 = vpop.f32.mrb[0].mxu0
  %v1094 = vadd.f32 0.0, %v1093
  %v1095 = vpop.f32.mrb[0].mxu0
  %1096 = vmatprep.mubr.bf16.mxu0 %v746
  %1097 = vmatmul.mubr.bf16.gmra.mrb[0].mxu0 %v511
  %v1098 = vpop.f32.mrb[0].mxu0
  %v1099 = vadd.f32 0.0, %v1098
  %v1100 = vpop.f32.mrb[0].mxu0
  %v1101 = vpop.f32.mrb[0].mxu0
  %v1102 = vadd.f32 0.0, %v1101
  %v1103 = vpop.f32.mrb[0].mxu0
  %1104 = vmatprep.mubr.bf16.mxu0 %v749
  %1105 = vmatmul.mubr.bf16.gmra.mrb[0].mxu0 %v513
  %v1106 = vpop.f32.mrb[0].mxu0
  %v1107 = vadd.f32 0.0, %v1106
  %v1108 = vpop.f32.mrb[0].mxu0
  %v1109 = vpop.f32.mrb[0].mxu0
  %v1110 = vadd.f32 0.0, %v1109
  %v1111 = vpop.f32.mrb[0].mxu0
  %1112 = vmatprep.mubr.bf16.mxu0 %v752
  %1113 = vmatmul.mubr.bf16.gmra.mrb[0].mxu0 %v515
  %v1114 = vpop.f32.mrb[0].mxu0
  %v1115 = vadd.f32 0.0, %v1114
  %v1116 = vpop.f32.mrb[0].mxu0
  %v1117 = vpop.f32.mrb[0].mxu0
  %v1118 = vadd.f32 0.0, %v1117
  %v1119 = vpop.f32.mrb[0].mxu0
  %1120 = vmatprep.mubr.bf16.mxu0 %v755
  %1121 = vmatmul.mubr.bf16.gmra.mrb[0].mxu0 %v517
  %v1122 = vpop.f32.mrb[0].mxu0
  %v1123 = vadd.f32 0.0, %v1122
  %v1124 = vpop.f32.mrb[0].mxu0
  %v1125 = vpop.f32.mrb[0].mxu0
  %v1126 = vadd.f32 0.0, %v1125
  %v1127 = vpop.f32.mrb[0].mxu0
  %1128 = vmatprep.mubr.bf16.mxu0 %v758
  %1129 = vmatmul.mubr.bf16.gmra.mrb[0].mxu0 %v519
  %v1130 = vpop.f32.mrb[0].mxu0
  %v1131 = vadd.f32 0.0, %v1130
  %v1132 = vpop.f32.mrb[0].mxu0
  %v1133 = vpop.f32.mrb[0].mxu0
  %v1134 = vadd.f32 0.0, %v1133
  %v1135 = vpop.f32.mrb[0].mxu0
  %1136 = vmatprep.mubr.bf16.mxu0 %v761
  %1137 = vmatmul.mubr.bf16.gmra.mrb[0].mxu0 %v521
  %v1138 = vpop.f32.mrb[0].mxu0
  %v1139 = vadd.f32 0.0, %v1138
  %v1140 = vpop.f32.mrb[0].mxu0
  %v1141 = vpop.f32.mrb[0].mxu0
  %v1142 = vadd.f32 0.0, %v1141
  %v1143 = vpop.f32.mrb[0].mxu0
  %1144 = vmatprep.mubr.bf16.mxu0 %v764
  %1145 = vmatmul.mubr.bf16.gmra.mrb[0].mxu0 %v523
  %v1146 = vpop.f32.mrb[0].mxu0
  %v1147 = vadd.f32 0.0, %v1146
  %v1148 = vpop.f32.mrb[0].mxu0
  %v1149 = vpop.f32.mrb[0].mxu0
  %v1150 = vadd.f32 0.0, %v1149
  %v1151 = vpop.f32.mrb[0].mxu0
  %1152 = vmatprep.mubr.bf16.mxu0 %v767
  %1153 = vmatmul.mubr.bf16.gmra.mrb[0].mxu0 %v525
  %v1154 = vpop.f32.mrb[0].mxu0
  %v1155 = vadd.f32 0.0, %v1154
  %v1156 = vpop.f32.mrb[0].mxu0
  %v1157 = vpop.f32.mrb[0].mxu0
  %v1158 = vadd.f32 0.0, %v1157
  %v1159 = vpop.f32.mrb[0].mxu0
  %1160 = vmatprep.mubr.bf16.mxu0 %v770
  %1161 = vmatmul.mubr.bf16.gmra.mrb[0].mxu0 %v527
  %v1162 = vpop.f32.mrb[0].mxu0
  %v1163 = vadd.f32 0.0, %v1162
  %v1164 = vpop.f32.mrb[0].mxu0
  %v1165 = vpop.f32.mrb[0].mxu0
  %v1166 = vadd.f32 0.0, %v1165
  %v1167 = vpop.f32.mrb[0].mxu0
  %1168 = vmatprep.mubr.bf16.mxu0 %v773
  %1169 = vmatmul.mubr.bf16.gmra.mrb[0].mxu0 %v529
  %v1170 = vpop.f32.mrb[0].mxu0
  %v1171 = vadd.f32 0.0, %v1170
  %v1172 = vpop.f32.mrb[0].mxu0
  %v1173 = vpop.f32.mrb[0].mxu0
  %v1174 = vadd.f32 0.0, %v1173
  %v1175 = vpop.f32.mrb[0].mxu0
  %1176 = vmatprep.mubr.bf16.mxu0 %v776
  %1177 = vmatmul.mubr.bf16.gmra.mrb[0].mxu0 %v531
  %v1178 = vpop.f32.mrb[0].mxu0
  %v1179 = vadd.f32 0.0, %v1178
  %v1180 = vpop.f32.mrb[0].mxu0
  %v1181 = vpop.f32.mrb[0].mxu0
  %v1182 = vadd.f32 0.0, %v1181
  %v1183 = vpop.f32.mrb[0].mxu0
  %1184 = vmatprep.mubr.bf16.mxu0 %v779
  %1185 = vmatmul.mubr.bf16.gmra.mrb[0].mxu0 %v533
  %v1186 = vpop.f32.mrb[0].mxu0
  %v1187 = vadd.f32 0.0, %v1186
  %v1188 = vpop.f32.mrb[0].mxu0
  %v1189 = vpop.f32.mrb[0].mxu0
  %v1190 = vadd.f32 0.0, %v1189
  %v1191 = vpop.f32.mrb[0].mxu0
  %1192 = vmatprep.mubr.bf16.mxu0 %v782
  %1193 = vmatmul.mubr.bf16.gmra.mrb[0].mxu0 %v535
  %v1194 = vpop.f32.mrb[0].mxu0
  %v1195 = vadd.f32 0.0, %v1194
  %v1196 = vpop.f32.mrb[0].mxu0
  %v1197 = vpop.f32.mrb[0].mxu0
  %v1198 = vadd.f32 0.0, %v1197
  %v1199 = vpop.f32.mrb[0].mxu0
  %1200 = vdwg.mxu0
  %s1201 = scalar_lea.vmem %s1, 72
  %v1202 = vld [vmem:[%s1201] sm:$0xf]
  %v1203 = vld [vmem:[%s1201 + $0x4] sm:$0xf]
  %v1204 = vld [vmem:[%s1201 + $0x8] sm:$0xf]
  %v1205 = vld [vmem:[%s1201 + $0xc] sm:$0xf]
  %v1206 = vld [vmem:[%s1201 + $0x10] sm:$0xf]
  %v1207 = vld [vmem:[%s1201 + $0x14] sm:$0xf]
  %v1208 = vld [vmem:[%s1201 + $0x18] sm:$0xf]
  %v1209 = vld [vmem:[%s1201 + $0x1c] sm:$0xf]
  %v1210 = vld [vmem:[%s1201 + $0x20] sm:$0xf]
  %v1211 = vld [vmem:[%s1201 + $0x24] sm:$0xf]
  %v1212 = vld [vmem:[%s1201 + $0x28] sm:$0xf]
  %v1213 = vld [vmem:[%s1201 + $0x2c] sm:$0xf]
  %v1214 = vld [vmem:[%s1201 + $0x30] sm:$0xf]
  %v1215 = vld [vmem:[%s1201 + $0x34] sm:$0xf]
  %v1216 = vld [vmem:[%s1201 + $0x38] sm:$0xf]
  %v1217 = vld [vmem:[%s1201 + $0x3c] sm:$0xf]
  %v1218 = vld [vmem:[%s1201 + $0x40] sm:$0xf]
  %v1219 = vld [vmem:[%s1201 + $0x44] sm:$0xf]
  %v1238 = vunpack.c.l.b16 %v1202
  %v1239 = vunpack.c.l.b16 %v1203
  %v1240 = vunpack.c.l.b16 %v1204
  %v1241 = vunpack.c.l.b16 %v1205
  %v1242 = vunpack.c.l.b16 %v1206
  %v1243 = vunpack.c.l.b16 %v1207
  %v1244 = vunpack.c.l.b16 %v1208
  %v1245 = vunpack.c.l.b16 %v1209
  %v1246 = vunpack.c.l.b16 %v1210
  %v1247 = vunpack.c.l.b16 %v1211
  %v1248 = vunpack.c.l.b16 %v1212
  %v1249 = vunpack.c.l.b16 %v1213
  %v1250 = vunpack.c.l.b16 %v1214
  %v1251 = vunpack.c.l.b16 %v1215
  %v1252 = vunpack.c.l.b16 %v1216
  %v1253 = vunpack.c.l.b16 %v1217
  %v1254 = vunpack.c.l.b16 %v1218
  %v1255 = vunpack.c.l.b16 %v1219
  %v1256 = vpack.c.b16 %v1239, %v1238
  %v1257 = vpack.c.b16 %v1241, %v1240
  %v1258 = vpack.c.b16 %v1243, %v1242
  %v1259 = vpack.c.b16 %v1245, %v1244
  %v1260 = vpack.c.b16 %v1247, %v1246
  %v1261 = vpack.c.b16 %v1249, %v1248
  %v1262 = vpack.c.b16 %v1251, %v1250
  %v1263 = vpack.c.b16 %v1253, %v1252
  %v1264 = vpack.c.b16 %v1255, %v1254
  %1274 = vmatprep.subr.bf16.mxu0 0
  %1275 = vmatpush1.bf16.msra.mxu0 %v1256
  %1276 = vmatprep.subr.bf16.mxu0 0
  %1277 = vmatpush1.bf16.msra.mxu0 %v1257
  %1278 = vmatprep.subr.bf16.mxu0 0
  %1279 = vmatpush1.bf16.msra.mxu0 %v1258
  %1280 = vmatprep.subr.bf16.mxu0 0
  %1281 = vmatpush1.bf16.msra.mxu0 %v1259
  %1282 = vmatprep.subr.bf16.mxu0 0
  %1283 = vmatpush1.bf16.msra.mxu0 %v1260
  %1284 = vmatprep.subr.bf16.mxu0 0
  %1285 = vmatpush1.bf16.msra.mxu0 %v1261
  %1286 = vmatprep.subr.bf16.mxu0 0
  %1287 = vmatpush1.bf16.msra.mxu0 %v1262
  %1288 = vmatprep.subr.bf16.mxu0 0
  %1289 = vmatpush1.bf16.msra.mxu0 %v1263
  %1290 = vmatprep.subr.bf16.mxu0 0
  %1291 = vmatpush1.bf16.msra.mxu0 %v1264
  %1292 = vmatprep.subr.bf16.mxu0 0
  %1293 = vmatpush1.bf16.msra.mxu0 0
  %1294 = vmatprep.subr.bf16.mxu0 0
  %1295 = vmatpush1.bf16.msra.mxu0 0
  %1296 = vmatprep.subr.bf16.mxu0 0
  %1297 = vmatpush1.bf16.msra.mxu0 0
  %1298 = vmatprep.subr.bf16.mxu0 0
  %1299 = vmatpush1.bf16.msra.mxu0 0
  %1300 = vmatprep.subr.bf16.mxu0 0
  %1301 = vmatpush1.bf16.msra.mxu0 0
  %1302 = vmatprep.subr.bf16.mxu0 0
  %1303 = vmatpush1.bf16.msra.mxu0 0
  %1304 = vmatprep.subr.bf16.mxu0 0
  %1305 = vmatpush1.bf16.msra.mxu0 0
  %1306 = vmatprep.mubr.bf16.mxu0 %v641
  %1307 = vmatmul.mubr.bf16.gmra.mrb[0].mxu0 %v441
  %v1308 = vpop.f32.mrb[0].mxu0
  %v1309 = vadd.f32 0.0, %v1308
  %v1310 = vpop.f32.mrb[0].mxu0
  %v1311 = vpop.f32.mrb[0].mxu0
  %v1312 = vadd.f32 0.0, %v1311
  %v1313 = vpop.f32.mrb[0].mxu0
  %1314 = vmatprep.mubr.bf16.mxu0 %v644
  %1315 = vmatmul.mubr.bf16.gmra.mrb[0].mxu0 %v443
  %v1316 = vpop.f32.mrb[0].mxu0
  %v1317 = vadd.f32 0.0, %v1316
  %v1318 = vpop.f32.mrb[0].mxu0
  %v1319 = vpop.f32.mrb[0].mxu0
  %v1320 = vadd.f32 0.0, %v1319
  %v1321 = vpop.f32.mrb[0].mxu0
  %1322 = vmatprep.mubr.bf16.mxu0 %v647
  %1323 = vmatmul.mubr.bf16.gmra.mrb[0].mxu0 %v445
  %v1324 = vpop.f32.mrb[0].mxu0
  %v1325 = vadd.f32 0.0, %v1324
  %v1326 = vpop.f32.mrb[0].mxu0
  %v1327 = vpop.f32.mrb[0].mxu0
  %v1328 = vadd.f32 0.0, %v1327
  %v1329 = vpop.f32.mrb[0].mxu0
  %1330 = vmatprep.mubr.bf16.mxu0 %v650
  %1331 = vmatmul.mubr.bf16.gmra.mrb[0].mxu0 %v447
  %v1332 = vpop.f32.mrb[0].mxu0
  %v1333 = vadd.f32 0.0, %v1332
  %v1334 = vpop.f32.mrb[0].mxu0
  %v1335 = vpop.f32.mrb[0].mxu0
  %v1336 = vadd.f32 0.0, %v1335
  %v1337 = vpop.f32.mrb[0].mxu0
  %1338 = vmatprep.mubr.bf16.mxu0 %v653
  %1339 = vmatmul.mubr.bf16.gmra.mrb[0].mxu0 %v449
  %v1340 = vpop.f32.mrb[0].mxu0
  %v1341 = vadd.f32 0.0, %v1340
  %v1342 = vpop.f32.mrb[0].mxu0
  %v1343 = vpop.f32.mrb[0].mxu0
  %v1344 = vadd.f32 0.0, %v1343
  %v1345 = vpop.f32.mrb[0].mxu0
  %1346 = vmatprep.mubr.bf16.mxu0 %v656
  %1347 = vmatmul.mubr.bf16.gmra.mrb[0].mxu0 %v451
  %v1348 = vpop.f32.mrb[0].mxu0
  %v1349 = vadd.f32 0.0, %v1348
  %v1350 = vpop.f32.mrb[0].mxu0
  %v1351 = vpop.f32.mrb[0].mxu0
  %v1352 = vadd.f32 0.0, %v1351
  %v1353 = vpop.f32.mrb[0].mxu0
  %1354 = vmatprep.mubr.bf16.mxu0 %v659
  %1355 = vmatmul.mubr.bf16.gmra.mrb[0].mxu0 %v453
  %v1356 = vpop.f32.mrb[0].mxu0
  %v1357 = vadd.f32 0.0, %v1356
  %v1358 = vpop.f32.mrb[0].mxu0
  %v1359 = vpop.f32.mrb[0].mxu0
  %v1360 = vadd.f32 0.0, %v1359
  %v1361 = vpop.f32.mrb[0].mxu0
  %1362 = vmatprep.mubr.bf16.mxu0 %v662
  %1363 = vmatmul.mubr.bf16.gmra.mrb[0].mxu0 %v455
  %v1364 = vpop.f32.mrb[0].mxu0
  %v1365 = vadd.f32 0.0, %v1364
  %v1366 = vpop.f32.mrb[0].mxu0
  %v1367 = vpop.f32.mrb[0].mxu0
  %v1368 = vadd.f32 0.0, %v1367
  %v1369 = vpop.f32.mrb[0].mxu0
  %1370 = vmatprep.mubr.bf16.mxu0 %v665
  %1371 = vmatmul.mubr.bf16.gmra.mrb[0].mxu0 %v457
  %v1372 = vpop.f32.mrb[0].mxu0
  %v1373 = vadd.f32 0.0, %v1372
  %v1374 = vpop.f32.mrb[0].mxu0
  %v1375 = vpop.f32.mrb[0].mxu0
  %v1376 = vadd.f32 0.0, %v1375
  %v1377 = vpop.f32.mrb[0].mxu0
  %1378 = vmatprep.mubr.bf16.mxu0 %v668
  %1379 = vmatmul.mubr.bf16.gmra.mrb[0].mxu0 %v459
  %v1380 = vpop.f32.mrb[0].mxu0
  %v1381 = vadd.f32 0.0, %v1380
  %v1382 = vpop.f32.mrb[0].mxu0
  %v1383 = vpop.f32.mrb[0].mxu0
  %v1384 = vadd.f32 0.0, %v1383
  %v1385 = vpop.f32.mrb[0].mxu0
  %1386 = vmatprep.mubr.bf16.mxu0 %v671
  %1387 = vmatmul.mubr.bf16.gmra.mrb[0].mxu0 %v461
  %v1388 = vpop.f32.mrb[0].mxu0
  %v1389 = vadd.f32 0.0, %v1388
  %v1390 = vpop.f32.mrb[0].mxu0
  %v1391 = vpop.f32.mrb[0].mxu0
  %v1392 = vadd.f32 0.0, %v1391
  %v1393 = vpop.f32.mrb[0].mxu0
  %1394 = vmatprep.mubr.bf16.mxu0 %v674
  %1395 = vmatmul.mubr.bf16.gmra.mrb[0].mxu0 %v463
  %v1396 = vpop.f32.mrb[0].mxu0
  %v1397 = vadd.f32 0.0, %v1396
  %v1398 = vpop.f32.mrb[0].mxu0
  %v1399 = vpop.f32.mrb[0].mxu0
  %v1400 = vadd.f32 0.0, %v1399
  %v1401 = vpop.f32.mrb[0].mxu0
  %1402 = vmatprep.mubr.bf16.mxu0 %v677
  %1403 = vmatmul.mubr.bf16.gmra.mrb[0].mxu0 %v465
  %v1404 = vpop.f32.mrb[0].mxu0
  %v1405 = vadd.f32 0.0, %v1404
  %v1406 = vpop.f32.mrb[0].mxu0
  %v1407 = vpop.f32.mrb[0].mxu0
  %v1408 = vadd.f32 0.0, %v1407
  %v1409 = vpop.f32.mrb[0].mxu0
  %1410 = vmatprep.mubr.bf16.mxu0 %v680
  %1411 = vmatmul.mubr.bf16.gmra.mrb[0].mxu0 %v467
  %v1412 = vpop.f32.mrb[0].mxu0
  %v1413 = vadd.f32 0.0, %v1412
  %v1414 = vpop.f32.mrb[0].mxu0
  %v1415 = vpop.f32.mrb[0].mxu0
  %v1416 = vadd.f32 0.0, %v1415
  %v1417 = vpop.f32.mrb[0].mxu0
  %1418 = vmatprep.mubr.bf16.mxu0 %v683
  %1419 = vmatmul.mubr.bf16.gmra.mrb[0].mxu0 %v469
  %v1420 = vpop.f32.mrb[0].mxu0
  %v1421 = vadd.f32 0.0, %v1420
  %v1422 = vpop.f32.mrb[0].mxu0
  %v1423 = vpop.f32.mrb[0].mxu0
  %v1424 = vadd.f32 0.0, %v1423
  %v1425 = vpop.f32.mrb[0].mxu0
  %1426 = vmatprep.mubr.bf16.mxu0 %v686
  %1427 = vmatmul.mubr.bf16.gmra.mrb[0].mxu0 %v471
  %v1428 = vpop.f32.mrb[0].mxu0
  %v1429 = vadd.f32 0.0, %v1428
  %v1430 = vpop.f32.mrb[0].mxu0
  %v1431 = vpop.f32.mrb[0].mxu0
  %v1432 = vadd.f32 0.0, %v1431
  %v1433 = vpop.f32.mrb[0].mxu0
  %1434 = vmatprep.mubr.bf16.mxu0 %v689
  %1435 = vmatmul.mubr.bf16.gmra.mrb[0].mxu0 %v473
  %v1436 = vpop.f32.mrb[0].mxu0
  %v1437 = vadd.f32 0.0, %v1436
  %v1438 = vpop.f32.mrb[0].mxu0
  %v1439 = vpop.f32.mrb[0].mxu0
  %v1440 = vadd.f32 0.0, %v1439
  %v1441 = vpop.f32.mrb[0].mxu0
  %1442 = vmatprep.mubr.bf16.mxu0 %v692
  %1443 = vmatmul.mubr.bf16.gmra.mrb[0].mxu0 %v475
  %v1444 = vpop.f32.mrb[0].mxu0
  %v1445 = vadd.f32 0.0, %v1444
  %v1446 = vpop.f32.mrb[0].mxu0
  %v1447 = vpop.f32.mrb[0].mxu0
  %v1448 = vadd.f32 0.0, %v1447
  %v1449 = vpop.f32.mrb[0].mxu0
  %1450 = vmatprep.mubr.bf16.mxu0 %v695
  %1451 = vmatmul.mubr.bf16.gmra.mrb[0].mxu0 %v477
  %v1452 = vpop.f32.mrb[0].mxu0
  %v1453 = vadd.f32 0.0, %v1452
  %v1454 = vpop.f32.mrb[0].mxu0
  %v1455 = vpop.f32.mrb[0].mxu0
  %v1456 = vadd.f32 0.0, %v1455
  %v1457 = vpop.f32.mrb[0].mxu0
  %1458 = vmatprep.mubr.bf16.mxu0 %v698
  %1459 = vmatmul.mubr.bf16.gmra.mrb[0].mxu0 %v479
  %v1460 = vpop.f32.mrb[0].mxu0
  %v1461 = vadd.f32 0.0, %v1460
  %v1462 = vpop.f32.mrb[0].mxu0
  %v1463 = vpop.f32.mrb[0].mxu0
  %v1464 = vadd.f32 0.0, %v1463
  %v1465 = vpop.f32.mrb[0].mxu0
  %1466 = vmatprep.mubr.bf16.mxu0 %v701
  %1467 = vmatmul.mubr.bf16.gmra.mrb[0].mxu0 %v481
  %v1468 = vpop.f32.mrb[0].mxu0
  %v1469 = vadd.f32 0.0, %v1468
  %v1470 = vpop.f32.mrb[0].mxu0
  %v1471 = vpop.f32.mrb[0].mxu0
  %v1472 = vadd.f32 0.0, %v1471
  %v1473 = vpop.f32.mrb[0].mxu0
  %1474 = vmatprep.mubr.bf16.mxu0 %v704
  %1475 = vmatmul.mubr.bf16.gmra.mrb[0].mxu0 %v483
  %v1476 = vpop.f32.mrb[0].mxu0
  %v1477 = vadd.f32 0.0, %v1476
  %v1478 = vpop.f32.mrb[0].mxu0
  %v1479 = vpop.f32.mrb[0].mxu0
  %v1480 = vadd.f32 0.0, %v1479
  %v1481 = vpop.f32.mrb[0].mxu0
  %1482 = vmatprep.mubr.bf16.mxu0 %v707
  %1483 = vmatmul.mubr.bf16.gmra.mrb[0].mxu0 %v485
  %v1484 = vpop.f32.mrb[0].mxu0
  %v1485 = vadd.f32 0.0, %v1484
  %v1486 = vpop.f32.mrb[0].mxu0
  %v1487 = vpop.f32.mrb[0].mxu0
  %v1488 = vadd.f32 0.0, %v1487
  %v1489 = vpop.f32.mrb[0].mxu0
  %1490 = vmatprep.mubr.bf16.mxu0 %v710
  %1491 = vmatmul.mubr.bf16.gmra.mrb[0].mxu0 %v487
  %v1492 = vpop.f32.mrb[0].mxu0
  %v1493 = vadd.f32 0.0, %v1492
  %v1494 = vpop.f32.mrb[0].mxu0
  %v1495 = vpop.f32.mrb[0].mxu0
  %v1496 = vadd.f32 0.0, %v1495
  %v1497 = vpop.f32.mrb[0].mxu0
  %1498 = vmatprep.mubr.bf16.mxu0 %v713
  %1499 = vmatmul.mubr.bf16.gmra.mrb[0].mxu0 %v489
  %v1500 = vpop.f32.mrb[0].mxu0
  %v1501 = vadd.f32 0.0, %v1500
  %v1502 = vpop.f32.mrb[0].mxu0
  %v1503 = vpop.f32.mrb[0].mxu0
  %v1504 = vadd.f32 0.0, %v1503
  %v1505 = vpop.f32.mrb[0].mxu0
  %1506 = vmatprep.mubr.bf16.mxu0 %v716
  %1507 = vmatmul.mubr.bf16.gmra.mrb[0].mxu0 %v491
  %v1508 = vpop.f32.mrb[0].mxu0
  %v1509 = vadd.f32 0.0, %v1508
  %v1510 = vpop.f32.mrb[0].mxu0
  %v1511 = vpop.f32.mrb[0].mxu0
  %v1512 = vadd.f32 0.0, %v1511
  %v1513 = vpop.f32.mrb[0].mxu0
  %1514 = vmatprep.mubr.bf16.mxu0 %v719
  %1515 = vmatmul.mubr.bf16.gmra.mrb[0].mxu0 %v493
  %v1516 = vpop.f32.mrb[0].mxu0
  %v1517 = vadd.f32 0.0, %v1516
  %v1518 = vpop.f32.mrb[0].mxu0
  %v1519 = vpop.f32.mrb[0].mxu0
  %v1520 = vadd.f32 0.0, %v1519
  %v1521 = vpop.f32.mrb[0].mxu0
  %1522 = vmatprep.mubr.bf16.mxu0 %v722
  %1523 = vmatmul.mubr.bf16.gmra.mrb[0].mxu0 %v495
  %v1524 = vpop.f32.mrb[0].mxu0
  %v1525 = vadd.f32 0.0, %v1524
  %v1526 = vpop.f32.mrb[0].mxu0
  %v1527 = vpop.f32.mrb[0].mxu0
  %v1528 = vadd.f32 0.0, %v1527
  %v1529 = vpop.f32.mrb[0].mxu0
  %1530 = vmatprep.mubr.bf16.mxu0 %v725
  %1531 = vmatmul.mubr.bf16.gmra.mrb[0].mxu0 %v497
  %v1532 = vpop.f32.mrb[0].mxu0
  %v1533 = vadd.f32 0.0, %v1532
  %v1534 = vpop.f32.mrb[0].mxu0
  %v1535 = vpop.f32.mrb[0].mxu0
  %v1536 = vadd.f32 0.0, %v1535
  %v1537 = vpop.f32.mrb[0].mxu0
  %1538 = vmatprep.mubr.bf16.mxu0 %v728
  %1539 = vmatmul.mubr.bf16.gmra.mrb[0].mxu0 %v499
  %v1540 = vpop.f32.mrb[0].mxu0
  %v1541 = vadd.f32 0.0, %v1540
  %v1542 = vpop.f32.mrb[0].mxu0
  %v1543 = vpop.f32.mrb[0].mxu0
  %v1544 = vadd.f32 0.0, %v1543
  %v1545 = vpop.f32.mrb[0].mxu0
  %1546 = vmatprep.mubr.bf16.mxu0 %v731
  %1547 = vmatmul.mubr.bf16.gmra.mrb[0].mxu0 %v501
  %v1548 = vpop.f32.mrb[0].mxu0
  %v1549 = vadd.f32 0.0, %v1548
  %v1550 = vpop.f32.mrb[0].mxu0
  %v1551 = vpop.f32.mrb[0].mxu0
  %v1552 = vadd.f32 0.0, %v1551
  %v1553 = vpop.f32.mrb[0].mxu0
  %1554 = vmatprep.mubr.bf16.mxu0 %v734
  %1555 = vmatmul.mubr.bf16.gmra.mrb[0].mxu0 %v503
  %v1556 = vpop.f32.mrb[0].mxu0
  %v1557 = vadd.f32 0.0, %v1556
  %v1558 = vpop.f32.mrb[0].mxu0
  %v1559 = vpop.f32.mrb[0].mxu0
  %v1560 = vadd.f32 0.0, %v1559
  %v1561 = vpop.f32.mrb[0].mxu0
  %1562 = vmatprep.mubr.bf16.mxu0 %v737
  %1563 = vmatmul.mubr.bf16.gmra.mrb[0].mxu0 %v505
  %v1564 = vpop.f32.mrb[0].mxu0
  %v1565 = vadd.f32 0.0, %v1564
  %v1566 = vpop.f32.mrb[0].mxu0
  %v1567 = vpop.f32.mrb[0].mxu0
  %v1568 = vadd.f32 0.0, %v1567
  %v1569 = vpop.f32.mrb[0].mxu0
  %1570 = vmatprep.mubr.bf16.mxu0 %v740
  %1571 = vmatmul.mubr.bf16.gmra.mrb[0].mxu0 %v507
  %v1572 = vpop.f32.mrb[0].mxu0
  %v1573 = vadd.f32 0.0, %v1572
  %v1574 = vpop.f32.mrb[0].mxu0
  %v1575 = vpop.f32.mrb[0].mxu0
  %v1576 = vadd.f32 0.0, %v1575
  %v1577 = vpop.f32.mrb[0].mxu0
  %1578 = vmatprep.mubr.bf16.mxu0 %v743
  %1579 = vmatmul.mubr.bf16.gmra.mrb[0].mxu0 %v509
  %v1580 = vpop.f32.mrb[0].mxu0
  %v1581 = vadd.f32 0.0, %v1580
  %v1582 = vpop.f32.mrb[0].mxu0
  %v1583 = vpop.f32.mrb[0].mxu0
  %v1584 = vadd.f32 0.0, %v1583
  %v1585 = vpop.f32.mrb[0].mxu0
  %1586 = vmatprep.mubr.bf16.mxu0 %v746
  %1587 = vmatmul.mubr.bf16.gmra.mrb[0].mxu0 %v511
  %v1588 = vpop.f32.mrb[0].mxu0
  %v1589 = vadd.f32 0.0, %v1588
  %v1590 = vpop.f32.mrb[0].mxu0
  %v1591 = vpop.f32.mrb[0].mxu0
  %v1592 = vadd.f32 0.0, %v1591
  %v1593 = vpop.f32.mrb[0].mxu0
  %1594 = vmatprep.mubr.bf16.mxu0 %v749
  %1595 = vmatmul.mubr.bf16.gmra.mrb[0].mxu0 %v513
  %v1596 = vpop.f32.mrb[0].mxu0
  %v1597 = vadd.f32 0.0, %v1596
  %v1598 = vpop.f32.mrb[0].mxu0
  %v1599 = vpop.f32.mrb[0].mxu0
  %v1600 = vadd.f32 0.0, %v1599
  %v1601 = vpop.f32.mrb[0].mxu0
  %1602 = vmatprep.mubr.bf16.mxu0 %v752
  %1603 = vmatmul.mubr.bf16.gmra.mrb[0].mxu0 %v515
  %v1604 = vpop.f32.mrb[0].mxu0
  %v1605 = vadd.f32 0.0, %v1604
  %v1606 = vpop.f32.mrb[0].mxu0
  %v1607 = vpop.f32.mrb[0].mxu0
  %v1608 = vadd.f32 0.0, %v1607
  %v1609 = vpop.f32.mrb[0].mxu0
  %1610 = vmatprep.mubr.bf16.mxu0 %v755
  %1611 = vmatmul.mubr.bf16.gmra.mrb[0].mxu0 %v517
  %v1612 = vpop.f32.mrb[0].mxu0
  %v1613 = vadd.f32 0.0, %v1612
  %v1614 = vpop.f32.mrb[0].mxu0
  %v1615 = vpop.f32.mrb[0].mxu0
  %v1616 = vadd.f32 0.0, %v1615
  %v1617 = vpop.f32.mrb[0].mxu0
  %1618 = vmatprep.mubr.bf16.mxu0 %v758
  %1619 = vmatmul.mubr.bf16.gmra.mrb[0].mxu0 %v519
  %v1620 = vpop.f32.mrb[0].mxu0
  %v1621 = vadd.f32 0.0, %v1620
  %v1622 = vpop.f32.mrb[0].mxu0
  %v1623 = vpop.f32.mrb[0].mxu0
  %v1624 = vadd.f32 0.0, %v1623
  %v1625 = vpop.f32.mrb[0].mxu0
  %1626 = vmatprep.mubr.bf16.mxu0 %v761
  %1627 = vmatmul.mubr.bf16.gmra.mrb[0].mxu0 %v521
  %v1628 = vpop.f32.mrb[0].mxu0
  %v1629 = vadd.f32 0.0, %v1628
  %v1630 = vpop.f32.mrb[0].mxu0
  %v1631 = vpop.f32.mrb[0].mxu0
  %v1632 = vadd.f32 0.0, %v1631
  %v1633 = vpop.f32.mrb[0].mxu0
  %1634 = vmatprep.mubr.bf16.mxu0 %v764
  %1635 = vmatmul.mubr.bf16.gmra.mrb[0].mxu0 %v523
  %v1636 = vpop.f32.mrb[0].mxu0
  %v1637 = vadd.f32 0.0, %v1636
  %v1638 = vpop.f32.mrb[0].mxu0
  %v1639 = vpop.f32.mrb[0].mxu0
  %v1640 = vadd.f32 0.0, %v1639
  %v1641 = vpop.f32.mrb[0].mxu0
  %1642 = vmatprep.mubr.bf16.mxu0 %v767
  %1643 = vmatmul.mubr.bf16.gmra.mrb[0].mxu0 %v525
  %v1644 = vpop.f32.mrb[0].mxu0
  %v1645 = vadd.f32 0.0, %v1644
  %v1646 = vpop.f32.mrb[0].mxu0
  %v1647 = vpop.f32.mrb[0].mxu0
  %v1648 = vadd.f32 0.0, %v1647
  %v1649 = vpop.f32.mrb[0].mxu0
  %1650 = vmatprep.mubr.bf16.mxu0 %v770
  %1651 = vmatmul.mubr.bf16.gmra.mrb[0].mxu0 %v527
  %v1652 = vpop.f32.mrb[0].mxu0
  %v1653 = vadd.f32 0.0, %v1652
  %v1654 = vpop.f32.mrb[0].mxu0
  %v1655 = vpop.f32.mrb[0].mxu0
  %v1656 = vadd.f32 0.0, %v1655
  %v1657 = vpop.f32.mrb[0].mxu0
  %1658 = vmatprep.mubr.bf16.mxu0 %v773
  %1659 = vmatmul.mubr.bf16.gmra.mrb[0].mxu0 %v529
  %v1660 = vpop.f32.mrb[0].mxu0
  %v1661 = vadd.f32 0.0, %v1660
  %v1662 = vpop.f32.mrb[0].mxu0
  %v1663 = vpop.f32.mrb[0].mxu0
  %v1664 = vadd.f32 0.0, %v1663
  %v1665 = vpop.f32.mrb[0].mxu0
  %1666 = vmatprep.mubr.bf16.mxu0 %v776
  %1667 = vmatmul.mubr.bf16.gmra.mrb[0].mxu0 %v531
  %v1668 = vpop.f32.mrb[0].mxu0
  %v1669 = vadd.f32 0.0, %v1668
  %v1670 = vpop.f32.mrb[0].mxu0
  %v1671 = vpop.f32.mrb[0].mxu0
  %v1672 = vadd.f32 0.0, %v1671
  %v1673 = vpop.f32.mrb[0].mxu0
  %1674 = vmatprep.mubr.bf16.mxu0 %v779
  %1675 = vmatmul.mubr.bf16.gmra.mrb[0].mxu0 %v533
  %v1676 = vpop.f32.mrb[0].mxu0
  %v1677 = vadd.f32 0.0, %v1676
  %v1678 = vpop.f32.mrb[0].mxu0
  %v1679 = vpop.f32.mrb[0].mxu0
  %v1680 = vadd.f32 0.0, %v1679
  %v1681 = vpop.f32.mrb[0].mxu0
  %1682 = vmatprep.mubr.bf16.mxu0 %v782
  %1683 = vmatmul.mubr.bf16.gmra.mrb[0].mxu0 %v535
  %v1684 = vpop.f32.mrb[0].mxu0
  %v1685 = vadd.f32 0.0, %v1684
  %v1686 = vpop.f32.mrb[0].mxu0
  %v1687 = vpop.f32.mrb[0].mxu0
  %v1688 = vadd.f32 0.0, %v1687
  %v1689 = vpop.f32.mrb[0].mxu0
  %1690 = vdwg.mxu0
  %v1691 = vmax.f32 %v819, %v1309
  %v1692 = vmax.f32 %v822, %v1312
  %v1693 = vmax.f32 %v827, %v1317
  %v1694 = vmax.f32 %v830, %v1320
  %v1695 = vmax.f32 %v835, %v1325
  %v1696 = vmax.f32 %v838, %v1328
  %v1697 = vmax.f32 %v843, %v1333
  %v1698 = vmax.f32 %v846, %v1336
  %v1699 = vmax.f32 %v851, %v1341
  %v1700 = vmax.f32 %v854, %v1344
  %v1701 = vmax.f32 %v859, %v1349
  %v1702 = vmax.f32 %v862, %v1352
  %v1703 = vmax.f32 %v867, %v1357
  %v1704 = vmax.f32 %v870, %v1360
  %v1705 = vmax.f32 %v875, %v1365
  %v1706 = vmax.f32 %v878, %v1368
  %v1707 = vmax.f32 %v883, %v1373
  %v1708 = vmax.f32 %v886, %v1376
  %v1709 = vmax.f32 %v891, %v1381
  %v1710 = vmax.f32 %v894, %v1384
  %v1711 = vmax.f32 %v899, %v1389
  %v1712 = vmax.f32 %v902, %v1392
  %v1713 = vmax.f32 %v907, %v1397
  %v1714 = vmax.f32 %v910, %v1400
  %v1715 = vmax.f32 %v915, %v1405
  %v1716 = vmax.f32 %v918, %v1408
  %v1717 = vmax.f32 %v923, %v1413
  %v1718 = vmax.f32 %v926, %v1416
  %v1719 = vmax.f32 %v931, %v1421
  %v1720 = vmax.f32 %v934, %v1424
  %v1721 = vmax.f32 %v939, %v1429
  %v1722 = vmax.f32 %v942, %v1432
  %v1723 = vmax.f32 %v947, %v1437
  %v1724 = vmax.f32 %v950, %v1440
  %v1725 = vmax.f32 %v955, %v1445
  %v1726 = vmax.f32 %v958, %v1448
  %v1727 = vmax.f32 %v963, %v1453
  %v1728 = vmax.f32 %v966, %v1456
  %v1729 = vmax.f32 %v971, %v1461
  %v1730 = vmax.f32 %v974, %v1464
  %v1731 = vmax.f32 %v979, %v1469
  %v1732 = vmax.f32 %v982, %v1472
  %v1733 = vmax.f32 %v987, %v1477
  %v1734 = vmax.f32 %v990, %v1480
  %v1735 = vmax.f32 %v995, %v1485
  %v1736 = vmax.f32 %v998, %v1488
  %v1737 = vmax.f32 %v1003, %v1493
  %v1738 = vmax.f32 %v1006, %v1496
  %v1739 = vmax.f32 %v1691, %v1715
  %v1740 = vmax.f32 %v1692, %v1716
  %v1741 = vmax.f32 %v1693, %v1717
  %v1742 = vmax.f32 %v1694, %v1718
  %v1743 = vmax.f32 %v1695, %v1719
  %v1744 = vmax.f32 %v1696, %v1720
  %v1745 = vmax.f32 %v1697, %v1721
  %v1746 = vmax.f32 %v1698, %v1722
  %v1747 = vmax.f32 %v1699, %v1723
  %v1748 = vmax.f32 %v1700, %v1724
  %v1749 = vmax.f32 %v1701, %v1725
  %v1750 = vmax.f32 %v1702, %v1726
  %v1751 = vmax.f32 %v1703, %v1727
  %v1752 = vmax.f32 %v1704, %v1728
  %v1753 = vmax.f32 %v1705, %v1729
  %v1754 = vmax.f32 %v1706, %v1730
  %v1755 = vmax.f32 %v1707, %v1731
  %v1756 = vmax.f32 %v1708, %v1732
  %v1757 = vmax.f32 %v1709, %v1733
  %v1758 = vmax.f32 %v1710, %v1734
  %v1759 = vmax.f32 %v1711, %v1735
  %v1760 = vmax.f32 %v1712, %v1736
  %v1761 = vmax.f32 %v1713, %v1737
  %v1762 = vmax.f32 %v1714, %v1738
  %v1763 = vld [vmem:[%s2] sm:$0x1]
  %v1765 = vlaneseq
  %v1766 = vshrl.u32 %v1765, 7
  %v1767 = vsub.s32 0, %v1766
  %v1768 = vrot.slane %v1763, %v1767
  %v1770 = vadd.f32 %v1739, %v1768
  %v1771 = vadd.f32 %v1740, %v1768
  %v1772 = vadd.f32 %v1741, %v1768
  %v1773 = vadd.f32 %v1742, %v1768
  %v1774 = vadd.f32 %v1743, %v1768
  %v1775 = vadd.f32 %v1744, %v1768
  %v1776 = vadd.f32 %v1745, %v1768
  %v1777 = vadd.f32 %v1746, %v1768
  %v1778 = vadd.f32 %v1747, %v1768
  %v1779 = vadd.f32 %v1748, %v1768
  %v1780 = vadd.f32 %v1749, %v1768
  %v1781 = vadd.f32 %v1750, %v1768
  %v1782 = vadd.f32 %v1751, %v1768
  %v1783 = vadd.f32 %v1752, %v1768
  %v1784 = vadd.f32 %v1753, %v1768
  %v1785 = vadd.f32 %v1754, %v1768
  %v1786 = vadd.f32 %v1755, %v1768
  %v1787 = vadd.f32 %v1756, %v1768
  %v1788 = vadd.f32 %v1757, %v1768
  %v1789 = vadd.f32 %v1758, %v1768
  %v1790 = vadd.f32 %v1759, %v1768
  %v1791 = vadd.f32 %v1760, %v1768
  %v1792 = vadd.f32 %v1761, %v1768
  %v1793 = vadd.f32 %v1762, %v1768
  %v1794 = vmax.f32 %v1770, 0.0
  %v1795 = vmax.f32 %v1771, 0.0
  %v1796 = vmax.f32 %v1772, 0.0
  %v1797 = vmax.f32 %v1773, 0.0
  %v1798 = vmax.f32 %v1774, 0.0
  %v1799 = vmax.f32 %v1775, 0.0
  %v1800 = vmax.f32 %v1776, 0.0
  %v1801 = vmax.f32 %v1777, 0.0
  %v1802 = vmax.f32 %v1778, 0.0
  %v1803 = vmax.f32 %v1779, 0.0
  %v1804 = vmax.f32 %v1780, 0.0
  %v1805 = vmax.f32 %v1781, 0.0
  %v1806 = vmax.f32 %v1782, 0.0
  %v1807 = vmax.f32 %v1783, 0.0
  %v1808 = vmax.f32 %v1784, 0.0
  %v1809 = vmax.f32 %v1785, 0.0
  %v1810 = vmax.f32 %v1786, 0.0
  %v1811 = vmax.f32 %v1787, 0.0
  %v1812 = vmax.f32 %v1788, 0.0
  %v1813 = vmax.f32 %v1789, 0.0
  %v1814 = vmax.f32 %v1790, 0.0
  %v1815 = vmax.f32 %v1791, 0.0
  %v1816 = vmax.f32 %v1792, 0.0
  %v1817 = vmax.f32 %v1793, 0.0
  %v1818 = vpack.c.bf16 %v1795, %v1794
  %v1819 = vpack.c.bf16 %v1797, %v1796
  %v1820 = vpack.c.bf16 %v1799, %v1798
  %v1821 = vpack.c.bf16 %v1801, %v1800
  %v1822 = vpack.c.bf16 %v1803, %v1802
  %v1823 = vpack.c.bf16 %v1805, %v1804
  %v1824 = vpack.c.bf16 %v1807, %v1806
  %v1825 = vpack.c.bf16 %v1809, %v1808
  %v1826 = vpack.c.bf16 %v1811, %v1810
  %v1827 = vpack.c.bf16 %v1813, %v1812
  %v1828 = vpack.c.bf16 %v1815, %v1814
  %v1829 = vpack.c.bf16 %v1817, %v1816
  %v1830 = vmax.f32 %v1011, %v1501
  %v1831 = vmax.f32 %v1014, %v1504
  %v1832 = vmax.f32 %v1019, %v1509
  %v1833 = vmax.f32 %v1022, %v1512
  %v1834 = vmax.f32 %v1027, %v1517
  %v1835 = vmax.f32 %v1030, %v1520
  %v1836 = vmax.f32 %v1035, %v1525
  %v1837 = vmax.f32 %v1038, %v1528
  %v1838 = vmax.f32 %v1043, %v1533
  %v1839 = vmax.f32 %v1046, %v1536
  %v1840 = vmax.f32 %v1051, %v1541
  %v1841 = vmax.f32 %v1054, %v1544
  %v1842 = vmax.f32 %v1059, %v1549
  %v1843 = vmax.f32 %v1062, %v1552
  %v1844 = vmax.f32 %v1067, %v1557
  %v1845 = vmax.f32 %v1070, %v1560
  %v1846 = vmax.f32 %v1075, %v1565
  %v1847 = vmax.f32 %v1078, %v1568
  %v1848 = vmax.f32 %v1083, %v1573
  %v1849 = vmax.f32 %v1086, %v1576
  %v1850 = vmax.f32 %v1091, %v1581
  %v1851 = vmax.f32 %v1094, %v1584
  %v1852 = vmax.f32 %v1099, %v1589
  %v1853 = vmax.f32 %v1102, %v1592
  %v1854 = vmax.f32 %v1107, %v1597
  %v1855 = vmax.f32 %v1110, %v1600
  %v1856 = vmax.f32 %v1115, %v1605
  %v1857 = vmax.f32 %v1118, %v1608
  %v1858 = vmax.f32 %v1123, %v1613
  %v1859 = vmax.f32 %v1126, %v1616
  %v1860 = vmax.f32 %v1131, %v1621
  %v1861 = vmax.f32 %v1134, %v1624
  %v1862 = vmax.f32 %v1139, %v1629
  %v1863 = vmax.f32 %v1142, %v1632
  %v1864 = vmax.f32 %v1147, %v1637
  %v1865 = vmax.f32 %v1150, %v1640
  %v1866 = vmax.f32 %v1155, %v1645
  %v1867 = vmax.f32 %v1158, %v1648
  %v1868 = vmax.f32 %v1163, %v1653
  %v1869 = vmax.f32 %v1166, %v1656
  %v1870 = vmax.f32 %v1171, %v1661
  %v1871 = vmax.f32 %v1174, %v1664
  %v1872 = vmax.f32 %v1179, %v1669
  %v1873 = vmax.f32 %v1182, %v1672
  %v1874 = vmax.f32 %v1187, %v1677
  %v1875 = vmax.f32 %v1190, %v1680
  %v1876 = vmax.f32 %v1195, %v1685
  %v1877 = vmax.f32 %v1198, %v1688
  %v1878 = vmax.f32 %v1830, %v1854
  %v1879 = vmax.f32 %v1831, %v1855
  %v1880 = vmax.f32 %v1832, %v1856
  %v1881 = vmax.f32 %v1833, %v1857
  %v1882 = vmax.f32 %v1834, %v1858
  %v1883 = vmax.f32 %v1835, %v1859
  %v1884 = vmax.f32 %v1836, %v1860
  %v1885 = vmax.f32 %v1837, %v1861
  %v1886 = vmax.f32 %v1838, %v1862
  %v1887 = vmax.f32 %v1839, %v1863
  %v1888 = vmax.f32 %v1840, %v1864
  %v1889 = vmax.f32 %v1841, %v1865
  %v1890 = vmax.f32 %v1842, %v1866
  %v1891 = vmax.f32 %v1843, %v1867
  %v1892 = vmax.f32 %v1844, %v1868
  %v1893 = vmax.f32 %v1845, %v1869
  %v1894 = vmax.f32 %v1846, %v1870
  %v1895 = vmax.f32 %v1847, %v1871
  %v1896 = vmax.f32 %v1848, %v1872
  %v1897 = vmax.f32 %v1849, %v1873
  %v1898 = vmax.f32 %v1850, %v1874
  %v1899 = vmax.f32 %v1851, %v1875
  %v1900 = vmax.f32 %v1852, %v1876
  %v1901 = vmax.f32 %v1853, %v1877
  %v1902 = vadd.f32 %v1878, %v1768
  %v1903 = vadd.f32 %v1879, %v1768
  %v1904 = vadd.f32 %v1880, %v1768
  %v1905 = vadd.f32 %v1881, %v1768
  %v1906 = vadd.f32 %v1882, %v1768
  %v1907 = vadd.f32 %v1883, %v1768
  %v1908 = vadd.f32 %v1884, %v1768
  %v1909 = vadd.f32 %v1885, %v1768
  %v1910 = vadd.f32 %v1886, %v1768
  %v1911 = vadd.f32 %v1887, %v1768
  %v1912 = vadd.f32 %v1888, %v1768
  %v1913 = vadd.f32 %v1889, %v1768
  %v1914 = vadd.f32 %v1890, %v1768
  %v1915 = vadd.f32 %v1891, %v1768
  %v1916 = vadd.f32 %v1892, %v1768
  %v1917 = vadd.f32 %v1893, %v1768
  %v1918 = vadd.f32 %v1894, %v1768
  %v1919 = vadd.f32 %v1895, %v1768
  %v1920 = vadd.f32 %v1896, %v1768
  %v1921 = vadd.f32 %v1897, %v1768
  %v1922 = vadd.f32 %v1898, %v1768
  %v1923 = vadd.f32 %v1899, %v1768
  %v1924 = vadd.f32 %v1900, %v1768
  %v1925 = vadd.f32 %v1901, %v1768
  %v1926 = vmax.f32 %v1902, 0.0
  %v1927 = vmax.f32 %v1903, 0.0
  %v1928 = vmax.f32 %v1904, 0.0
  %v1929 = vmax.f32 %v1905, 0.0
  %v1930 = vmax.f32 %v1906, 0.0
  %v1931 = vmax.f32 %v1907, 0.0
  %v1932 = vmax.f32 %v1908, 0.0
  %v1933 = vmax.f32 %v1909, 0.0
  %v1934 = vmax.f32 %v1910, 0.0
  %v1935 = vmax.f32 %v1911, 0.0
  %v1936 = vmax.f32 %v1912, 0.0
  %v1937 = vmax.f32 %v1913, 0.0
  %v1938 = vmax.f32 %v1914, 0.0
  %v1939 = vmax.f32 %v1915, 0.0
  %v1940 = vmax.f32 %v1916, 0.0
  %v1941 = vmax.f32 %v1917, 0.0
  %v1942 = vmax.f32 %v1918, 0.0
  %v1943 = vmax.f32 %v1919, 0.0
  %v1944 = vmax.f32 %v1920, 0.0
  %v1945 = vmax.f32 %v1921, 0.0
  %v1946 = vmax.f32 %v1922, 0.0
  %v1947 = vmax.f32 %v1923, 0.0
  %v1948 = vmax.f32 %v1924, 0.0
  %v1949 = vmax.f32 %v1925, 0.0
  %v1950 = vpack.c.bf16 %v1927, %v1926
  %v1951 = vpack.c.bf16 %v1929, %v1928
  %v1952 = vpack.c.bf16 %v1931, %v1930
  %v1953 = vpack.c.bf16 %v1933, %v1932
  %v1954 = vpack.c.bf16 %v1935, %v1934
  %v1955 = vpack.c.bf16 %v1937, %v1936
  %v1956 = vpack.c.bf16 %v1939, %v1938
  %v1957 = vpack.c.bf16 %v1941, %v1940
  %v1958 = vpack.c.bf16 %v1943, %v1942
  %v1959 = vpack.c.bf16 %v1945, %v1944
  %v1960 = vpack.c.bf16 %v1947, %v1946
  %v1961 = vpack.c.bf16 %v1949, %v1948
  %1970 = vrot.lane.b32.xlu0 %v1950, 72
  %v1971 = vpop.permute.xlu0 %1970
  %1972 = vrot.lane.b32.xlu0 %v1951, 72
  %v1973 = vpop.permute.xlu0 %1972
  %1974 = vrot.lane.b32.xlu0 %v1952, 72
  %v1975 = vpop.permute.xlu0 %1974
  %1976 = vrot.lane.b32.xlu0 %v1953, 72
  %v1977 = vpop.permute.xlu0 %1976
  %1978 = vrot.lane.b32.xlu0 %v1954, 72
  %v1979 = vpop.permute.xlu0 %1978
  %1980 = vrot.lane.b32.xlu0 %v1955, 72
  %v1981 = vpop.permute.xlu0 %1980
  %1982 = vrot.lane.b32.xlu0 %v1956, 72
  %v1983 = vpop.permute.xlu0 %1982
  %1984 = vrot.lane.b32.xlu0 %v1957, 72
  %v1985 = vpop.permute.xlu0 %1984
  %1994 = vrot.lane.b32.xlu0 %v1820, 16
  %v1995 = vpop.permute.xlu0 %1994
  %1996 = vrot.lane.b32.xlu0 %v1821, 16
  %v1997 = vpop.permute.xlu0 %1996
  %1998 = vrot.lane.b32.xlu0 %v1822, 16
  %v1999 = vpop.permute.xlu0 %1998
  %2000 = vrot.lane.b32.xlu0 %v1823, 16
  %v2001 = vpop.permute.xlu0 %2000
  %2002 = vrot.lane.b32.xlu0 %v1824, 16
  %v2003 = vpop.permute.xlu0 %2002
  %2004 = vrot.lane.b32.xlu0 %v1825, 16
  %v2005 = vpop.permute.xlu0 %2004
  %2006 = vrot.lane.b32.xlu0 %v1826, 16
  %v2007 = vpop.permute.xlu0 %2006
  %2008 = vrot.lane.b32.xlu0 %v1827, 16
  %v2009 = vpop.permute.xlu0 %2008
  %2012 = vrot.lane.b32.xlu0 %v1952, 88
  %v2013 = vpop.permute.xlu0 %2012
  %2014 = vrot.lane.b32.xlu0 %v1953, 88
  %v2015 = vpop.permute.xlu0 %2014
  %2016 = vrot.lane.b32.xlu0 %v1954, 88
  %v2017 = vpop.permute.xlu0 %2016
  %2018 = vrot.lane.b32.xlu0 %v1955, 88
  %v2019 = vpop.permute.xlu0 %2018
  %2020 = vrot.lane.b32.xlu0 %v1956, 88
  %v2021 = vpop.permute.xlu0 %2020
  %2022 = vrot.lane.b32.xlu0 %v1957, 88
  %v2023 = vpop.permute.xlu0 %2022
  %2024 = vrot.lane.b32.xlu0 %v1958, 88
  %v2025 = vpop.permute.xlu0 %2024
  %2026 = vrot.lane.b32.xlu0 %v1959, 88
  %v2027 = vpop.permute.xlu0 %2026
  %2030 = vrot.lane.b32.xlu0 %v1822, 32
  %v2031 = vpop.permute.xlu0 %2030
  %2032 = vrot.lane.b32.xlu0 %v1823, 32
  %v2033 = vpop.permute.xlu0 %2032
  %2034 = vrot.lane.b32.xlu0 %v1824, 32
  %v2035 = vpop.permute.xlu0 %2034
  %2036 = vrot.lane.b32.xlu0 %v1825, 32
  %v2037 = vpop.permute.xlu0 %2036
  %2038 = vrot.lane.b32.xlu0 %v1826, 32
  %v2039 = vpop.permute.xlu0 %2038
  %2040 = vrot.lane.b32.xlu0 %v1827, 32
  %v2041 = vpop.permute.xlu0 %2040
  %2042 = vrot.lane.b32.xlu0 %v1828, 32
  %v2043 = vpop.permute.xlu0 %2042
  %2044 = vrot.lane.b32.xlu0 %v1829, 32
  %v2045 = vpop.permute.xlu0 %2044
  %2048 = vrot.lane.b32.xlu0 %v1954, 104
  %v2049 = vpop.permute.xlu0 %2048
  %2050 = vrot.lane.b32.xlu0 %v1955, 104
  %v2051 = vpop.permute.xlu0 %2050
  %2052 = vrot.lane.b32.xlu0 %v1956, 104
  %v2053 = vpop.permute.xlu0 %2052
  %2054 = vrot.lane.b32.xlu0 %v1957, 104
  %v2055 = vpop.permute.xlu0 %2054
  %2056 = vrot.lane.b32.xlu0 %v1958, 104
  %v2057 = vpop.permute.xlu0 %2056
  %2058 = vrot.lane.b32.xlu0 %v1959, 104
  %v2059 = vpop.permute.xlu0 %2058
  %2060 = vrot.lane.b32.xlu0 %v1960, 104
  %v2061 = vpop.permute.xlu0 %2060
  %2062 = vrot.lane.b32.xlu0 %v1961, 104
  %v2063 = vpop.permute.xlu0 %2062
  %vm2064 = vcmask 588800
  %v2067 = vsel %vm2064, %v1818, %v1971
  %v2071 = vsel %vm2064, %v1819, %v1973
  %v2075 = vsel %vm2064, %v1820, %v1975
  %v2079 = vsel %vm2064, %v1821, %v1977
  %v2083 = vsel %vm2064, %v1822, %v1979
  %v2087 = vsel %vm2064, %v1823, %v1981
  %v2091 = vsel %vm2064, %v1824, %v1983
  %v2095 = vsel %vm2064, %v1825, %v1985
  %v2098 = vsel %vm639, %v1971, %v1995
  %v2100 = vsel %vm639, %v1973, %v1997
  %v2102 = vsel %vm639, %v1975, %v1999
  %v2104 = vsel %vm639, %v1977, %v2001
  %v2106 = vsel %vm639, %v1979, %v2003
  %v2108 = vsel %vm639, %v1981, %v2005
  %v2110 = vsel %vm639, %v1983, %v2007
  %v2112 = vsel %vm639, %v1985, %v2009
  %vm2113 = vcmask 719872
  %v2115 = vsel %vm2113, %v2098, %v2013
  %v2118 = vsel %vm2113, %v2100, %v2015
  %v2121 = vsel %vm2113, %v2102, %v2017
  %v2124 = vsel %vm2113, %v2104, %v2019
  %v2127 = vsel %vm2113, %v2106, %v2021
  %v2130 = vsel %vm2113, %v2108, %v2023
  %v2133 = vsel %vm2113, %v2110, %v2025
  %v2136 = vsel %vm2113, %v2112, %v2027
  %vm2138 = vcmask 261120
  %v2140 = vsel %vm2138, %v2013, %v2031
  %v2142 = vsel %vm2138, %v2015, %v2033
  %v2144 = vsel %vm2138, %v2017, %v2035
  %v2146 = vsel %vm2138, %v2019, %v2037
  %v2148 = vsel %vm2138, %v2021, %v2039
  %v2150 = vsel %vm2138, %v2023, %v2041
  %v2152 = vsel %vm2138, %v2025, %v2043
  %v2154 = vsel %vm2138, %v2027, %v2045
  %vm2155 = vcmask 850944
  %v2157 = vsel %vm2155, %v2140, %v2049
  %v2160 = vsel %vm2155, %v2142, %v2051
  %v2163 = vsel %vm2155, %v2144, %v2053
  %v2166 = vsel %vm2155, %v2146, %v2055
  %v2169 = vsel %vm2155, %v2148, %v2057
  %v2172 = vsel %vm2155, %v2150, %v2059
  %v2175 = vsel %vm2155, %v2152, %v2061
  %v2178 = vsel %vm2155, %v2154, %v2063
  %v2180 = vld [vmem:[%s3] sm:$0xf]
  %v2181 = vld [vmem:[%s3 + $0x4] sm:$0xf]
  %v2182 = vld [vmem:[%s3 + $0x8] sm:$0xf]
  %v2183 = vld [vmem:[%s3 + $0xc] sm:$0xf]
  %v2184 = vld [vmem:[%s3 + $0x10] sm:$0xf]
  %v2185 = vld [vmem:[%s3 + $0x14] sm:$0xf]
  %v2186 = vld [vmem:[%s3 + $0x18] sm:$0xf]
  %v2187 = vld [vmem:[%s3 + $0x1c] sm:$0xf]
  %v2188 = vld [vmem:[%s3 + $0x20] sm:$0xf]
  %v2189 = vld [vmem:[%s3 + $0x24] sm:$0xf]
  %v2190 = vld [vmem:[%s3 + $0x28] sm:$0xf]
  %v2191 = vld [vmem:[%s3 + $0x2c] sm:$0xf]
  %v2192 = vld [vmem:[%s3 + $0x30] sm:$0xf]
  %v2193 = vld [vmem:[%s3 + $0x34] sm:$0xf]
  %v2194 = vld [vmem:[%s3 + $0x38] sm:$0xf]
  %v2195 = vld [vmem:[%s3 + $0x3c] sm:$0xf]
  %v2196 = vld [vmem:[%s3 + $0x40] sm:$0xf]
  %v2197 = vld [vmem:[%s3 + $0x44] sm:$0xf]
  %v2198 = vld [vmem:[%s3 + $0x48] sm:$0xf]
  %v2199 = vld [vmem:[%s3 + $0x4c] sm:$0xf]
  %v2200 = vld [vmem:[%s3 + $0x50] sm:$0xf]
  %v2201 = vld [vmem:[%s3 + $0x54] sm:$0xf]
  %v2202 = vld [vmem:[%s3 + $0x58] sm:$0xf]
  %v2203 = vld [vmem:[%s3 + $0x5c] sm:$0xf]
  %v2204 = vld [vmem:[%s3 + $0x60] sm:$0xf]
  %v2205 = vld [vmem:[%s3 + $0x64] sm:$0xf]
  %v2206 = vld [vmem:[%s3 + $0x68] sm:$0xf]
  %v2207 = vld [vmem:[%s3 + $0x6c] sm:$0xf]
  %v2208 = vld [vmem:[%s3 + $0x70] sm:$0xf]
  %v2209 = vld [vmem:[%s3 + $0x74] sm:$0xf]
  %v2210 = vld [vmem:[%s3 + $0x78] sm:$0xf]
  %v2211 = vld [vmem:[%s3 + $0x7c] sm:$0xf]
  %v2212 = vld [vmem:[%s3 + $0x80] sm:$0xf]
  %v2213 = vld [vmem:[%s3 + $0x84] sm:$0xf]
  %v2214 = vld [vmem:[%s3 + $0x88] sm:$0xf]
  %v2215 = vld [vmem:[%s3 + $0x8c] sm:$0xf]
  %v2216 = vld [vmem:[%s3 + $0x90] sm:$0xf]
  %v2217 = vld [vmem:[%s3 + $0x94] sm:$0xf]
  %v2218 = vld [vmem:[%s3 + $0x98] sm:$0xf]
  %v2219 = vld [vmem:[%s3 + $0x9c] sm:$0xf]
  %v2220 = vld [vmem:[%s3 + $0xa0] sm:$0xf]
  %v2221 = vld [vmem:[%s3 + $0xa4] sm:$0xf]
  %v2222 = vld [vmem:[%s3 + $0xa8] sm:$0xf]
  %v2223 = vld [vmem:[%s3 + $0xac] sm:$0xf]
  %v2224 = vld [vmem:[%s3 + $0xb0] sm:$0xf]
  %v2225 = vld [vmem:[%s3 + $0xb4] sm:$0xf]
  %v2226 = vld [vmem:[%s3 + $0xb8] sm:$0xf]
  %v2227 = vld [vmem:[%s3 + $0xbc] sm:$0xf]
  %v2228 = vld [vmem:[%s3 + $0xc0] sm:$0xf]
  %v2229 = vld [vmem:[%s3 + $0xc4] sm:$0xf]
  %v2230 = vld [vmem:[%s3 + $0xc8] sm:$0xf]
  %v2231 = vld [vmem:[%s3 + $0xcc] sm:$0xf]
  %v2232 = vld [vmem:[%s3 + $0xd0] sm:$0xf]
  %v2233 = vld [vmem:[%s3 + $0xd4] sm:$0xf]
  %v2288 = vunpack.c.l.b16 %v2180
  %v2289 = vunpack.c.l.b16 %v2181
  %v2290 = vunpack.c.l.b16 %v2182
  %v2291 = vunpack.c.l.b16 %v2183
  %v2292 = vunpack.c.l.b16 %v2184
  %v2293 = vunpack.c.l.b16 %v2185
  %v2294 = vunpack.c.l.b16 %v2186
  %v2295 = vunpack.c.l.b16 %v2187
  %v2296 = vunpack.c.l.b16 %v2188
  %v2297 = vunpack.c.l.b16 %v2189
  %v2298 = vunpack.c.l.b16 %v2190
  %v2299 = vunpack.c.l.b16 %v2191
  %v2300 = vunpack.c.l.b16 %v2192
  %v2301 = vunpack.c.l.b16 %v2193
  %v2302 = vunpack.c.l.b16 %v2194
  %v2303 = vunpack.c.l.b16 %v2195
  %v2304 = vunpack.c.l.b16 %v2196
  %v2305 = vunpack.c.l.b16 %v2197
  %v2306 = vunpack.c.l.b16 %v2198
  %v2307 = vunpack.c.l.b16 %v2199
  %v2308 = vunpack.c.l.b16 %v2200
  %v2309 = vunpack.c.l.b16 %v2201
  %v2310 = vunpack.c.l.b16 %v2202
  %v2311 = vunpack.c.l.b16 %v2203
  %v2312 = vunpack.c.l.b16 %v2204
  %v2313 = vunpack.c.l.b16 %v2205
  %v2314 = vunpack.c.l.b16 %v2206
  %v2315 = vunpack.c.l.b16 %v2207
  %v2316 = vunpack.c.l.b16 %v2208
  %v2317 = vunpack.c.l.b16 %v2209
  %v2318 = vunpack.c.l.b16 %v2210
  %v2319 = vunpack.c.l.b16 %v2211
  %v2320 = vunpack.c.l.b16 %v2212
  %v2321 = vunpack.c.l.b16 %v2213
  %v2322 = vunpack.c.l.b16 %v2214
  %v2323 = vunpack.c.l.b16 %v2215
  %v2324 = vunpack.c.l.b16 %v2216
  %v2325 = vunpack.c.l.b16 %v2217
  %v2326 = vunpack.c.l.b16 %v2218
  %v2327 = vunpack.c.l.b16 %v2219
  %v2328 = vunpack.c.l.b16 %v2220
  %v2329 = vunpack.c.l.b16 %v2221
  %v2330 = vunpack.c.l.b16 %v2222
  %v2331 = vunpack.c.l.b16 %v2223
  %v2332 = vunpack.c.l.b16 %v2224
  %v2333 = vunpack.c.l.b16 %v2225
  %v2334 = vunpack.c.l.b16 %v2226
  %v2335 = vunpack.c.l.b16 %v2227
  %v2336 = vunpack.c.l.b16 %v2228
  %v2337 = vunpack.c.l.b16 %v2229
  %v2338 = vunpack.c.l.b16 %v2230
  %v2339 = vunpack.c.l.b16 %v2231
  %v2340 = vunpack.c.l.b16 %v2232
  %v2341 = vunpack.c.l.b16 %v2233
  %v2342 = vpack.c.b16 %v2289, %v2288
  %v2343 = vpack.c.b16 %v2291, %v2290
  %v2344 = vpack.c.b16 %v2293, %v2292
  %v2345 = vpack.c.b16 %v2295, %v2294
  %v2346 = vpack.c.b16 %v2297, %v2296
  %v2347 = vpack.c.b16 %v2299, %v2298
  %v2348 = vpack.c.b16 %v2301, %v2300
  %v2349 = vpack.c.b16 %v2303, %v2302
  %v2350 = vpack.c.b16 %v2305, %v2304
  %v2351 = vpack.c.b16 %v2307, %v2306
  %v2352 = vpack.c.b16 %v2309, %v2308
  %v2353 = vpack.c.b16 %v2311, %v2310
  %v2354 = vpack.c.b16 %v2313, %v2312
  %v2355 = vpack.c.b16 %v2315, %v2314
  %v2356 = vpack.c.b16 %v2317, %v2316
  %v2357 = vpack.c.b16 %v2319, %v2318
  %v2358 = vpack.c.b16 %v2321, %v2320
  %v2359 = vpack.c.b16 %v2323, %v2322
  %v2360 = vpack.c.b16 %v2325, %v2324
  %v2361 = vpack.c.b16 %v2327, %v2326
  %v2362 = vpack.c.b16 %v2329, %v2328
  %v2363 = vpack.c.b16 %v2331, %v2330
  %v2364 = vpack.c.b16 %v2333, %v2332
  %v2365 = vpack.c.b16 %v2335, %v2334
  %v2366 = vpack.c.b16 %v2337, %v2336
  %v2367 = vpack.c.b16 %v2339, %v2338
  %v2368 = vpack.c.b16 %v2341, %v2340
  %vm2396 = vcmask 392192
  %v2397 = vsel %vm2396, %v2049, 0
  %v2399 = vsel %vm2396, %v2051, 0
  %v2401 = vsel %vm2396, %v2053, 0
  %v2403 = vsel %vm2396, %v2055, 0
  %v2405 = vsel %vm2396, %v2057, 0
  %v2407 = vsel %vm2396, %v2059, 0
  %v2409 = vsel %vm2396, %v2061, 0
  %v2411 = vsel %vm2396, %v2063, 0
  %2413 = vmatprep.subr.bf16.mxu0 0
  %2414 = vmatpush1.bf16.msra.mxu0 %v2342
  %2415 = vmatprep.subr.bf16.mxu0 0
  %2416 = vmatpush1.bf16.msra.mxu0 %v2343
  %2417 = vmatprep.subr.bf16.mxu0 0
  %2418 = vmatpush1.bf16.msra.mxu0 %v2344
  %2419 = vmatprep.subr.bf16.mxu0 0
  %2420 = vmatpush1.bf16.msra.mxu0 %v2345
  %2421 = vmatprep.subr.bf16.mxu0 0
  %2422 = vmatpush1.bf16.msra.mxu0 %v2346
  %2423 = vmatprep.subr.bf16.mxu0 0
  %2424 = vmatpush1.bf16.msra.mxu0 %v2347
  %2425 = vmatprep.subr.bf16.mxu0 0
  %2426 = vmatpush1.bf16.msra.mxu0 %v2348
  %2427 = vmatprep.subr.bf16.mxu0 0
  %2428 = vmatpush1.bf16.msra.mxu0 %v2349
  %2429 = vmatprep.subr.bf16.mxu0 0
  %2430 = vmatpush1.bf16.msra.mxu0 %v2350
  %2431 = vmatprep.subr.bf16.mxu0 0
  %2432 = vmatpush1.bf16.msra.mxu0 %v2351
  %2433 = vmatprep.subr.bf16.mxu0 0
  %2434 = vmatpush1.bf16.msra.mxu0 %v2352
  %2435 = vmatprep.subr.bf16.mxu0 0
  %2436 = vmatpush1.bf16.msra.mxu0 %v2353
  %2437 = vmatprep.subr.bf16.mxu0 0
  %2438 = vmatpush1.bf16.msra.mxu0 %v2354
  %2439 = vmatprep.subr.bf16.mxu0 0
  %2440 = vmatpush1.bf16.msra.mxu0 %v2355
  %2441 = vmatprep.subr.bf16.mxu0 0
  %2442 = vmatpush1.bf16.msra.mxu0 %v2356
  %2443 = vmatprep.subr.bf16.mxu0 0
  %2444 = vmatpush1.bf16.msra.mxu0 %v2357
  %2445 = vmatprep.mubr.bf16.mxu0 %v2115
  %2446 = vmatmul.mubr.bf16.gmra.mrb[0].mxu0 %v2067
  %v2447 = vpop.f32.mrb[0].mxu0
  %v2448 = vadd.f32 0.0, %v2447
  %v2449 = vpop.f32.mrb[0].mxu0
  %v2450 = vpop.f32.mrb[0].mxu0
  %v2451 = vadd.f32 0.0, %v2450
  %v2452 = vpop.f32.mrb[0].mxu0
  %2453 = vmatprep.mubr.bf16.mxu0 %v2118
  %2454 = vmatmul.mubr.bf16.gmra.mrb[0].mxu0 %v2071
  %v2455 = vpop.f32.mrb[0].mxu0
  %v2456 = vadd.f32 0.0, %v2455
  %v2457 = vpop.f32.mrb[0].mxu0
  %v2458 = vpop.f32.mrb[0].mxu0
  %v2459 = vadd.f32 0.0, %v2458
  %v2460 = vpop.f32.mrb[0].mxu0
  %2461 = vmatprep.mubr.bf16.mxu0 %v2121
  %2462 = vmatmul.mubr.bf16.gmra.mrb[0].mxu0 %v2075
  %v2463 = vpop.f32.mrb[0].mxu0
  %v2464 = vadd.f32 0.0, %v2463
  %v2465 = vpop.f32.mrb[0].mxu0
  %v2466 = vpop.f32.mrb[0].mxu0
  %v2467 = vadd.f32 0.0, %v2466
  %v2468 = vpop.f32.mrb[0].mxu0
  %2469 = vmatprep.mubr.bf16.mxu0 %v2124
  %2470 = vmatmul.mubr.bf16.gmra.mrb[0].mxu0 %v2079
  %v2471 = vpop.f32.mrb[0].mxu0
  %v2472 = vadd.f32 0.0, %v2471
  %v2473 = vpop.f32.mrb[0].mxu0
  %v2474 = vpop.f32.mrb[0].mxu0
  %v2475 = vadd.f32 0.0, %v2474
  %v2476 = vpop.f32.mrb[0].mxu0
  %2477 = vmatprep.mubr.bf16.mxu0 %v2127
  %2478 = vmatmul.mubr.bf16.gmra.mrb[0].mxu0 %v2083
  %v2479 = vpop.f32.mrb[0].mxu0
  %v2480 = vadd.f32 0.0, %v2479
  %v2481 = vpop.f32.mrb[0].mxu0
  %v2482 = vpop.f32.mrb[0].mxu0
  %v2483 = vadd.f32 0.0, %v2482
  %v2484 = vpop.f32.mrb[0].mxu0
  %2485 = vmatprep.mubr.bf16.mxu0 %v2130
  %2486 = vmatmul.mubr.bf16.gmra.mrb[0].mxu0 %v2087
  %v2487 = vpop.f32.mrb[0].mxu0
  %v2488 = vadd.f32 0.0, %v2487
  %v2489 = vpop.f32.mrb[0].mxu0
  %v2490 = vpop.f32.mrb[0].mxu0
  %v2491 = vadd.f32 0.0, %v2490
  %v2492 = vpop.f32.mrb[0].mxu0
  %2493 = vmatprep.mubr.bf16.mxu0 %v2133
  %2494 = vmatmul.mubr.bf16.gmra.mrb[0].mxu0 %v2091
  %v2495 = vpop.f32.mrb[0].mxu0
  %v2496 = vadd.f32 0.0, %v2495
  %v2497 = vpop.f32.mrb[0].mxu0
  %v2498 = vpop.f32.mrb[0].mxu0
  %v2499 = vadd.f32 0.0, %v2498
  %v2500 = vpop.f32.mrb[0].mxu0
  %2501 = vmatprep.mubr.bf16.mxu0 %v2136
  %2502 = vmatmul.mubr.bf16.gmra.mrb[0].mxu0 %v2095
  %v2503 = vpop.f32.mrb[0].mxu0
  %v2504 = vadd.f32 0.0, %v2503
  %v2505 = vpop.f32.mrb[0].mxu0
  %v2506 = vpop.f32.mrb[0].mxu0
  %v2507 = vadd.f32 0.0, %v2506
  %v2508 = vpop.f32.mrb[0].mxu0
  %2509 = vdwg.mxu0
  %2510 = vmatprep.subr.bf16.mxu0 0
  %2511 = vmatpush1.bf16.msra.mxu0 %v2358
  %2512 = vmatprep.subr.bf16.mxu0 0
  %2513 = vmatpush1.bf16.msra.mxu0 %v2359
  %2514 = vmatprep.subr.bf16.mxu0 0
  %2515 = vmatpush1.bf16.msra.mxu0 %v2360
  %2516 = vmatprep.subr.bf16.mxu0 0
  %2517 = vmatpush1.bf16.msra.mxu0 %v2361
  %2518 = vmatprep.subr.bf16.mxu0 0
  %2519 = vmatpush1.bf16.msra.mxu0 %v2362
  %2520 = vmatprep.subr.bf16.mxu0 0
  %2521 = vmatpush1.bf16.msra.mxu0 %v2363
  %2522 = vmatprep.subr.bf16.mxu0 0
  %2523 = vmatpush1.bf16.msra.mxu0 %v2364
  %2524 = vmatprep.subr.bf16.mxu0 0
  %2525 = vmatpush1.bf16.msra.mxu0 %v2365
  %2526 = vmatprep.subr.bf16.mxu0 0
  %2527 = vmatpush1.bf16.msra.mxu0 %v2366
  %2528 = vmatprep.subr.bf16.mxu0 0
  %2529 = vmatpush1.bf16.msra.mxu0 %v2367
  %2530 = vmatprep.subr.bf16.mxu0 0
  %2531 = vmatpush1.bf16.msra.mxu0 %v2368
  %2532 = vmatprep.subr.bf16.mxu0 0
  %2533 = vmatpush1.bf16.msra.mxu0 0
  %2534 = vmatprep.subr.bf16.mxu0 0
  %2535 = vmatpush1.bf16.msra.mxu0 0
  %2536 = vmatprep.subr.bf16.mxu0 0
  %2537 = vmatpush1.bf16.msra.mxu0 0
  %2538 = vmatprep.subr.bf16.mxu0 0
  %2539 = vmatpush1.bf16.msra.mxu0 0
  %2540 = vmatprep.subr.bf16.mxu0 0
  %2541 = vmatpush1.bf16.msra.mxu0 0
  %2542 = vmatprep.mubr.bf16.mxu0 %v2397
  %2543 = vmatmul.mubr.bf16.gmra.mrb[0].mxu0 %v2157
  %v2544 = vpop.f32.mrb[0].mxu0
  %v2545 = vadd.f32 %v2448, %v2544
  %v2546 = vpop.f32.mrb[0].mxu0
  %v2547 = vpop.f32.mrb[0].mxu0
  %v2548 = vadd.f32 %v2451, %v2547
  %v2549 = vpop.f32.mrb[0].mxu0
  %2550 = vmatprep.mubr.bf16.mxu0 %v2399
  %2551 = vmatmul.mubr.bf16.gmra.mrb[0].mxu0 %v2160
  %v2552 = vpop.f32.mrb[0].mxu0
  %v2553 = vadd.f32 %v2456, %v2552
  %v2554 = vpop.f32.mrb[0].mxu0
  %v2555 = vpop.f32.mrb[0].mxu0
  %v2556 = vadd.f32 %v2459, %v2555
  %v2557 = vpop.f32.mrb[0].mxu0
  %2558 = vmatprep.mubr.bf16.mxu0 %v2401
  %2559 = vmatmul.mubr.bf16.gmra.mrb[0].mxu0 %v2163
  %v2560 = vpop.f32.mrb[0].mxu0
  %v2561 = vadd.f32 %v2464, %v2560
  %v2562 = vpop.f32.mrb[0].mxu0
  %v2563 = vpop.f32.mrb[0].mxu0
  %v2564 = vadd.f32 %v2467, %v2563
  %v2565 = vpop.f32.mrb[0].mxu0
  %2566 = vmatprep.mubr.bf16.mxu0 %v2403
  %2567 = vmatmul.mubr.bf16.gmra.mrb[0].mxu0 %v2166
  %v2568 = vpop.f32.mrb[0].mxu0
  %v2569 = vadd.f32 %v2472, %v2568
  %v2570 = vpop.f32.mrb[0].mxu0
  %v2571 = vpop.f32.mrb[0].mxu0
  %v2572 = vadd.f32 %v2475, %v2571
  %v2573 = vpop.f32.mrb[0].mxu0
  %2574 = vmatprep.mubr.bf16.mxu0 %v2405
  %2575 = vmatmul.mubr.bf16.gmra.mrb[0].mxu0 %v2169
  %v2576 = vpop.f32.mrb[0].mxu0
  %v2577 = vadd.f32 %v2480, %v2576
  %v2578 = vpop.f32.mrb[0].mxu0
  %v2579 = vpop.f32.mrb[0].mxu0
  %v2580 = vadd.f32 %v2483, %v2579
  %v2581 = vpop.f32.mrb[0].mxu0
  %2582 = vmatprep.mubr.bf16.mxu0 %v2407
  %2583 = vmatmul.mubr.bf16.gmra.mrb[0].mxu0 %v2172
  %v2584 = vpop.f32.mrb[0].mxu0
  %v2585 = vadd.f32 %v2488, %v2584
  %v2586 = vpop.f32.mrb[0].mxu0
  %v2587 = vpop.f32.mrb[0].mxu0
  %v2588 = vadd.f32 %v2491, %v2587
  %v2589 = vpop.f32.mrb[0].mxu0
  %2590 = vmatprep.mubr.bf16.mxu0 %v2409
  %2591 = vmatmul.mubr.bf16.gmra.mrb[0].mxu0 %v2175
  %v2592 = vpop.f32.mrb[0].mxu0
  %v2593 = vadd.f32 %v2496, %v2592
  %v2594 = vpop.f32.mrb[0].mxu0
  %v2595 = vpop.f32.mrb[0].mxu0
  %v2596 = vadd.f32 %v2499, %v2595
  %v2597 = vpop.f32.mrb[0].mxu0
  %2598 = vmatprep.mubr.bf16.mxu0 %v2411
  %2599 = vmatmul.mubr.bf16.gmra.mrb[0].mxu0 %v2178
  %v2600 = vpop.f32.mrb[0].mxu0
  %v2601 = vadd.f32 %v2504, %v2600
  %v2602 = vpop.f32.mrb[0].mxu0
  %v2603 = vpop.f32.mrb[0].mxu0
  %v2604 = vadd.f32 %v2507, %v2603
  %v2605 = vpop.f32.mrb[0].mxu0
  %2606 = vdwg.mxu0
  %s2607 = scalar_lea.vmem %s3, 216
  %v2608 = vld [vmem:[%s2607] sm:$0xf]
  %v2609 = vld [vmem:[%s2607 + $0x4] sm:$0xf]
  %v2610 = vld [vmem:[%s2607 + $0x8] sm:$0xf]
  %v2611 = vld [vmem:[%s2607 + $0xc] sm:$0xf]
  %v2612 = vld [vmem:[%s2607 + $0x10] sm:$0xf]
  %v2613 = vld [vmem:[%s2607 + $0x14] sm:$0xf]
  %v2614 = vld [vmem:[%s2607 + $0x18] sm:$0xf]
  %v2615 = vld [vmem:[%s2607 + $0x1c] sm:$0xf]
  %v2616 = vld [vmem:[%s2607 + $0x20] sm:$0xf]
  %v2617 = vld [vmem:[%s2607 + $0x24] sm:$0xf]
  %v2618 = vld [vmem:[%s2607 + $0x28] sm:$0xf]
  %v2619 = vld [vmem:[%s2607 + $0x2c] sm:$0xf]
  %v2620 = vld [vmem:[%s2607 + $0x30] sm:$0xf]
  %v2621 = vld [vmem:[%s2607 + $0x34] sm:$0xf]
  %v2622 = vld [vmem:[%s2607 + $0x38] sm:$0xf]
  %v2623 = vld [vmem:[%s2607 + $0x3c] sm:$0xf]
  %v2624 = vld [vmem:[%s2607 + $0x40] sm:$0xf]
  %v2625 = vld [vmem:[%s2607 + $0x44] sm:$0xf]
  %v2626 = vld [vmem:[%s2607 + $0x48] sm:$0xf]
  %v2627 = vld [vmem:[%s2607 + $0x4c] sm:$0xf]
  %v2628 = vld [vmem:[%s2607 + $0x50] sm:$0xf]
  %v2629 = vld [vmem:[%s2607 + $0x54] sm:$0xf]
  %v2630 = vld [vmem:[%s2607 + $0x58] sm:$0xf]
  %v2631 = vld [vmem:[%s2607 + $0x5c] sm:$0xf]
  %v2632 = vld [vmem:[%s2607 + $0x60] sm:$0xf]
  %v2633 = vld [vmem:[%s2607 + $0x64] sm:$0xf]
  %v2634 = vld [vmem:[%s2607 + $0x68] sm:$0xf]
  %v2635 = vld [vmem:[%s2607 + $0x6c] sm:$0xf]
  %v2636 = vld [vmem:[%s2607 + $0x70] sm:$0xf]
  %v2637 = vld [vmem:[%s2607 + $0x74] sm:$0xf]
  %v2638 = vld [vmem:[%s2607 + $0x78] sm:$0xf]
  %v2639 = vld [vmem:[%s2607 + $0x7c] sm:$0xf]
  %v2640 = vld [vmem:[%s2607 + $0x80] sm:$0xf]
  %v2641 = vld [vmem:[%s2607 + $0x84] sm:$0xf]
  %v2642 = vld [vmem:[%s2607 + $0x88] sm:$0xf]
  %v2643 = vld [vmem:[%s2607 + $0x8c] sm:$0xf]
  %v2644 = vld [vmem:[%s2607 + $0x90] sm:$0xf]
  %v2645 = vld [vmem:[%s2607 + $0x94] sm:$0xf]
  %v2646 = vld [vmem:[%s2607 + $0x98] sm:$0xf]
  %v2647 = vld [vmem:[%s2607 + $0x9c] sm:$0xf]
  %v2648 = vld [vmem:[%s2607 + $0xa0] sm:$0xf]
  %v2649 = vld [vmem:[%s2607 + $0xa4] sm:$0xf]
  %v2650 = vld [vmem:[%s2607 + $0xa8] sm:$0xf]
  %v2651 = vld [vmem:[%s2607 + $0xac] sm:$0xf]
  %v2652 = vld [vmem:[%s2607 + $0xb0] sm:$0xf]
  %v2653 = vld [vmem:[%s2607 + $0xb4] sm:$0xf]
  %v2654 = vld [vmem:[%s2607 + $0xb8] sm:$0xf]
  %v2655 = vld [vmem:[%s2607 + $0xbc] sm:$0xf]
  %v2656 = vld [vmem:[%s2607 + $0xc0] sm:$0xf]
  %v2657 = vld [vmem:[%s2607 + $0xc4] sm:$0xf]
  %v2658 = vld [vmem:[%s2607 + $0xc8] sm:$0xf]
  %v2659 = vld [vmem:[%s2607 + $0xcc] sm:$0xf]
  %v2660 = vld [vmem:[%s2607 + $0xd0] sm:$0xf]
  %v2661 = vld [vmem:[%s2607 + $0xd4] sm:$0xf]
  %v2716 = vunpack.c.l.b16 %v2608
  %v2717 = vunpack.c.l.b16 %v2609
  %v2718 = vunpack.c.l.b16 %v2610
  %v2719 = vunpack.c.l.b16 %v2611
  %v2720 = vunpack.c.l.b16 %v2612
  %v2721 = vunpack.c.l.b16 %v2613
  %v2722 = vunpack.c.l.b16 %v2614
  %v2723 = vunpack.c.l.b16 %v2615
  %v2724 = vunpack.c.l.b16 %v2616
  %v2725 = vunpack.c.l.b16 %v2617
  %v2726 = vunpack.c.l.b16 %v2618
  %v2727 = vunpack.c.l.b16 %v2619
  %v2728 = vunpack.c.l.b16 %v2620
  %v2729 = vunpack.c.l.b16 %v2621
  %v2730 = vunpack.c.l.b16 %v2622
  %v2731 = vunpack.c.l.b16 %v2623
  %v2732 = vunpack.c.l.b16 %v2624
  %v2733 = vunpack.c.l.b16 %v2625
  %v2734 = vunpack.c.l.b16 %v2626
  %v2735 = vunpack.c.l.b16 %v2627
  %v2736 = vunpack.c.l.b16 %v2628
  %v2737 = vunpack.c.l.b16 %v2629
  %v2738 = vunpack.c.l.b16 %v2630
  %v2739 = vunpack.c.l.b16 %v2631
  %v2740 = vunpack.c.l.b16 %v2632
  %v2741 = vunpack.c.l.b16 %v2633
  %v2742 = vunpack.c.l.b16 %v2634
  %v2743 = vunpack.c.l.b16 %v2635
  %v2744 = vunpack.c.l.b16 %v2636
  %v2745 = vunpack.c.l.b16 %v2637
  %v2746 = vunpack.c.l.b16 %v2638
  %v2747 = vunpack.c.l.b16 %v2639
  %v2748 = vunpack.c.l.b16 %v2640
  %v2749 = vunpack.c.l.b16 %v2641
  %v2750 = vunpack.c.l.b16 %v2642
  %v2751 = vunpack.c.l.b16 %v2643
  %v2752 = vunpack.c.l.b16 %v2644
  %v2753 = vunpack.c.l.b16 %v2645
  %v2754 = vunpack.c.l.b16 %v2646
  %v2755 = vunpack.c.l.b16 %v2647
  %v2756 = vunpack.c.l.b16 %v2648
  %v2757 = vunpack.c.l.b16 %v2649
  %v2758 = vunpack.c.l.b16 %v2650
  %v2759 = vunpack.c.l.b16 %v2651
  %v2760 = vunpack.c.l.b16 %v2652
  %v2761 = vunpack.c.l.b16 %v2653
  %v2762 = vunpack.c.l.b16 %v2654
  %v2763 = vunpack.c.l.b16 %v2655
  %v2764 = vunpack.c.l.b16 %v2656
  %v2765 = vunpack.c.l.b16 %v2657
  %v2766 = vunpack.c.l.b16 %v2658
  %v2767 = vunpack.c.l.b16 %v2659
  %v2768 = vunpack.c.l.b16 %v2660
  %v2769 = vunpack.c.l.b16 %v2661
  %v2770 = vpack.c.b16 %v2717, %v2716
  %v2771 = vpack.c.b16 %v2719, %v2718
  %v2772 = vpack.c.b16 %v2721, %v2720
  %v2773 = vpack.c.b16 %v2723, %v2722
  %v2774 = vpack.c.b16 %v2725, %v2724
  %v2775 = vpack.c.b16 %v2727, %v2726
  %v2776 = vpack.c.b16 %v2729, %v2728
  %v2777 = vpack.c.b16 %v2731, %v2730
  %v2778 = vpack.c.b16 %v2733, %v2732
  %v2779 = vpack.c.b16 %v2735, %v2734
  %v2780 = vpack.c.b16 %v2737, %v2736
  %v2781 = vpack.c.b16 %v2739, %v2738
  %v2782 = vpack.c.b16 %v2741, %v2740
  %v2783 = vpack.c.b16 %v2743, %v2742
  %v2784 = vpack.c.b16 %v2745, %v2744
  %v2785 = vpack.c.b16 %v2747, %v2746
  %v2786 = vpack.c.b16 %v2749, %v2748
  %v2787 = vpack.c.b16 %v2751, %v2750
  %v2788 = vpack.c.b16 %v2753, %v2752
  %v2789 = vpack.c.b16 %v2755, %v2754
  %v2790 = vpack.c.b16 %v2757, %v2756
  %v2791 = vpack.c.b16 %v2759, %v2758
  %v2792 = vpack.c.b16 %v2761, %v2760
  %v2793 = vpack.c.b16 %v2763, %v2762
  %v2794 = vpack.c.b16 %v2765, %v2764
  %v2795 = vpack.c.b16 %v2767, %v2766
  %v2796 = vpack.c.b16 %v2769, %v2768
  %2824 = vmatprep.subr.bf16.mxu0 0
  %2825 = vmatpush1.bf16.msra.mxu0 %v2770
  %2826 = vmatprep.subr.bf16.mxu0 0
  %2827 = vmatpush1.bf16.msra.mxu0 %v2771
  %2828 = vmatprep.subr.bf16.mxu0 0
  %2829 = vmatpush1.bf16.msra.mxu0 %v2772
  %2830 = vmatprep.subr.bf16.mxu0 0
  %2831 = vmatpush1.bf16.msra.mxu0 %v2773
  %2832 = vmatprep.subr.bf16.mxu0 0
  %2833 = vmatpush1.bf16.msra.mxu0 %v2774
  %2834 = vmatprep.subr.bf16.mxu0 0
  %2835 = vmatpush1.bf16.msra.mxu0 %v2775
  %2836 = vmatprep.subr.bf16.mxu0 0
  %2837 = vmatpush1.bf16.msra.mxu0 %v2776
  %2838 = vmatprep.subr.bf16.mxu0 0
  %2839 = vmatpush1.bf16.msra.mxu0 %v2777
  %2840 = vmatprep.subr.bf16.mxu0 0
  %2841 = vmatpush1.bf16.msra.mxu0 %v2778
  %2842 = vmatprep.subr.bf16.mxu0 0
  %2843 = vmatpush1.bf16.msra.mxu0 %v2779
  %2844 = vmatprep.subr.bf16.mxu0 0
  %2845 = vmatpush1.bf16.msra.mxu0 %v2780
  %2846 = vmatprep.subr.bf16.mxu0 0
  %2847 = vmatpush1.bf16.msra.mxu0 %v2781
  %2848 = vmatprep.subr.bf16.mxu0 0
  %2849 = vmatpush1.bf16.msra.mxu0 %v2782
  %2850 = vmatprep.subr.bf16.mxu0 0
  %2851 = vmatpush1.bf16.msra.mxu0 %v2783
  %2852 = vmatprep.subr.bf16.mxu0 0
  %2853 = vmatpush1.bf16.msra.mxu0 %v2784
  %2854 = vmatprep.subr.bf16.mxu0 0
  %2855 = vmatpush1.bf16.msra.mxu0 %v2785
  %2856 = vmatprep.mubr.bf16.mxu0 %v2115
  %2857 = vmatmul.mubr.bf16.gmra.mrb[0].mxu0 %v2067
  %v2858 = vpop.f32.mrb[0].mxu0
  %v2859 = vadd.f32 0.0, %v2858
  %v2860 = vpop.f32.mrb[0].mxu0
  %v2861 = vpop.f32.mrb[0].mxu0
  %v2862 = vadd.f32 0.0, %v2861
  %v2863 = vpop.f32.mrb[0].mxu0
  %2864 = vmatprep.mubr.bf16.mxu0 %v2118
  %2865 = vmatmul.mubr.bf16.gmra.mrb[0].mxu0 %v2071
  %v2866 = vpop.f32.mrb[0].mxu0
  %v2867 = vadd.f32 0.0, %v2866
  %v2868 = vpop.f32.mrb[0].mxu0
  %v2869 = vpop.f32.mrb[0].mxu0
  %v2870 = vadd.f32 0.0, %v2869
  %v2871 = vpop.f32.mrb[0].mxu0
  %2872 = vmatprep.mubr.bf16.mxu0 %v2121
  %2873 = vmatmul.mubr.bf16.gmra.mrb[0].mxu0 %v2075
  %v2874 = vpop.f32.mrb[0].mxu0
  %v2875 = vadd.f32 0.0, %v2874
  %v2876 = vpop.f32.mrb[0].mxu0
  %v2877 = vpop.f32.mrb[0].mxu0
  %v2878 = vadd.f32 0.0, %v2877
  %v2879 = vpop.f32.mrb[0].mxu0
  %2880 = vmatprep.mubr.bf16.mxu0 %v2124
  %2881 = vmatmul.mubr.bf16.gmra.mrb[0].mxu0 %v2079
  %v2882 = vpop.f32.mrb[0].mxu0
  %v2883 = vadd.f32 0.0, %v2882
  %v2884 = vpop.f32.mrb[0].mxu0
  %v2885 = vpop.f32.mrb[0].mxu0
  %v2886 = vadd.f32 0.0, %v2885
  %v2887 = vpop.f32.mrb[0].mxu0
  %2888 = vmatprep.mubr.bf16.mxu0 %v2127
  %2889 = vmatmul.mubr.bf16.gmra.mrb[0].mxu0 %v2083
  %v2890 = vpop.f32.mrb[0].mxu0
  %v2891 = vadd.f32 0.0, %v2890
  %v2892 = vpop.f32.mrb[0].mxu0
  %v2893 = vpop.f32.mrb[0].mxu0
  %v2894 = vadd.f32 0.0, %v2893
  %v2895 = vpop.f32.mrb[0].mxu0
  %2896 = vmatprep.mubr.bf16.mxu0 %v2130
  %2897 = vmatmul.mubr.bf16.gmra.mrb[0].mxu0 %v2087
  %v2898 = vpop.f32.mrb[0].mxu0
  %v2899 = vadd.f32 0.0, %v2898
  %v2900 = vpop.f32.mrb[0].mxu0
  %v2901 = vpop.f32.mrb[0].mxu0
  %v2902 = vadd.f32 0.0, %v2901
  %v2903 = vpop.f32.mrb[0].mxu0
  %2904 = vmatprep.mubr.bf16.mxu0 %v2133
  %2905 = vmatmul.mubr.bf16.gmra.mrb[0].mxu0 %v2091
  %v2906 = vpop.f32.mrb[0].mxu0
  %v2907 = vadd.f32 0.0, %v2906
  %v2908 = vpop.f32.mrb[0].mxu0
  %v2909 = vpop.f32.mrb[0].mxu0
  %v2910 = vadd.f32 0.0, %v2909
  %v2911 = vpop.f32.mrb[0].mxu0
  %2912 = vmatprep.mubr.bf16.mxu0 %v2136
  %2913 = vmatmul.mubr.bf16.gmra.mrb[0].mxu0 %v2095
  %v2914 = vpop.f32.mrb[0].mxu0
  %v2915 = vadd.f32 0.0, %v2914
  %v2916 = vpop.f32.mrb[0].mxu0
  %v2917 = vpop.f32.mrb[0].mxu0
  %v2918 = vadd.f32 0.0, %v2917
  %v2919 = vpop.f32.mrb[0].mxu0
  %2920 = vdwg.mxu0
  %2921 = vmatprep.subr.bf16.mxu0 0
  %2922 = vmatpush1.bf16.msra.mxu0 %v2786
  %2923 = vmatprep.subr.bf16.mxu0 0
  %2924 = vmatpush1.bf16.msra.mxu0 %v2787
  %2925 = vmatprep.subr.bf16.mxu0 0
  %2926 = vmatpush1.bf16.msra.mxu0 %v2788
  %2927 = vmatprep.subr.bf16.mxu0 0
  %2928 = vmatpush1.bf16.msra.mxu0 %v2789
  %2929 = vmatprep.subr.bf16.mxu0 0
  %2930 = vmatpush1.bf16.msra.mxu0 %v2790
  %2931 = vmatprep.subr.bf16.mxu0 0
  %2932 = vmatpush1.bf16.msra.mxu0 %v2791
  %2933 = vmatprep.subr.bf16.mxu0 0
  %2934 = vmatpush1.bf16.msra.mxu0 %v2792
  %2935 = vmatprep.subr.bf16.mxu0 0
  %2936 = vmatpush1.bf16.msra.mxu0 %v2793
  %2937 = vmatprep.subr.bf16.mxu0 0
  %2938 = vmatpush1.bf16.msra.mxu0 %v2794
  %2939 = vmatprep.subr.bf16.mxu0 0
  %2940 = vmatpush1.bf16.msra.mxu0 %v2795
  %2941 = vmatprep.subr.bf16.mxu0 0
  %2942 = vmatpush1.bf16.msra.mxu0 %v2796
  %2943 = vmatprep.subr.bf16.mxu0 0
  %2944 = vmatpush1.bf16.msra.mxu0 0
  %2945 = vmatprep.subr.bf16.mxu0 0
  %2946 = vmatpush1.bf16.msra.mxu0 0
  %2947 = vmatprep.subr.bf16.mxu0 0
  %2948 = vmatpush1.bf16.msra.mxu0 0
  %2949 = vmatprep.subr.bf16.mxu0 0
  %2950 = vmatpush1.bf16.msra.mxu0 0
  %2951 = vmatprep.subr.bf16.mxu0 0
  %2952 = vmatpush1.bf16.msra.mxu0 0
  %2953 = vmatprep.mubr.bf16.mxu0 %v2397
  %2954 = vmatmul.mubr.bf16.gmra.mrb[0].mxu0 %v2157
  %v2955 = vpop.f32.mrb[0].mxu0
  %v2956 = vadd.f32 %v2859, %v2955
  %v2957 = vpop.f32.mrb[0].mxu0
  %v2958 = vpop.f32.mrb[0].mxu0
  %v2959 = vadd.f32 %v2862, %v2958
  %v2960 = vpop.f32.mrb[0].mxu0
  %2961 = vmatprep.mubr.bf16.mxu0 %v2399
  %2962 = vmatmul.mubr.bf16.gmra.mrb[0].mxu0 %v2160
  %v2963 = vpop.f32.mrb[0].mxu0
  %v2964 = vadd.f32 %v2867, %v2963
  %v2965 = vpop.f32.mrb[0].mxu0
  %v2966 = vpop.f32.mrb[0].mxu0
  %v2967 = vadd.f32 %v2870, %v2966
  %v2968 = vpop.f32.mrb[0].mxu0
  %2969 = vmatprep.mubr.bf16.mxu0 %v2401
  %2970 = vmatmul.mubr.bf16.gmra.mrb[0].mxu0 %v2163
  %v2971 = vpop.f32.mrb[0].mxu0
  %v2972 = vadd.f32 %v2875, %v2971
  %v2973 = vpop.f32.mrb[0].mxu0
  %v2974 = vpop.f32.mrb[0].mxu0
  %v2975 = vadd.f32 %v2878, %v2974
  %v2976 = vpop.f32.mrb[0].mxu0
  %2977 = vmatprep.mubr.bf16.mxu0 %v2403
  %2978 = vmatmul.mubr.bf16.gmra.mrb[0].mxu0 %v2166
  %v2979 = vpop.f32.mrb[0].mxu0
  %v2980 = vadd.f32 %v2883, %v2979
  %v2981 = vpop.f32.mrb[0].mxu0
  %v2982 = vpop.f32.mrb[0].mxu0
  %v2983 = vadd.f32 %v2886, %v2982
  %v2984 = vpop.f32.mrb[0].mxu0
  %2985 = vmatprep.mubr.bf16.mxu0 %v2405
  %2986 = vmatmul.mubr.bf16.gmra.mrb[0].mxu0 %v2169
  %v2987 = vpop.f32.mrb[0].mxu0
  %v2988 = vadd.f32 %v2891, %v2987
  %v2989 = vpop.f32.mrb[0].mxu0
  %v2990 = vpop.f32.mrb[0].mxu0
  %v2991 = vadd.f32 %v2894, %v2990
  %v2992 = vpop.f32.mrb[0].mxu0
  %2993 = vmatprep.mubr.bf16.mxu0 %v2407
  %2994 = vmatmul.mubr.bf16.gmra.mrb[0].mxu0 %v2172
  %v2995 = vpop.f32.mrb[0].mxu0
  %v2996 = vadd.f32 %v2899, %v2995
  %v2997 = vpop.f32.mrb[0].mxu0
  %v2998 = vpop.f32.mrb[0].mxu0
  %v2999 = vadd.f32 %v2902, %v2998
  %v3000 = vpop.f32.mrb[0].mxu0
  %3001 = vmatprep.mubr.bf16.mxu0 %v2409
  %3002 = vmatmul.mubr.bf16.gmra.mrb[0].mxu0 %v2175
  %v3003 = vpop.f32.mrb[0].mxu0
  %v3004 = vadd.f32 %v2907, %v3003
  %v3005 = vpop.f32.mrb[0].mxu0
  %v3006 = vpop.f32.mrb[0].mxu0
  %v3007 = vadd.f32 %v2910, %v3006
  %v3008 = vpop.f32.mrb[0].mxu0
  %3009 = vmatprep.mubr.bf16.mxu0 %v2411
  %3010 = vmatmul.mubr.bf16.gmra.mrb[0].mxu0 %v2178
  %v3011 = vpop.f32.mrb[0].mxu0
  %v3012 = vadd.f32 %v2915, %v3011
  %v3013 = vpop.f32.mrb[0].mxu0
  %v3014 = vpop.f32.mrb[0].mxu0
  %v3015 = vadd.f32 %v2918, %v3014
  %v3016 = vpop.f32.mrb[0].mxu0
  %3017 = vdwg.mxu0
  %s3018 = scalar_lea.vmem %s3, 432
  %v3019 = vld [vmem:[%s3018] sm:$0xf]
  %v3020 = vld [vmem:[%s3018 + $0x4] sm:$0xf]
  %v3021 = vld [vmem:[%s3018 + $0x8] sm:$0xf]
  %v3022 = vld [vmem:[%s3018 + $0xc] sm:$0xf]
  %v3023 = vld [vmem:[%s3018 + $0x10] sm:$0xf]
  %v3024 = vld [vmem:[%s3018 + $0x14] sm:$0xf]
  %v3025 = vld [vmem:[%s3018 + $0x18] sm:$0xf]
  %v3026 = vld [vmem:[%s3018 + $0x1c] sm:$0xf]
  %v3027 = vld [vmem:[%s3018 + $0x20] sm:$0xf]
  %v3028 = vld [vmem:[%s3018 + $0x24] sm:$0xf]
  %v3029 = vld [vmem:[%s3018 + $0x28] sm:$0xf]
  %v3030 = vld [vmem:[%s3018 + $0x2c] sm:$0xf]
  %v3031 = vld [vmem:[%s3018 + $0x30] sm:$0xf]
  %v3032 = vld [vmem:[%s3018 + $0x34] sm:$0xf]
  %v3033 = vld [vmem:[%s3018 + $0x38] sm:$0xf]
  %v3034 = vld [vmem:[%s3018 + $0x3c] sm:$0xf]
  %v3035 = vld [vmem:[%s3018 + $0x40] sm:$0xf]
  %v3036 = vld [vmem:[%s3018 + $0x44] sm:$0xf]
  %v3037 = vld [vmem:[%s3018 + $0x48] sm:$0xf]
  %v3038 = vld [vmem:[%s3018 + $0x4c] sm:$0xf]
  %v3039 = vld [vmem:[%s3018 + $0x50] sm:$0xf]
  %v3040 = vld [vmem:[%s3018 + $0x54] sm:$0xf]
  %v3041 = vld [vmem:[%s3018 + $0x58] sm:$0xf]
  %v3042 = vld [vmem:[%s3018 + $0x5c] sm:$0xf]
  %v3043 = vld [vmem:[%s3018 + $0x60] sm:$0xf]
  %v3044 = vld [vmem:[%s3018 + $0x64] sm:$0xf]
  %v3045 = vld [vmem:[%s3018 + $0x68] sm:$0xf]
  %v3046 = vld [vmem:[%s3018 + $0x6c] sm:$0xf]
  %v3047 = vld [vmem:[%s3018 + $0x70] sm:$0xf]
  %v3048 = vld [vmem:[%s3018 + $0x74] sm:$0xf]
  %v3049 = vld [vmem:[%s3018 + $0x78] sm:$0xf]
  %v3050 = vld [vmem:[%s3018 + $0x7c] sm:$0xf]
  %v3051 = vld [vmem:[%s3018 + $0x80] sm:$0xf]
  %v3052 = vld [vmem:[%s3018 + $0x84] sm:$0xf]
  %v3053 = vld [vmem:[%s3018 + $0x88] sm:$0xf]
  %v3054 = vld [vmem:[%s3018 + $0x8c] sm:$0xf]
  %v3055 = vld [vmem:[%s3018 + $0x90] sm:$0xf]
  %v3056 = vld [vmem:[%s3018 + $0x94] sm:$0xf]
  %v3057 = vld [vmem:[%s3018 + $0x98] sm:$0xf]
  %v3058 = vld [vmem:[%s3018 + $0x9c] sm:$0xf]
  %v3059 = vld [vmem:[%s3018 + $0xa0] sm:$0xf]
  %v3060 = vld [vmem:[%s3018 + $0xa4] sm:$0xf]
  %v3061 = vld [vmem:[%s3018 + $0xa8] sm:$0xf]
  %v3062 = vld [vmem:[%s3018 + $0xac] sm:$0xf]
  %v3063 = vld [vmem:[%s3018 + $0xb0] sm:$0xf]
  %v3064 = vld [vmem:[%s3018 + $0xb4] sm:$0xf]
  %v3065 = vld [vmem:[%s3018 + $0xb8] sm:$0xf]
  %v3066 = vld [vmem:[%s3018 + $0xbc] sm:$0xf]
  %v3067 = vld [vmem:[%s3018 + $0xc0] sm:$0xf]
  %v3068 = vld [vmem:[%s3018 + $0xc4] sm:$0xf]
  %v3069 = vld [vmem:[%s3018 + $0xc8] sm:$0xf]
  %v3070 = vld [vmem:[%s3018 + $0xcc] sm:$0xf]
  %v3071 = vld [vmem:[%s3018 + $0xd0] sm:$0xf]
  %v3072 = vld [vmem:[%s3018 + $0xd4] sm:$0xf]
  %v3127 = vunpack.c.l.b16 %v3019
  %v3128 = vunpack.c.l.b16 %v3020
  %v3129 = vunpack.c.l.b16 %v3021
  %v3130 = vunpack.c.l.b16 %v3022
  %v3131 = vunpack.c.l.b16 %v3023
  %v3132 = vunpack.c.l.b16 %v3024
  %v3133 = vunpack.c.l.b16 %v3025
  %v3134 = vunpack.c.l.b16 %v3026
  %v3135 = vunpack.c.l.b16 %v3027
  %v3136 = vunpack.c.l.b16 %v3028
  %v3137 = vunpack.c.l.b16 %v3029
  %v3138 = vunpack.c.l.b16 %v3030
  %v3139 = vunpack.c.l.b16 %v3031
  %v3140 = vunpack.c.l.b16 %v3032
  %v3141 = vunpack.c.l.b16 %v3033
  %v3142 = vunpack.c.l.b16 %v3034
  %v3143 = vunpack.c.l.b16 %v3035
  %v3144 = vunpack.c.l.b16 %v3036
  %v3145 = vunpack.c.l.b16 %v3037
  %v3146 = vunpack.c.l.b16 %v3038
  %v3147 = vunpack.c.l.b16 %v3039
  %v3148 = vunpack.c.l.b16 %v3040
  %v3149 = vunpack.c.l.b16 %v3041
  %v3150 = vunpack.c.l.b16 %v3042
  %v3151 = vunpack.c.l.b16 %v3043
  %v3152 = vunpack.c.l.b16 %v3044
  %v3153 = vunpack.c.l.b16 %v3045
  %v3154 = vunpack.c.l.b16 %v3046
  %v3155 = vunpack.c.l.b16 %v3047
  %v3156 = vunpack.c.l.b16 %v3048
  %v3157 = vunpack.c.l.b16 %v3049
  %v3158 = vunpack.c.l.b16 %v3050
  %v3159 = vunpack.c.l.b16 %v3051
  %v3160 = vunpack.c.l.b16 %v3052
  %v3161 = vunpack.c.l.b16 %v3053
  %v3162 = vunpack.c.l.b16 %v3054
  %v3163 = vunpack.c.l.b16 %v3055
  %v3164 = vunpack.c.l.b16 %v3056
  %v3165 = vunpack.c.l.b16 %v3057
  %v3166 = vunpack.c.l.b16 %v3058
  %v3167 = vunpack.c.l.b16 %v3059
  %v3168 = vunpack.c.l.b16 %v3060
  %v3169 = vunpack.c.l.b16 %v3061
  %v3170 = vunpack.c.l.b16 %v3062
  %v3171 = vunpack.c.l.b16 %v3063
  %v3172 = vunpack.c.l.b16 %v3064
  %v3173 = vunpack.c.l.b16 %v3065
  %v3174 = vunpack.c.l.b16 %v3066
  %v3175 = vunpack.c.l.b16 %v3067
  %v3176 = vunpack.c.l.b16 %v3068
  %v3177 = vunpack.c.l.b16 %v3069
  %v3178 = vunpack.c.l.b16 %v3070
  %v3179 = vunpack.c.l.b16 %v3071
  %v3180 = vunpack.c.l.b16 %v3072
  %v3181 = vpack.c.b16 %v3128, %v3127
  %v3182 = vpack.c.b16 %v3130, %v3129
  %v3183 = vpack.c.b16 %v3132, %v3131
  %v3184 = vpack.c.b16 %v3134, %v3133
  %v3185 = vpack.c.b16 %v3136, %v3135
  %v3186 = vpack.c.b16 %v3138, %v3137
  %v3187 = vpack.c.b16 %v3140, %v3139
  %v3188 = vpack.c.b16 %v3142, %v3141
  %v3189 = vpack.c.b16 %v3144, %v3143
  %v3190 = vpack.c.b16 %v3146, %v3145
  %v3191 = vpack.c.b16 %v3148, %v3147
  %v3192 = vpack.c.b16 %v3150, %v3149
  %v3193 = vpack.c.b16 %v3152, %v3151
  %v3194 = vpack.c.b16 %v3154, %v3153
  %v3195 = vpack.c.b16 %v3156, %v3155
  %v3196 = vpack.c.b16 %v3158, %v3157
  %v3197 = vpack.c.b16 %v3160, %v3159
  %v3198 = vpack.c.b16 %v3162, %v3161
  %v3199 = vpack.c.b16 %v3164, %v3163
  %v3200 = vpack.c.b16 %v3166, %v3165
  %v3201 = vpack.c.b16 %v3168, %v3167
  %v3202 = vpack.c.b16 %v3170, %v3169
  %v3203 = vpack.c.b16 %v3172, %v3171
  %v3204 = vpack.c.b16 %v3174, %v3173
  %v3205 = vpack.c.b16 %v3176, %v3175
  %v3206 = vpack.c.b16 %v3178, %v3177
  %v3207 = vpack.c.b16 %v3180, %v3179
  %3235 = vmatprep.subr.bf16.mxu0 0
  %3236 = vmatpush1.bf16.msra.mxu0 %v3181
  %3237 = vmatprep.subr.bf16.mxu0 0
  %3238 = vmatpush1.bf16.msra.mxu0 %v3182
  %3239 = vmatprep.subr.bf16.mxu0 0
  %3240 = vmatpush1.bf16.msra.mxu0 %v3183
  %3241 = vmatprep.subr.bf16.mxu0 0
  %3242 = vmatpush1.bf16.msra.mxu0 %v3184
  %3243 = vmatprep.subr.bf16.mxu0 0
  %3244 = vmatpush1.bf16.msra.mxu0 %v3185
  %3245 = vmatprep.subr.bf16.mxu0 0
  %3246 = vmatpush1.bf16.msra.mxu0 %v3186
  %3247 = vmatprep.subr.bf16.mxu0 0
  %3248 = vmatpush1.bf16.msra.mxu0 %v3187
  %3249 = vmatprep.subr.bf16.mxu0 0
  %3250 = vmatpush1.bf16.msra.mxu0 %v3188
  %3251 = vmatprep.subr.bf16.mxu0 0
  %3252 = vmatpush1.bf16.msra.mxu0 %v3189
  %3253 = vmatprep.subr.bf16.mxu0 0
  %3254 = vmatpush1.bf16.msra.mxu0 %v3190
  %3255 = vmatprep.subr.bf16.mxu0 0
  %3256 = vmatpush1.bf16.msra.mxu0 %v3191
  %3257 = vmatprep.subr.bf16.mxu0 0
  %3258 = vmatpush1.bf16.msra.mxu0 %v3192
  %3259 = vmatprep.subr.bf16.mxu0 0
  %3260 = vmatpush1.bf16.msra.mxu0 %v3193
  %3261 = vmatprep.subr.bf16.mxu0 0
  %3262 = vmatpush1.bf16.msra.mxu0 %v3194
  %3263 = vmatprep.subr.bf16.mxu0 0
  %3264 = vmatpush1.bf16.msra.mxu0 %v3195
  %3265 = vmatprep.subr.bf16.mxu0 0
  %3266 = vmatpush1.bf16.msra.mxu0 %v3196
  %3267 = vmatprep.mubr.bf16.mxu0 %v2115
  %3268 = vmatmul.mubr.bf16.gmra.mrb[0].mxu0 %v2067
  %v3269 = vpop.f32.mrb[0].mxu0
  %v3270 = vadd.f32 0.0, %v3269
  %v3271 = vpop.f32.mrb[0].mxu0
  %v3272 = vpop.f32.mrb[0].mxu0
  %v3273 = vadd.f32 0.0, %v3272
  %v3274 = vpop.f32.mrb[0].mxu0
  %3275 = vmatprep.mubr.bf16.mxu0 %v2118
  %3276 = vmatmul.mubr.bf16.gmra.mrb[0].mxu0 %v2071
  %v3277 = vpop.f32.mrb[0].mxu0
  %v3278 = vadd.f32 0.0, %v3277
  %v3279 = vpop.f32.mrb[0].mxu0
  %v3280 = vpop.f32.mrb[0].mxu0
  %v3281 = vadd.f32 0.0, %v3280
  %v3282 = vpop.f32.mrb[0].mxu0
  %3283 = vmatprep.mubr.bf16.mxu0 %v2121
  %3284 = vmatmul.mubr.bf16.gmra.mrb[0].mxu0 %v2075
  %v3285 = vpop.f32.mrb[0].mxu0
  %v3286 = vadd.f32 0.0, %v3285
  %v3287 = vpop.f32.mrb[0].mxu0
  %v3288 = vpop.f32.mrb[0].mxu0
  %v3289 = vadd.f32 0.0, %v3288
  %v3290 = vpop.f32.mrb[0].mxu0
  %3291 = vmatprep.mubr.bf16.mxu0 %v2124
  %3292 = vmatmul.mubr.bf16.gmra.mrb[0].mxu0 %v2079
  %v3293 = vpop.f32.mrb[0].mxu0
  %v3294 = vadd.f32 0.0, %v3293
  %v3295 = vpop.f32.mrb[0].mxu0
  %v3296 = vpop.f32.mrb[0].mxu0
  %v3297 = vadd.f32 0.0, %v3296
  %v3298 = vpop.f32.mrb[0].mxu0
  %3299 = vmatprep.mubr.bf16.mxu0 %v2127
  %3300 = vmatmul.mubr.bf16.gmra.mrb[0].mxu0 %v2083
  %v3301 = vpop.f32.mrb[0].mxu0
  %v3302 = vadd.f32 0.0, %v3301
  %v3303 = vpop.f32.mrb[0].mxu0
  %v3304 = vpop.f32.mrb[0].mxu0
  %v3305 = vadd.f32 0.0, %v3304
  %v3306 = vpop.f32.mrb[0].mxu0
  %3307 = vmatprep.mubr.bf16.mxu0 %v2130
  %3308 = vmatmul.mubr.bf16.gmra.mrb[0].mxu0 %v2087
  %v3309 = vpop.f32.mrb[0].mxu0
  %v3310 = vadd.f32 0.0, %v3309
  %v3311 = vpop.f32.mrb[0].mxu0
  %v3312 = vpop.f32.mrb[0].mxu0
  %v3313 = vadd.f32 0.0, %v3312
  %v3314 = vpop.f32.mrb[0].mxu0
  %3315 = vmatprep.mubr.bf16.mxu0 %v2133
  %3316 = vmatmul.mubr.bf16.gmra.mrb[0].mxu0 %v2091
  %v3317 = vpop.f32.mrb[0].mxu0
  %v3318 = vadd.f32 0.0, %v3317
  %v3319 = vpop.f32.mrb[0].mxu0
  %v3320 = vpop.f32.mrb[0].mxu0
  %v3321 = vadd.f32 0.0, %v3320
  %v3322 = vpop.f32.mrb[0].mxu0
  %3323 = vmatprep.mubr.bf16.mxu0 %v2136
  %3324 = vmatmul.mubr.bf16.gmra.mrb[0].mxu0 %v2095
  %v3325 = vpop.f32.mrb[0].mxu0
  %v3326 = vadd.f32 0.0, %v3325
  %v3327 = vpop.f32.mrb[0].mxu0
  %v3328 = vpop.f32.mrb[0].mxu0
  %v3329 = vadd.f32 0.0, %v3328
  %v3330 = vpop.f32.mrb[0].mxu0
  %3331 = vdwg.mxu0
  %3332 = vmatprep.subr.bf16.mxu0 0
  %3333 = vmatpush1.bf16.msra.mxu0 %v3197
  %3334 = vmatprep.subr.bf16.mxu0 0
  %3335 = vmatpush1.bf16.msra.mxu0 %v3198
  %3336 = vmatprep.subr.bf16.mxu0 0
  %3337 = vmatpush1.bf16.msra.mxu0 %v3199
  %3338 = vmatprep.subr.bf16.mxu0 0
  %3339 = vmatpush1.bf16.msra.mxu0 %v3200
  %3340 = vmatprep.subr.bf16.mxu0 0
  %3341 = vmatpush1.bf16.msra.mxu0 %v3201
  %3342 = vmatprep.subr.bf16.mxu0 0
  %3343 = vmatpush1.bf16.msra.mxu0 %v3202
  %3344 = vmatprep.subr.bf16.mxu0 0
  %3345 = vmatpush1.bf16.msra.mxu0 %v3203
  %3346 = vmatprep.subr.bf16.mxu0 0
  %3347 = vmatpush1.bf16.msra.mxu0 %v3204
  %3348 = vmatprep.subr.bf16.mxu0 0
  %3349 = vmatpush1.bf16.msra.mxu0 %v3205
  %3350 = vmatprep.subr.bf16.mxu0 0
  %3351 = vmatpush1.bf16.msra.mxu0 %v3206
  %3352 = vmatprep.subr.bf16.mxu0 0
  %3353 = vmatpush1.bf16.msra.mxu0 %v3207
  %3354 = vmatprep.subr.bf16.mxu0 0
  %3355 = vmatpush1.bf16.msra.mxu0 0
  %3356 = vmatprep.subr.bf16.mxu0 0
  %3357 = vmatpush1.bf16.msra.mxu0 0
  %3358 = vmatprep.subr.bf16.mxu0 0
  %3359 = vmatpush1.bf16.msra.mxu0 0
  %3360 = vmatprep.subr.bf16.mxu0 0
  %3361 = vmatpush1.bf16.msra.mxu0 0
  %3362 = vmatprep.subr.bf16.mxu0 0
  %3363 = vmatpush1.bf16.msra.mxu0 0
  %3364 = vmatprep.mubr.bf16.mxu0 %v2397
  %3365 = vmatmul.mubr.bf16.gmra.mrb[0].mxu0 %v2157
  %v3366 = vpop.f32.mrb[0].mxu0
  %v3367 = vadd.f32 %v3270, %v3366
  %v3368 = vpop.f32.mrb[0].mxu0
  %v3369 = vpop.f32.mrb[0].mxu0
  %v3370 = vadd.f32 %v3273, %v3369
  %v3371 = vpop.f32.mrb[0].mxu0
  %3372 = vmatprep.mubr.bf16.mxu0 %v2399
  %3373 = vmatmul.mubr.bf16.gmra.mrb[0].mxu0 %v2160
  %v3374 = vpop.f32.mrb[0].mxu0
  %v3375 = vadd.f32 %v3278, %v3374
  %v3376 = vpop.f32.mrb[0].mxu0
  %v3377 = vpop.f32.mrb[0].mxu0
  %v3378 = vadd.f32 %v3281, %v3377
  %v3379 = vpop.f32.mrb[0].mxu0
  %3380 = vmatprep.mubr.bf16.mxu0 %v2401
  %3381 = vmatmul.mubr.bf16.gmra.mrb[0].mxu0 %v2163
  %v3382 = vpop.f32.mrb[0].mxu0
  %v3383 = vadd.f32 %v3286, %v3382
  %v3384 = vpop.f32.mrb[0].mxu0
  %v3385 = vpop.f32.mrb[0].mxu0
  %v3386 = vadd.f32 %v3289, %v3385
  %v3387 = vpop.f32.mrb[0].mxu0
  %3388 = vmatprep.mubr.bf16.mxu0 %v2403
  %3389 = vmatmul.mubr.bf16.gmra.mrb[0].mxu0 %v2166
  %v3390 = vpop.f32.mrb[0].mxu0
  %v3391 = vadd.f32 %v3294, %v3390
  %v3392 = vpop.f32.mrb[0].mxu0
  %v3393 = vpop.f32.mrb[0].mxu0
  %v3394 = vadd.f32 %v3297, %v3393
  %v3395 = vpop.f32.mrb[0].mxu0
  %3396 = vmatprep.mubr.bf16.mxu0 %v2405
  %3397 = vmatmul.mubr.bf16.gmra.mrb[0].mxu0 %v2169
  %v3398 = vpop.f32.mrb[0].mxu0
  %v3399 = vadd.f32 %v3302, %v3398
  %v3400 = vpop.f32.mrb[0].mxu0
  %v3401 = vpop.f32.mrb[0].mxu0
  %v3402 = vadd.f32 %v3305, %v3401
  %v3403 = vpop.f32.mrb[0].mxu0
  %3404 = vmatprep.mubr.bf16.mxu0 %v2407
  %3405 = vmatmul.mubr.bf16.gmra.mrb[0].mxu0 %v2172
  %v3406 = vpop.f32.mrb[0].mxu0
  %v3407 = vadd.f32 %v3310, %v3406
  %v3408 = vpop.f32.mrb[0].mxu0
  %v3409 = vpop.f32.mrb[0].mxu0
  %v3410 = vadd.f32 %v3313, %v3409
  %v3411 = vpop.f32.mrb[0].mxu0
  %3412 = vmatprep.mubr.bf16.mxu0 %v2409
  %3413 = vmatmul.mubr.bf16.gmra.mrb[0].mxu0 %v2175
  %v3414 = vpop.f32.mrb[0].mxu0
  %v3415 = vadd.f32 %v3318, %v3414
  %v3416 = vpop.f32.mrb[0].mxu0
  %v3417 = vpop.f32.mrb[0].mxu0
  %v3418 = vadd.f32 %v3321, %v3417
  %v3419 = vpop.f32.mrb[0].mxu0
  %3420 = vmatprep.mubr.bf16.mxu0 %v2411
  %3421 = vmatmul.mubr.bf16.gmra.mrb[0].mxu0 %v2178
  %v3422 = vpop.f32.mrb[0].mxu0
  %v3423 = vadd.f32 %v3326, %v3422
  %v3424 = vpop.f32.mrb[0].mxu0
  %v3425 = vpop.f32.mrb[0].mxu0
  %v3426 = vadd.f32 %v3329, %v3425
  %v3427 = vpop.f32.mrb[0].mxu0
  %3428 = vdwg.mxu0
  %s3429 = scalar_lea.vmem %s3, 648
  %v3430 = vld [vmem:[%s3429] sm:$0xf]
  %v3431 = vld [vmem:[%s3429 + $0x4] sm:$0xf]
  %v3432 = vld [vmem:[%s3429 + $0x8] sm:$0xf]
  %v3433 = vld [vmem:[%s3429 + $0xc] sm:$0xf]
  %v3434 = vld [vmem:[%s3429 + $0x10] sm:$0xf]
  %v3435 = vld [vmem:[%s3429 + $0x14] sm:$0xf]
  %v3436 = vld [vmem:[%s3429 + $0x18] sm:$0xf]
  %v3437 = vld [vmem:[%s3429 + $0x1c] sm:$0xf]
  %v3438 = vld [vmem:[%s3429 + $0x20] sm:$0xf]
  %v3439 = vld [vmem:[%s3429 + $0x24] sm:$0xf]
  %v3440 = vld [vmem:[%s3429 + $0x28] sm:$0xf]
  %v3441 = vld [vmem:[%s3429 + $0x2c] sm:$0xf]
  %v3442 = vld [vmem:[%s3429 + $0x30] sm:$0xf]
  %v3443 = vld [vmem:[%s3429 + $0x34] sm:$0xf]
  %v3444 = vld [vmem:[%s3429 + $0x38] sm:$0xf]
  %v3445 = vld [vmem:[%s3429 + $0x3c] sm:$0xf]
  %v3446 = vld [vmem:[%s3429 + $0x40] sm:$0xf]
  %v3447 = vld [vmem:[%s3429 + $0x44] sm:$0xf]
  %v3448 = vld [vmem:[%s3429 + $0x48] sm:$0xf]
  %v3449 = vld [vmem:[%s3429 + $0x4c] sm:$0xf]
  %v3450 = vld [vmem:[%s3429 + $0x50] sm:$0xf]
  %v3451 = vld [vmem:[%s3429 + $0x54] sm:$0xf]
  %v3452 = vld [vmem:[%s3429 + $0x58] sm:$0xf]
  %v3453 = vld [vmem:[%s3429 + $0x5c] sm:$0xf]
  %v3454 = vld [vmem:[%s3429 + $0x60] sm:$0xf]
  %v3455 = vld [vmem:[%s3429 + $0x64] sm:$0xf]
  %v3456 = vld [vmem:[%s3429 + $0x68] sm:$0xf]
  %v3457 = vld [vmem:[%s3429 + $0x6c] sm:$0xf]
  %v3458 = vld [vmem:[%s3429 + $0x70] sm:$0xf]
  %v3459 = vld [vmem:[%s3429 + $0x74] sm:$0xf]
  %v3460 = vld [vmem:[%s3429 + $0x78] sm:$0xf]
  %v3461 = vld [vmem:[%s3429 + $0x7c] sm:$0xf]
  %v3462 = vld [vmem:[%s3429 + $0x80] sm:$0xf]
  %v3463 = vld [vmem:[%s3429 + $0x84] sm:$0xf]
  %v3464 = vld [vmem:[%s3429 + $0x88] sm:$0xf]
  %v3465 = vld [vmem:[%s3429 + $0x8c] sm:$0xf]
  %v3466 = vld [vmem:[%s3429 + $0x90] sm:$0xf]
  %v3467 = vld [vmem:[%s3429 + $0x94] sm:$0xf]
  %v3468 = vld [vmem:[%s3429 + $0x98] sm:$0xf]
  %v3469 = vld [vmem:[%s3429 + $0x9c] sm:$0xf]
  %v3470 = vld [vmem:[%s3429 + $0xa0] sm:$0xf]
  %v3471 = vld [vmem:[%s3429 + $0xa4] sm:$0xf]
  %v3472 = vld [vmem:[%s3429 + $0xa8] sm:$0xf]
  %v3473 = vld [vmem:[%s3429 + $0xac] sm:$0xf]
  %v3474 = vld [vmem:[%s3429 + $0xb0] sm:$0xf]
  %v3475 = vld [vmem:[%s3429 + $0xb4] sm:$0xf]
  %v3476 = vld [vmem:[%s3429 + $0xb8] sm:$0xf]
  %v3477 = vld [vmem:[%s3429 + $0xbc] sm:$0xf]
  %v3478 = vld [vmem:[%s3429 + $0xc0] sm:$0xf]
  %v3479 = vld [vmem:[%s3429 + $0xc4] sm:$0xf]
  %v3480 = vld [vmem:[%s3429 + $0xc8] sm:$0xf]
  %v3481 = vld [vmem:[%s3429 + $0xcc] sm:$0xf]
  %v3482 = vld [vmem:[%s3429 + $0xd0] sm:$0xf]
  %v3483 = vld [vmem:[%s3429 + $0xd4] sm:$0xf]
  %v3538 = vunpack.c.l.b16 %v3430
  %v3539 = vunpack.c.l.b16 %v3431
  %v3540 = vunpack.c.l.b16 %v3432
  %v3541 = vunpack.c.l.b16 %v3433
  %v3542 = vunpack.c.l.b16 %v3434
  %v3543 = vunpack.c.l.b16 %v3435
  %v3544 = vunpack.c.l.b16 %v3436
  %v3545 = vunpack.c.l.b16 %v3437
  %v3546 = vunpack.c.l.b16 %v3438
  %v3547 = vunpack.c.l.b16 %v3439
  %v3548 = vunpack.c.l.b16 %v3440
  %v3549 = vunpack.c.l.b16 %v3441
  %v3550 = vunpack.c.l.b16 %v3442
  %v3551 = vunpack.c.l.b16 %v3443
  %v3552 = vunpack.c.l.b16 %v3444
  %v3553 = vunpack.c.l.b16 %v3445
  %v3554 = vunpack.c.l.b16 %v3446
  %v3555 = vunpack.c.l.b16 %v3447
  %v3556 = vunpack.c.l.b16 %v3448
  %v3557 = vunpack.c.l.b16 %v3449
  %v3558 = vunpack.c.l.b16 %v3450
  %v3559 = vunpack.c.l.b16 %v3451
  %v3560 = vunpack.c.l.b16 %v3452
  %v3561 = vunpack.c.l.b16 %v3453
  %v3562 = vunpack.c.l.b16 %v3454
  %v3563 = vunpack.c.l.b16 %v3455
  %v3564 = vunpack.c.l.b16 %v3456
  %v3565 = vunpack.c.l.b16 %v3457
  %v3566 = vunpack.c.l.b16 %v3458
  %v3567 = vunpack.c.l.b16 %v3459
  %v3568 = vunpack.c.l.b16 %v3460
  %v3569 = vunpack.c.l.b16 %v3461
  %v3570 = vunpack.c.l.b16 %v3462
  %v3571 = vunpack.c.l.b16 %v3463
  %v3572 = vunpack.c.l.b16 %v3464
  %v3573 = vunpack.c.l.b16 %v3465
  %v3574 = vunpack.c.l.b16 %v3466
  %v3575 = vunpack.c.l.b16 %v3467
  %v3576 = vunpack.c.l.b16 %v3468
  %v3577 = vunpack.c.l.b16 %v3469
  %v3578 = vunpack.c.l.b16 %v3470
  %v3579 = vunpack.c.l.b16 %v3471
  %v3580 = vunpack.c.l.b16 %v3472
  %v3581 = vunpack.c.l.b16 %v3473
  %v3582 = vunpack.c.l.b16 %v3474
  %v3583 = vunpack.c.l.b16 %v3475
  %v3584 = vunpack.c.l.b16 %v3476
  %v3585 = vunpack.c.l.b16 %v3477
  %v3586 = vunpack.c.l.b16 %v3478
  %v3587 = vunpack.c.l.b16 %v3479
  %v3588 = vunpack.c.l.b16 %v3480
  %v3589 = vunpack.c.l.b16 %v3481
  %v3590 = vunpack.c.l.b16 %v3482
  %v3591 = vunpack.c.l.b16 %v3483
  %v3592 = vpack.c.b16 %v3539, %v3538
  %v3593 = vpack.c.b16 %v3541, %v3540
  %v3594 = vpack.c.b16 %v3543, %v3542
  %v3595 = vpack.c.b16 %v3545, %v3544
  %v3596 = vpack.c.b16 %v3547, %v3546
  %v3597 = vpack.c.b16 %v3549, %v3548
  %v3598 = vpack.c.b16 %v3551, %v3550
  %v3599 = vpack.c.b16 %v3553, %v3552
  %v3600 = vpack.c.b16 %v3555, %v3554
  %v3601 = vpack.c.b16 %v3557, %v3556
  %v3602 = vpack.c.b16 %v3559, %v3558
  %v3603 = vpack.c.b16 %v3561, %v3560
  %v3604 = vpack.c.b16 %v3563, %v3562
  %v3605 = vpack.c.b16 %v3565, %v3564
  %v3606 = vpack.c.b16 %v3567, %v3566
  %v3607 = vpack.c.b16 %v3569, %v3568
  %v3608 = vpack.c.b16 %v3571, %v3570
  %v3609 = vpack.c.b16 %v3573, %v3572
  %v3610 = vpack.c.b16 %v3575, %v3574
  %v3611 = vpack.c.b16 %v3577, %v3576
  %v3612 = vpack.c.b16 %v3579, %v3578
  %v3613 = vpack.c.b16 %v3581, %v3580
  %v3614 = vpack.c.b16 %v3583, %v3582
  %v3615 = vpack.c.b16 %v3585, %v3584
  %v3616 = vpack.c.b16 %v3587, %v3586
  %v3617 = vpack.c.b16 %v3589, %v3588
  %v3618 = vpack.c.b16 %v3591, %v3590
  %3646 = vmatprep.subr.bf16.mxu0 0
  %3647 = vmatpush1.bf16.msra.mxu0 %v3592
  %3648 = vmatprep.subr.bf16.mxu0 0
  %3649 = vmatpush1.bf16.msra.mxu0 %v3593
  %3650 = vmatprep.subr.bf16.mxu0 0
  %3651 = vmatpush1.bf16.msra.mxu0 %v3594
  %3652 = vmatprep.subr.bf16.mxu0 0
  %3653 = vmatpush1.bf16.msra.mxu0 %v3595
  %3654 = vmatprep.subr.bf16.mxu0 0
  %3655 = vmatpush1.bf16.msra.mxu0 %v3596
  %3656 = vmatprep.subr.bf16.mxu0 0
  %3657 = vmatpush1.bf16.msra.mxu0 %v3597
  %3658 = vmatprep.subr.bf16.mxu0 0
  %3659 = vmatpush1.bf16.msra.mxu0 %v3598
  %3660 = vmatprep.subr.bf16.mxu0 0
  %3661 = vmatpush1.bf16.msra.mxu0 %v3599
  %3662 = vmatprep.subr.bf16.mxu0 0
  %3663 = vmatpush1.bf16.msra.mxu0 %v3600
  %3664 = vmatprep.subr.bf16.mxu0 0
  %3665 = vmatpush1.bf16.msra.mxu0 %v3601
  %3666 = vmatprep.subr.bf16.mxu0 0
  %3667 = vmatpush1.bf16.msra.mxu0 %v3602
  %3668 = vmatprep.subr.bf16.mxu0 0
  %3669 = vmatpush1.bf16.msra.mxu0 %v3603
  %3670 = vmatprep.subr.bf16.mxu0 0
  %3671 = vmatpush1.bf16.msra.mxu0 %v3604
  %3672 = vmatprep.subr.bf16.mxu0 0
  %3673 = vmatpush1.bf16.msra.mxu0 %v3605
  %3674 = vmatprep.subr.bf16.mxu0 0
  %3675 = vmatpush1.bf16.msra.mxu0 %v3606
  %3676 = vmatprep.subr.bf16.mxu0 0
  %3677 = vmatpush1.bf16.msra.mxu0 %v3607
  %3678 = vmatprep.mubr.bf16.mxu0 %v2115
  %3679 = vmatmul.mubr.bf16.gmra.mrb[0].mxu0 %v2067
  %v3680 = vpop.f32.mrb[0].mxu0
  %v3681 = vadd.f32 0.0, %v3680
  %v3682 = vpop.f32.mrb[0].mxu0
  %v3683 = vpop.f32.mrb[0].mxu0
  %v3684 = vadd.f32 0.0, %v3683
  %v3685 = vpop.f32.mrb[0].mxu0
  %3686 = vmatprep.mubr.bf16.mxu0 %v2118
  %3687 = vmatmul.mubr.bf16.gmra.mrb[0].mxu0 %v2071
  %v3688 = vpop.f32.mrb[0].mxu0
  %v3689 = vadd.f32 0.0, %v3688
  %v3690 = vpop.f32.mrb[0].mxu0
  %v3691 = vpop.f32.mrb[0].mxu0
  %v3692 = vadd.f32 0.0, %v3691
  %v3693 = vpop.f32.mrb[0].mxu0
  %3694 = vmatprep.mubr.bf16.mxu0 %v2121
  %3695 = vmatmul.mubr.bf16.gmra.mrb[0].mxu0 %v2075
  %v3696 = vpop.f32.mrb[0].mxu0
  %v3697 = vadd.f32 0.0, %v3696
  %v3698 = vpop.f32.mrb[0].mxu0
  %v3699 = vpop.f32.mrb[0].mxu0
  %v3700 = vadd.f32 0.0, %v3699
  %v3701 = vpop.f32.mrb[0].mxu0
  %3702 = vmatprep.mubr.bf16.mxu0 %v2124
  %3703 = vmatmul.mubr.bf16.gmra.mrb[0].mxu0 %v2079
  %v3704 = vpop.f32.mrb[0].mxu0
  %v3705 = vadd.f32 0.0, %v3704
  %v3706 = vpop.f32.mrb[0].mxu0
  %v3707 = vpop.f32.mrb[0].mxu0
  %v3708 = vadd.f32 0.0, %v3707
  %v3709 = vpop.f32.mrb[0].mxu0
  %3710 = vmatprep.mubr.bf16.mxu0 %v2127
  %3711 = vmatmul.mubr.bf16.gmra.mrb[0].mxu0 %v2083
  %v3712 = vpop.f32.mrb[0].mxu0
  %v3713 = vadd.f32 0.0, %v3712
  %v3714 = vpop.f32.mrb[0].mxu0
  %v3715 = vpop.f32.mrb[0].mxu0
  %v3716 = vadd.f32 0.0, %v3715
  %v3717 = vpop.f32.mrb[0].mxu0
  %3718 = vmatprep.mubr.bf16.mxu0 %v2130
  %3719 = vmatmul.mubr.bf16.gmra.mrb[0].mxu0 %v2087
  %v3720 = vpop.f32.mrb[0].mxu0
  %v3721 = vadd.f32 0.0, %v3720
  %v3722 = vpop.f32.mrb[0].mxu0
  %v3723 = vpop.f32.mrb[0].mxu0
  %v3724 = vadd.f32 0.0, %v3723
  %v3725 = vpop.f32.mrb[0].mxu0
  %3726 = vmatprep.mubr.bf16.mxu0 %v2133
  %3727 = vmatmul.mubr.bf16.gmra.mrb[0].mxu0 %v2091
  %v3728 = vpop.f32.mrb[0].mxu0
  %v3729 = vadd.f32 0.0, %v3728
  %v3730 = vpop.f32.mrb[0].mxu0
  %v3731 = vpop.f32.mrb[0].mxu0
  %v3732 = vadd.f32 0.0, %v3731
  %v3733 = vpop.f32.mrb[0].mxu0
  %3734 = vmatprep.mubr.bf16.mxu0 %v2136
  %3735 = vmatmul.mubr.bf16.gmra.mrb[0].mxu0 %v2095
  %v3736 = vpop.f32.mrb[0].mxu0
  %v3737 = vadd.f32 0.0, %v3736
  %v3738 = vpop.f32.mrb[0].mxu0
  %v3739 = vpop.f32.mrb[0].mxu0
  %v3740 = vadd.f32 0.0, %v3739
  %v3741 = vpop.f32.mrb[0].mxu0
  %3742 = vdwg.mxu0
  %3743 = vmatprep.subr.bf16.mxu0 0
  %3744 = vmatpush1.bf16.msra.mxu0 %v3608
  %3745 = vmatprep.subr.bf16.mxu0 0
  %3746 = vmatpush1.bf16.msra.mxu0 %v3609
  %3747 = vmatprep.subr.bf16.mxu0 0
  %3748 = vmatpush1.bf16.msra.mxu0 %v3610
  %3749 = vmatprep.subr.bf16.mxu0 0
  %3750 = vmatpush1.bf16.msra.mxu0 %v3611
  %3751 = vmatprep.subr.bf16.mxu0 0
  %3752 = vmatpush1.bf16.msra.mxu0 %v3612
  %3753 = vmatprep.subr.bf16.mxu0 0
  %3754 = vmatpush1.bf16.msra.mxu0 %v3613
  %3755 = vmatprep.subr.bf16.mxu0 0
  %3756 = vmatpush1.bf16.msra.mxu0 %v3614
  %3757 = vmatprep.subr.bf16.mxu0 0
  %3758 = vmatpush1.bf16.msra.mxu0 %v3615
  %3759 = vmatprep.subr.bf16.mxu0 0
  %3760 = vmatpush1.bf16.msra.mxu0 %v3616
  %3761 = vmatprep.subr.bf16.mxu0 0
  %3762 = vmatpush1.bf16.msra.mxu0 %v3617
  %3763 = vmatprep.subr.bf16.mxu0 0
  %3764 = vmatpush1.bf16.msra.mxu0 %v3618
  %3765 = vmatprep.subr.bf16.mxu0 0
  %3766 = vmatpush1.bf16.msra.mxu0 0
  %3767 = vmatprep.subr.bf16.mxu0 0
  %3768 = vmatpush1.bf16.msra.mxu0 0
  %3769 = vmatprep.subr.bf16.mxu0 0
  %3770 = vmatpush1.bf16.msra.mxu0 0
  %3771 = vmatprep.subr.bf16.mxu0 0
  %3772 = vmatpush1.bf16.msra.mxu0 0
  %3773 = vmatprep.subr.bf16.mxu0 0
  %3774 = vmatpush1.bf16.msra.mxu0 0
  %3775 = vmatprep.mubr.bf16.mxu0 %v2397
  %3776 = vmatmul.mubr.bf16.gmra.mrb[0].mxu0 %v2157
  %v3777 = vpop.f32.mrb[0].mxu0
  %v3778 = vadd.f32 %v3681, %v3777
  %v3779 = vpop.f32.mrb[0].mxu0
  %v3780 = vpop.f32.mrb[0].mxu0
  %v3781 = vadd.f32 %v3684, %v3780
  %v3782 = vpop.f32.mrb[0].mxu0
  %3783 = vmatprep.mubr.bf16.mxu0 %v2399
  %3784 = vmatmul.mubr.bf16.gmra.mrb[0].mxu0 %v2160
  %v3785 = vpop.f32.mrb[0].mxu0
  %v3786 = vadd.f32 %v3689, %v3785
  %v3787 = vpop.f32.mrb[0].mxu0
  %v3788 = vpop.f32.mrb[0].mxu0
  %v3789 = vadd.f32 %v3692, %v3788
  %v3790 = vpop.f32.mrb[0].mxu0
  %3791 = vmatprep.mubr.bf16.mxu0 %v2401
  %3792 = vmatmul.mubr.bf16.gmra.mrb[0].mxu0 %v2163
  %v3793 = vpop.f32.mrb[0].mxu0
  %v3794 = vadd.f32 %v3697, %v3793
  %v3795 = vpop.f32.mrb[0].mxu0
  %v3796 = vpop.f32.mrb[0].mxu0
  %v3797 = vadd.f32 %v3700, %v3796
  %v3798 = vpop.f32.mrb[0].mxu0
  %3799 = vmatprep.mubr.bf16.mxu0 %v2403
  %3800 = vmatmul.mubr.bf16.gmra.mrb[0].mxu0 %v2166
  %v3801 = vpop.f32.mrb[0].mxu0
  %v3802 = vadd.f32 %v3705, %v3801
  %v3803 = vpop.f32.mrb[0].mxu0
  %v3804 = vpop.f32.mrb[0].mxu0
  %v3805 = vadd.f32 %v3708, %v3804
  %v3806 = vpop.f32.mrb[0].mxu0
  %3807 = vmatprep.mubr.bf16.mxu0 %v2405
  %3808 = vmatmul.mubr.bf16.gmra.mrb[0].mxu0 %v2169
  %v3809 = vpop.f32.mrb[0].mxu0
  %v3810 = vadd.f32 %v3713, %v3809
  %v3811 = vpop.f32.mrb[0].mxu0
  %v3812 = vpop.f32.mrb[0].mxu0
  %v3813 = vadd.f32 %v3716, %v3812
  %v3814 = vpop.f32.mrb[0].mxu0
  %3815 = vmatprep.mubr.bf16.mxu0 %v2407
  %3816 = vmatmul.mubr.bf16.gmra.mrb[0].mxu0 %v2172
  %v3817 = vpop.f32.mrb[0].mxu0
  %v3818 = vadd.f32 %v3721, %v3817
  %v3819 = vpop.f32.mrb[0].mxu0
  %v3820 = vpop.f32.mrb[0].mxu0
  %v3821 = vadd.f32 %v3724, %v3820
  %v3822 = vpop.f32.mrb[0].mxu0
  %3823 = vmatprep.mubr.bf16.mxu0 %v2409
  %3824 = vmatmul.mubr.bf16.gmra.mrb[0].mxu0 %v2175
  %v3825 = vpop.f32.mrb[0].mxu0
  %v3826 = vadd.f32 %v3729, %v3825
  %v3827 = vpop.f32.mrb[0].mxu0
  %v3828 = vpop.f32.mrb[0].mxu0
  %v3829 = vadd.f32 %v3732, %v3828
  %v3830 = vpop.f32.mrb[0].mxu0
  %3831 = vmatprep.mubr.bf16.mxu0 %v2411
  %3832 = vmatmul.mubr.bf16.gmra.mrb[0].mxu0 %v2178
  %v3833 = vpop.f32.mrb[0].mxu0
  %v3834 = vadd.f32 %v3737, %v3833
  %v3835 = vpop.f32.mrb[0].mxu0
  %v3836 = vpop.f32.mrb[0].mxu0
  %v3837 = vadd.f32 %v3740, %v3836
  %v3838 = vpop.f32.mrb[0].mxu0
  %3839 = vdwg.mxu0
  %v3840 = vmax.f32 %v2545, %v2956
  %v3841 = vmax.f32 %v2548, %v2959
  %v3842 = vmax.f32 %v2553, %v2964
  %v3843 = vmax.f32 %v2556, %v2967
  %v3844 = vmax.f32 %v2561, %v2972
  %v3845 = vmax.f32 %v2564, %v2975
  %v3846 = vmax.f32 %v2569, %v2980
  %v3847 = vmax.f32 %v2572, %v2983
  %v3848 = vmax.f32 %v2577, %v2988
  %v3849 = vmax.f32 %v2580, %v2991
  %v3850 = vmax.f32 %v2585, %v2996
  %v3851 = vmax.f32 %v2588, %v2999
  %v3852 = vmax.f32 %v2593, %v3004
  %v3853 = vmax.f32 %v2596, %v3007
  %v3854 = vmax.f32 %v2601, %v3012
  %v3855 = vmax.f32 %v2604, %v3015
  %v3856 = vmax.f32 %v3367, %v3778
  %v3857 = vmax.f32 %v3370, %v3781
  %v3858 = vmax.f32 %v3375, %v3786
  %v3859 = vmax.f32 %v3378, %v3789
  %v3860 = vmax.f32 %v3383, %v3794
  %v3861 = vmax.f32 %v3386, %v3797
  %v3862 = vmax.f32 %v3391, %v3802
  %v3863 = vmax.f32 %v3394, %v3805
  %v3864 = vmax.f32 %v3399, %v3810
  %v3865 = vmax.f32 %v3402, %v3813
  %v3866 = vmax.f32 %v3407, %v3818
  %v3867 = vmax.f32 %v3410, %v3821
  %v3868 = vmax.f32 %v3415, %v3826
  %v3869 = vmax.f32 %v3418, %v3829
  %v3870 = vmax.f32 %v3423, %v3834
  %v3871 = vmax.f32 %v3426, %v3837
  %v3872 = vmax.f32 %v3840, %v3856
  %v3873 = vmax.f32 %v3841, %v3857
  %v3874 = vmax.f32 %v3842, %v3858
  %v3875 = vmax.f32 %v3843, %v3859
  %v3876 = vmax.f32 %v3844, %v3860
  %v3877 = vmax.f32 %v3845, %v3861
  %v3878 = vmax.f32 %v3846, %v3862
  %v3879 = vmax.f32 %v3847, %v3863
  %v3880 = vmax.f32 %v3848, %v3864
  %v3881 = vmax.f32 %v3849, %v3865
  %v3882 = vmax.f32 %v3850, %v3866
  %v3883 = vmax.f32 %v3851, %v3867
  %v3884 = vmax.f32 %v3852, %v3868
  %v3885 = vmax.f32 %v3853, %v3869
  %v3886 = vmax.f32 %v3854, %v3870
  %v3887 = vmax.f32 %v3855, %v3871
  %v3888 = vld [vmem:[%s4] sm:$0x1]
  %v3890 = vlaneseq
  %v3891 = vshrl.u32 %v3890, 7
  %v3892 = vsub.s32 0, %v3891
  %v3893 = vrot.slane %v3888, %v3892
  %v3895 = vadd.f32 %v3872, %v3893
  %v3896 = vadd.f32 %v3873, %v3893
  %v3897 = vadd.f32 %v3874, %v3893
  %v3898 = vadd.f32 %v3875, %v3893
  %v3899 = vadd.f32 %v3876, %v3893
  %v3900 = vadd.f32 %v3877, %v3893
  %v3901 = vadd.f32 %v3878, %v3893
  %v3902 = vadd.f32 %v3879, %v3893
  %v3903 = vadd.f32 %v3880, %v3893
  %v3904 = vadd.f32 %v3881, %v3893
  %v3905 = vadd.f32 %v3882, %v3893
  %v3906 = vadd.f32 %v3883, %v3893
  %v3907 = vadd.f32 %v3884, %v3893
  %v3908 = vadd.f32 %v3885, %v3893
  %v3909 = vadd.f32 %v3886, %v3893
  %v3910 = vadd.f32 %v3887, %v3893
  %v3911 = vmax.f32 %v3895, 0.0
  %v3912 = vmax.f32 %v3896, 0.0
  %v3913 = vmax.f32 %v3897, 0.0
  %v3914 = vmax.f32 %v3898, 0.0
  %v3915 = vmax.f32 %v3899, 0.0
  %v3916 = vmax.f32 %v3900, 0.0
  %v3917 = vmax.f32 %v3901, 0.0
  %v3918 = vmax.f32 %v3902, 0.0
  %v3919 = vmax.f32 %v3903, 0.0
  %v3920 = vmax.f32 %v3904, 0.0
  %v3921 = vmax.f32 %v3905, 0.0
  %v3922 = vmax.f32 %v3906, 0.0
  %v3923 = vmax.f32 %v3907, 0.0
  %v3924 = vmax.f32 %v3908, 0.0
  %v3925 = vmax.f32 %v3909, 0.0
  %v3926 = vmax.f32 %v3910, 0.0
  %v3927 = vpack.c.bf16 %v3912, %v3911
  %v3928 = vpack.c.bf16 %v3914, %v3913
  %v3929 = vpack.c.bf16 %v3916, %v3915
  %v3930 = vpack.c.bf16 %v3918, %v3917
  %v3931 = vpack.c.bf16 %v3920, %v3919
  %v3932 = vpack.c.bf16 %v3922, %v3921
  %v3933 = vpack.c.bf16 %v3924, %v3923
  %v3934 = vpack.c.bf16 %v3926, %v3925
  %3937 = vrot.lane.b32.xlu0 %v3929, 64
  %v3938 = vpop.permute.xlu0 %3937
  %3939 = vrot.lane.b32.xlu0 %v3930, 64
  %v3940 = vpop.permute.xlu0 %3939
  %3943 = vrot.lane.b32.xlu0 %v3933, 64
  %v3944 = vpop.permute.xlu0 %3943
  %3945 = vrot.lane.b32.xlu0 %v3934, 64
  %v3946 = vpop.permute.xlu0 %3945
  %vm3947 = vcmask 523264
  %v3950 = vsel %vm3947, %v3927, %v3938
  %v3954 = vsel %vm3947, %v3928, %v3940
  %v3958 = vsel %vm3947, %v3931, %v3944
  %v3962 = vsel %vm3947, %v3932, %v3946
  %v3964 = vld [vmem:[%s5] sm:$0xf]
  %v3965 = vld [vmem:[%s5 + $0x4] sm:$0xf]
  %v3966 = vld [vmem:[%s5 + $0x8] sm:$0xf]
  %v3967 = vld [vmem:[%s5 + $0xc] sm:$0xf]
  %v3968 = vld [vmem:[%s5 + $0x10] sm:$0xf]
  %v3969 = vld [vmem:[%s5 + $0x14] sm:$0xf]
  %v3970 = vld [vmem:[%s5 + $0x18] sm:$0xf]
  %v3971 = vld [vmem:[%s5 + $0x1c] sm:$0xf]
  %v3972 = vld [vmem:[%s5 + $0x20] sm:$0xf]
  %v3973 = vld [vmem:[%s5 + $0x24] sm:$0xf]
  %v3974 = vld [vmem:[%s5 + $0x28] sm:$0xf]
  %v3975 = vld [vmem:[%s5 + $0x2c] sm:$0xf]
  %v3976 = vld [vmem:[%s5 + $0x30] sm:$0xf]
  %v3977 = vld [vmem:[%s5 + $0x34] sm:$0xf]
  %v3978 = vld [vmem:[%s5 + $0x38] sm:$0xf]
  %v3979 = vld [vmem:[%s5 + $0x3c] sm:$0xf]
  %v3980 = vld [vmem:[%s5 + $0x40] sm:$0xf]
  %v3981 = vld [vmem:[%s5 + $0x44] sm:$0xf]
  %v3982 = vld [vmem:[%s5 + $0x48] sm:$0xf]
  %v3983 = vld [vmem:[%s5 + $0x4c] sm:$0xf]
  %v3984 = vld [vmem:[%s5 + $0x50] sm:$0xf]
  %v3985 = vld [vmem:[%s5 + $0x54] sm:$0xf]
  %v3986 = vld [vmem:[%s5 + $0x58] sm:$0xf]
  %v3987 = vld [vmem:[%s5 + $0x5c] sm:$0xf]
  %v3988 = vld [vmem:[%s5 + $0x60] sm:$0xf]
  %v3989 = vld [vmem:[%s5 + $0x64] sm:$0xf]
  %v3990 = vld [vmem:[%s5 + $0x68] sm:$0xf]
  %v3991 = vld [vmem:[%s5 + $0x6c] sm:$0xf]
  %v3992 = vld [vmem:[%s5 + $0x70] sm:$0xf]
  %v3993 = vld [vmem:[%s5 + $0x74] sm:$0xf]
  %v3994 = vld [vmem:[%s5 + $0x78] sm:$0xf]
  %v3995 = vld [vmem:[%s5 + $0x7c] sm:$0xf]
  %v3996 = vld [vmem:[%s6] sm:$0x1]
  %v3998 = vlaneseq
  %v3999 = vshrl.u32 %v3998, 7
  %v4000 = vsub.s32 0, %v3999
  %v4001 = vrot.slane %v3996, %v4000
  %v4035 = vunpack.c.l.b16 %v3964
  %v4036 = vunpack.c.l.b16 %v3965
  %v4037 = vunpack.c.l.b16 %v3966
  %v4038 = vunpack.c.l.b16 %v3967
  %v4039 = vunpack.c.l.b16 %v3968
  %v4040 = vunpack.c.l.b16 %v3969
  %v4041 = vunpack.c.l.b16 %v3970
  %v4042 = vunpack.c.l.b16 %v3971
  %v4043 = vunpack.c.l.b16 %v3972
  %v4044 = vunpack.c.l.b16 %v3973
  %v4045 = vunpack.c.l.b16 %v3974
  %v4046 = vunpack.c.l.b16 %v3975
  %v4047 = vunpack.c.l.b16 %v3976
  %v4048 = vunpack.c.l.b16 %v3977
  %v4049 = vunpack.c.l.b16 %v3978
  %v4050 = vunpack.c.l.b16 %v3979
  %v4051 = vunpack.c.l.b16 %v3980
  %v4052 = vunpack.c.l.b16 %v3981
  %v4053 = vunpack.c.l.b16 %v3982
  %v4054 = vunpack.c.l.b16 %v3983
  %v4055 = vunpack.c.l.b16 %v3984
  %v4056 = vunpack.c.l.b16 %v3985
  %v4057 = vunpack.c.l.b16 %v3986
  %v4058 = vunpack.c.l.b16 %v3987
  %v4059 = vunpack.c.l.b16 %v3988
  %v4060 = vunpack.c.l.b16 %v3989
  %v4061 = vunpack.c.l.b16 %v3990
  %v4062 = vunpack.c.l.b16 %v3991
  %v4063 = vunpack.c.l.b16 %v3992
  %v4064 = vunpack.c.l.b16 %v3993
  %v4065 = vunpack.c.l.b16 %v3994
  %v4066 = vunpack.c.l.b16 %v3995
  %v4067 = vpack.c.b16 %v4036, %v4035
  %v4068 = vpack.c.b16 %v4038, %v4037
  %v4069 = vpack.c.b16 %v4040, %v4039
  %v4070 = vpack.c.b16 %v4042, %v4041
  %v4071 = vpack.c.b16 %v4044, %v4043
  %v4072 = vpack.c.b16 %v4046, %v4045
  %v4073 = vpack.c.b16 %v4048, %v4047
  %v4074 = vpack.c.b16 %v4050, %v4049
  %v4075 = vpack.c.b16 %v4052, %v4051
  %v4076 = vpack.c.b16 %v4054, %v4053
  %v4077 = vpack.c.b16 %v4056, %v4055
  %v4078 = vpack.c.b16 %v4058, %v4057
  %v4079 = vpack.c.b16 %v4060, %v4059
  %v4080 = vpack.c.b16 %v4062, %v4061
  %v4081 = vpack.c.b16 %v4064, %v4063
  %v4082 = vpack.c.b16 %v4066, %v4065
  %4099 = vmatprep.subr.bf16.mxu0 0
  %4100 = vmatpush1.bf16.msra.mxu0 %v4067
  %4101 = vmatprep.subr.bf16.mxu0 0
  %4102 = vmatpush1.bf16.msra.mxu0 %v4068
  %4103 = vmatprep.subr.bf16.mxu0 0
  %4104 = vmatpush1.bf16.msra.mxu0 %v4069
  %4105 = vmatprep.subr.bf16.mxu0 0
  %4106 = vmatpush1.bf16.msra.mxu0 %v4070
  %4107 = vmatprep.subr.bf16.mxu0 0
  %4108 = vmatpush1.bf16.msra.mxu0 %v4071
  %4109 = vmatprep.subr.bf16.mxu0 0
  %4110 = vmatpush1.bf16.msra.mxu0 %v4072
  %4111 = vmatprep.subr.bf16.mxu0 0
  %4112 = vmatpush1.bf16.msra.mxu0 %v4073
  %4113 = vmatprep.subr.bf16.mxu0 0
  %4114 = vmatpush1.bf16.msra.mxu0 %v4074
  %4115 = vmatprep.subr.bf16.mxu0 0
  %4116 = vmatpush1.bf16.msra.mxu0 %v4075
  %4117 = vmatprep.subr.bf16.mxu0 0
  %4118 = vmatpush1.bf16.msra.mxu0 %v4076
  %4119 = vmatprep.subr.bf16.mxu0 0
  %4120 = vmatpush1.bf16.msra.mxu0 %v4077
  %4121 = vmatprep.subr.bf16.mxu0 0
  %4122 = vmatpush1.bf16.msra.mxu0 %v4078
  %4123 = vmatprep.subr.bf16.mxu0 0
  %4124 = vmatpush1.bf16.msra.mxu0 %v4079
  %4125 = vmatprep.subr.bf16.mxu0 0
  %4126 = vmatpush1.bf16.msra.mxu0 %v4080
  %4127 = vmatprep.subr.bf16.mxu0 0
  %4128 = vmatpush1.bf16.msra.mxu0 %v4081
  %4129 = vmatprep.subr.bf16.mxu0 0
  %4130 = vmatpush1.bf16.msra.mxu0 %v4082
  %4131 = vmatprep.mubr.bf16.mxu0 %v3958
  %4132 = vmatmul.mubr.bf16.gmra.mrb[0].mxu0 %v3950
  %v4133 = vpop.f32.mrb[0].mxu0
  %v4134 = vadd.f32 %v4001, %v4133
  %v4135 = vpop.f32.mrb[0].mxu0
  %v4136 = vpop.f32.mrb[0].mxu0
  %v4137 = vadd.f32 %v4001, %v4136
  %v4138 = vpop.f32.mrb[0].mxu0
  %4139 = vmatprep.mubr.bf16.mxu0 %v3962
  %4140 = vmatmul.mubr.bf16.gmra.mrb[0].mxu0 %v3954
  %v4141 = vpop.f32.mrb[0].mxu0
  %v4142 = vadd.f32 %v4001, %v4141
  %v4143 = vpop.f32.mrb[0].mxu0
  %v4144 = vpop.f32.mrb[0].mxu0
  %v4145 = vadd.f32 %v4001, %v4144
  %v4146 = vpop.f32.mrb[0].mxu0
  %4147 = vdwg.mxu0
  %v4148 = vmax.f32 %v4134, 0.0
  %v4149 = vmax.f32 %v4137, 0.0
  %v4150 = vmax.f32 %v4142, 0.0
  %v4151 = vmax.f32 %v4145, 0.0
  %v4152 = vpack.c.bf16 %v4149, %v4148
  %v4153 = vpack.c.bf16 %v4151, %v4150
  %v4154 = vld [vmem:[%s7] sm:$0xf]
  %v4155 = vld [vmem:[%s7 + $0x4] sm:$0xf]
  %v4156 = vld [vmem:[%s7 + $0x8] sm:$0xf]
  %v4157 = vld [vmem:[%s7 + $0xc] sm:$0xf]
  %v4158 = vld [vmem:[%s7 + $0x10] sm:$0xf]
  %v4159 = vld [vmem:[%s7 + $0x14] sm:$0xf]
  %v4160 = vld [vmem:[%s7 + $0x18] sm:$0xf]
  %v4161 = vld [vmem:[%s7 + $0x1c] sm:$0xf]
  %v4162 = vld [vmem:[%s7 + $0x20] sm:$0xf]
  %v4163 = vld [vmem:[%s7 + $0x24] sm:$0xf]
  %v4164 = vld [vmem:[%s7 + $0x28] sm:$0xf]
  %v4165 = vld [vmem:[%s7 + $0x2c] sm:$0xf]
  %v4166 = vld [vmem:[%s7 + $0x30] sm:$0xf]
  %v4167 = vld [vmem:[%s7 + $0x34] sm:$0xf]
  %v4168 = vld [vmem:[%s7 + $0x38] sm:$0xf]
  %v4169 = vld [vmem:[%s8] sm:$0x1]
  %v4171 = vlaneseq
  %v4172 = vshrl.u32 %v4171, 7
  %v4173 = vsub.s32 0, %v4172
  %v4174 = vrot.slane %v4169, %v4173
  %v4191 = vunpack.c.l.b16 %v4154
  %v4192 = vunpack.c.l.b16 %v4155
  %v4193 = vunpack.c.l.b16 %v4156
  %v4194 = vunpack.c.l.b16 %v4157
  %v4195 = vunpack.c.l.b16 %v4158
  %v4196 = vunpack.c.l.b16 %v4159
  %v4197 = vunpack.c.l.b16 %v4160
  %v4198 = vunpack.c.l.b16 %v4161
  %v4199 = vunpack.c.l.b16 %v4162
  %v4200 = vunpack.c.l.b16 %v4163
  %v4201 = vunpack.c.l.b16 %v4164
  %v4202 = vunpack.c.l.b16 %v4165
  %v4203 = vunpack.c.l.b16 %v4166
  %v4204 = vunpack.c.l.b16 %v4167
  %v4205 = vunpack.c.l.b16 %v4168
  %v4206 = vpack.c.b16 %v4192, %v4191
  %v4207 = vpack.c.b16 %v4194, %v4193
  %v4208 = vpack.c.b16 %v4196, %v4195
  %v4209 = vpack.c.b16 %v4198, %v4197
  %v4210 = vpack.c.b16 %v4200, %v4199
  %v4211 = vpack.c.b16 %v4202, %v4201
  %v4212 = vpack.c.b16 %v4204, %v4203
  %v4213 = vpack.c.b16 %v4205, %v4205
  %vm4221 = vcmask 982016
  %v4223 = vsel %vm4221, %v4152, 0
  %v4226 = vsel %vm4221, %v4153, 0
  %vm4228 = vcmask 1043456
  %v4230 = vsel %vm4228, %v4213, 0
  %4232 = vmatprep.subr.bf16.mxu0 0
  %4233 = vmatpush1.bf16.msra.mxu0 %v4206
  %4234 = vmatprep.subr.bf16.mxu0 0
  %4235 = vmatpush1.bf16.msra.mxu0 %v4207
  %4236 = vmatprep.subr.bf16.mxu0 0
  %4237 = vmatpush1.bf16.msra.mxu0 %v4208
  %4238 = vmatprep.subr.bf16.mxu0 0
  %4239 = vmatpush1.bf16.msra.mxu0 %v4209
  %4240 = vmatprep.subr.bf16.mxu0 0
  %4241 = vmatpush1.bf16.msra.mxu0 %v4210
  %4242 = vmatprep.subr.bf16.mxu0 0
  %4243 = vmatpush1.bf16.msra.mxu0 %v4211
  %4244 = vmatprep.subr.bf16.mxu0 0
  %4245 = vmatpush1.bf16.msra.mxu0 %v4212
  %4246 = vmatprep.subr.bf16.mxu0 0
  %4247 = vmatpush1.bf16.msra.mxu0 %v4230
  %4248 = vmatprep.subr.bf16.mxu0 0
  %4249 = vmatpush1.bf16.msra.mxu0 0
  %4250 = vmatprep.subr.bf16.mxu0 0
  %4251 = vmatpush1.bf16.msra.mxu0 0
  %4252 = vmatprep.subr.bf16.mxu0 0
  %4253 = vmatpush1.bf16.msra.mxu0 0
  %4254 = vmatprep.subr.bf16.mxu0 0
  %4255 = vmatpush1.bf16.msra.mxu0 0
  %4256 = vmatprep.subr.bf16.mxu0 0
  %4257 = vmatpush1.bf16.msra.mxu0 0
  %4258 = vmatprep.subr.bf16.mxu0 0
  %4259 = vmatpush1.bf16.msra.mxu0 0
  %4260 = vmatprep.subr.bf16.mxu0 0
  %4261 = vmatpush1.bf16.msra.mxu0 0
  %4262 = vmatprep.subr.bf16.mxu0 0
  %4263 = vmatpush1.bf16.msra.mxu0 0
  %4264 = vmatprep.mubr.bf16.mxu0 0
  %4265 = vmatmul.mubr.bf16.gmra.mrb[0].mxu0 %v4223
  %v4266 = vpop.f32.mrb[0].mxu0
  %v4267 = vadd.f32 %v4174, %v4266
  %v4268 = vpop.f32.mrb[0].mxu0
  %v4269 = vpop.f32.mrb[0].mxu0
  %v4270 = vadd.f32 %v4174, %v4269
  %v4271 = vpop.f32.mrb[0].mxu0
  %4272 = vmatprep.mubr.bf16.mxu0 0
  %4273 = vmatmul.mubr.bf16.gmra.mrb[0].mxu0 %v4226
  %v4274 = vpop.f32.mrb[0].mxu0
  %v4275 = vadd.f32 %v4174, %v4274
  %v4276 = vpop.f32.mrb[0].mxu0
  %v4277 = vpop.f32.mrb[0].mxu0
  %v4278 = vadd.f32 %v4174, %v4277
  %v4279 = vpop.f32.mrb[0].mxu0
  %4280 = vdwg.mxu0
  %v4281 = vmax.f32 %v4267, 0.0
  %v4282 = vmax.f32 %v4270, 0.0
  %v4283 = vmax.f32 %v4275, 0.0
  %v4284 = vmax.f32 %v4278, 0.0
  %v4285 = vpack.c.bf16 %v4282, %v4281
  %v4286 = vpack.c.bf16 %v4284, %v4283
  %v4287 = vld [vmem:[%s9] sm:$0xf]
  %v4288 = vld [vmem:[%s9 + $0x4] sm:$0xf]
  %v4289 = vld [vmem:[%s9 + $0x8] sm:$0xf]
  %v4290 = vld [vmem:[%s9 + $0xc] sm:$0xf]
  %v4291 = vld [vmem:[%s9 + $0x10] sm:$0xf]
  %v4292 = vld [vmem:[%s9 + $0x14] sm:$0xf]
  %v4293 = vld [vmem:[%s9 + $0x18] sm:$0xf]
  %v4294 = vld [vmem:[%s9 + $0x1c] sm:$0xf]
  %v4295 = vld [vmem:[%s9 + $0x20] sm:$0xf]
  %v4296 = vld [vmem:[%s9 + $0x24] sm:$0xf]
  %v4297 = vld [vmem:[%s9 + $0x28] sm:$0x3]
  %v4298 = vld [vmem:[%s10] sm:$0x1]
  %v4300 = vlaneseq
  %v4301 = vshrl.u32 %v4300, 7
  %v4302 = vsub.s32 0, %v4301
  %v4303 = vrot.slane %v4298, %v4302
  %v4316 = vunpack.c.l.b16 %v4287
  %v4317 = vunpack.c.l.b16 %v4288
  %v4318 = vunpack.c.l.b16 %v4289
  %v4319 = vunpack.c.l.b16 %v4290
  %v4320 = vunpack.c.l.b16 %v4291
  %v4321 = vunpack.c.l.b16 %v4292
  %v4322 = vunpack.c.l.b16 %v4293
  %v4323 = vunpack.c.l.b16 %v4294
  %v4324 = vunpack.c.l.b16 %v4295
  %v4325 = vunpack.c.l.b16 %v4296
  %v4326 = vunpack.c.l.b16 %v4297
  %v4327 = vpack.c.b16 %v4317, %v4316
  %v4328 = vpack.c.b16 %v4319, %v4318
  %v4329 = vpack.c.b16 %v4321, %v4320
  %v4330 = vpack.c.b16 %v4323, %v4322
  %v4331 = vpack.c.b16 %v4325, %v4324
  %v4332 = vpack.c.b16 %v4326, %v4326
  %vm4338 = vcmask 687104
  %v4340 = vsel %vm4338, %v4285, 0
  %v4343 = vsel %vm4338, %v4286, 0
  %vm4345 = vcmask 1041408
  %v4347 = vsel %vm4345, %v4332, 0
  %4349 = vmatprep.subr.bf16.mxu0 0
  %4350 = vmatpush1.bf16.msra.mxu0 %v4327
  %4351 = vmatprep.subr.bf16.mxu0 0
  %4352 = vmatpush1.bf16.msra.mxu0 %v4328
  %4353 = vmatprep.subr.bf16.mxu0 0
  %4354 = vmatpush1.bf16.msra.mxu0 %v4329
  %4355 = vmatprep.subr.bf16.mxu0 0
  %4356 = vmatpush1.bf16.msra.mxu0 %v4330
  %4357 = vmatprep.subr.bf16.mxu0 0
  %4358 = vmatpush1.bf16.msra.mxu0 %v4331
  %4359 = vmatprep.subr.bf16.mxu0 0
  %4360 = vmatpush1.bf16.msra.mxu0 %v4347
  %4361 = vmatprep.subr.bf16.mxu0 0
  %4362 = vmatpush1.bf16.msra.mxu0 0
  %4363 = vmatprep.subr.bf16.mxu0 0
  %4364 = vmatpush1.bf16.msra.mxu0 0
  %4365 = vmatprep.subr.bf16.mxu0 0
  %4366 = vmatpush1.bf16.msra.mxu0 0
  %4367 = vmatprep.subr.bf16.mxu0 0
  %4368 = vmatpush1.bf16.msra.mxu0 0
  %4369 = vmatprep.subr.bf16.mxu0 0
  %4370 = vmatpush1.bf16.msra.mxu0 0
  %4371 = vmatprep.subr.bf16.mxu0 0
  %4372 = vmatpush1.bf16.msra.mxu0 0
  %4373 = vmatprep.subr.bf16.mxu0 0
  %4374 = vmatpush1.bf16.msra.mxu0 0
  %4375 = vmatprep.subr.bf16.mxu0 0
  %4376 = vmatpush1.bf16.msra.mxu0 0
  %4377 = vmatprep.subr.bf16.mxu0 0
  %4378 = vmatpush1.bf16.msra.mxu0 0
  %4379 = vmatprep.subr.bf16.mxu0 0
  %4380 = vmatpush1.bf16.msra.mxu0 0
  %4381 = vmatprep.mubr.bf16.mxu0 0
  %4382 = vmatmul.mubr.bf16.gmra.mrb[0].mxu0 %v4340
  %v4383 = vpop.f32.mrb[0].mxu0
  %v4384 = vadd.f32 %v4303, %v4383
  %v4385 = vpop.f32.mrb[0].mxu0
  %v4386 = vpop.f32.mrb[0].mxu0
  %v4387 = vadd.f32 %v4303, %v4386
  %v4388 = vpop.f32.mrb[0].mxu0
  %4389 = vmatprep.mubr.bf16.mxu0 0
  %4390 = vmatmul.mubr.bf16.gmra.mrb[0].mxu0 %v4343
  %v4391 = vpop.f32.mrb[0].mxu0
  %v4392 = vadd.f32 %v4303, %v4391
  %v4393 = vpop.f32.mrb[0].mxu0
  %v4394 = vpop.f32.mrb[0].mxu0
  %v4395 = vadd.f32 %v4303, %v4394
  %v4396 = vpop.f32.mrb[0].mxu0
  %4397 = vdwg.mxu0
  %4398 = vst [vmem:[%s11] sm:$0xff] %v4384
  %4399 = vst [vmem:[%s11 + $0x8] sm:$0xff] %v4387
  %4400 = vst [vmem:[%s11 + $0x10] sm:$0xff] %v4392
  %4401 = vst [vmem:[%s11 + $0x18] sm:$0xff] %v4395
  // Predicated region
  $region46: #{lenet_forward.1} parent=0 // pred_check
    _
  $region47: #{lenet_forward.1} parent=0 // pred_check_branch
    %4403 = sbr.rel (0) target = $region49
  $region48: #{lenet_forward.1} parent=0 // pred_region
    _
  $region49: #{lenet_forward.1} parent=0 // pred_fallthru
    _
  // Predicated region
  $region50: #{lenet_forward.1} parent=0 // pred_check
    _
  $region51: #{lenet_forward.1} parent=0 // pred_check_branch
    %4405 = sbr.rel (0) target = $region53
  $region52: #{lenet_forward.1} parent=0 // pred_region
    _
  $region53: #{lenet_forward.1} parent=0 // pred_fallthru
    _

</llo_original>
